<compile_context>
chip_gen: v7x
topology: tpu7x:2x2x1
jax: 0.10.0
libtpu: 0.0.40
codegen_flags: <defaults>
</compile_context>

<pallas_src>
import jax
import jax.numpy as jnp
from jax.experimental import pallas as pl
from jax.experimental.pallas import tpu as pltpu


def _round_up(n, m):
    return ((n + m - 1) // m) * m


# ---------------------------------------------------------------------------
# Kernel
# ---------------------------------------------------------------------------
def _make_dqn_kernel(bias_offsets, layer_widths):
    """bias_offsets / layer_widths are static Python ints (128-lane aligned)."""
    o1, o2, o3, o4, o5 = bias_offsets
    n1, n2, n3, n4, n5 = layer_widths

    def kernel(x_ref, w1_ref, w2_ref, w3_ref, w4_ref, w5_ref, b_ref, o_ref):
        # fc1..fc4: bf16 x bf16 -> f32 MXU matmul, f32 bias + ReLU epilogue.
        h = jnp.dot(x_ref[...], w1_ref[...], preferred_element_type=jnp.float32)
        h = jnp.maximum(h + b_ref[:, o1:o1 + n1], 0.0)

        h = jnp.dot(h.astype(jnp.bfloat16), w2_ref[...],
                    preferred_element_type=jnp.float32)
        h = jnp.maximum(h + b_ref[:, o2:o2 + n2], 0.0)

        h = jnp.dot(h.astype(jnp.bfloat16), w3_ref[...],
                    preferred_element_type=jnp.float32)
        h = jnp.maximum(h + b_ref[:, o3:o3 + n3], 0.0)

        # fc4: hidden 1000 padded to 1024; padded lanes stay exactly 0 through ReLU
        # (padded weight columns and bias columns are 0).
        h = jnp.dot(h.astype(jnp.bfloat16), w4_ref[...],
                    preferred_element_type=jnp.float32)
        h = jnp.maximum(h + b_ref[:, o4:o4 + n4], 0.0)

        # fc5: no activation; output columns padded to a lane-dense multiple of 128.
        out = jnp.dot(h.astype(jnp.bfloat16), w5_ref[...],
                      preferred_element_type=jnp.float32)
        o_ref[...] = (out + b_ref[:, o5:o5 + n5]).astype(o_ref.dtype)

    return kernel


# ---------------------------------------------------------------------------
# One-time parameter preparation (hoisted out of the forward path)
# ---------------------------------------------------------------------------
def prepare_params(params):
    """Pack PyTorch-layout DQN params for the kernel.  Call ONCE, reuse per forward.

    params: list of (W, b) with W (in, out) f32 (nn.Linear weight transposed) and
    b (1, out) f32.  Returns a dict of padded bf16 weights, one packed f32 bias slab
    and the static metadata the wrapper needs.
    """
    (w1, b1), (w2, b2), (w3, b3), (w4, b4), (w5, b5) = params
    in_dim = int(w1.shape[0])
    out_dim = int(w5.shape[1])

    h4 = _round_up(w4.shape[1], 128)          # 1000 -> 1024
    out_p = _round_up(out_dim, 128)           # lane-dense final store

    w4p = jnp.zeros((w4.shape[0], h4), w4.dtype).at[:, :w4.shape[1]].set(w4)
    w5p = jnp.zeros((h4, out_p), w5.dtype).at[:w5.shape[0], :out_dim].set(w5)

    weights = tuple(w.astype(jnp.bfloat16) for w in (w1, w2, w3, w4p, w5p))

    # Padded per-layer output widths; each bias segment starts at a 128-aligned
    # column of one packed f32 slab (padding columns stay 0).
    layer_widths = (int(w1.shape[1]), int(w2.shape[1]), int(w3.shape[1]), h4, out_p)
    bias_offsets, off = [], 0
    for w_ in layer_widths:
        bias_offsets.append(off)
        off += _round_up(w_, 128)
    bias_offsets = tuple(bias_offsets)

    bias = jnp.zeros((1, off), jnp.float32)
    for o, b_ in zip(bias_offsets, (b1, b2, b3, b4, b5)):
        b_ = jnp.asarray(b_, jnp.float32).reshape(1, -1)
        bias = bias.at[:, o:o + b_.shape[1]].set(b_)

    return dict(weights=weights, bias=bias, in_dim=in_dim, out_dim=out_dim,
                padded_out_dim=out_p, bias_offsets=bias_offsets,
                layer_widths=layer_widths)


# ---------------------------------------------------------------------------
# Forward wrapper
# ---------------------------------------------------------------------------
def _pick_batch_tile(batch):
    """Rows per grid step.  Large tiles amortize the ~0.35us per-step pipeline
    overhead; once B > 128 we force >= 2 grid steps (dual-TensorCore split on v7x)
    and keep tiles 16-row aligned (bf16 sublane tile).  512 rows keeps the whole
    working set well inside VMEM on v5e/v6e/v7x."""
    b8 = _round_up(batch, 8)
    if b8 <= 128:
        return b8                       # single step; block == full (padded) array
    half = _round_up((b8 + 1) // 2, 16)
    return min(512, half)


def _const_spec(shape, single_buffer):
    """Constant-index (VMEM-resident) operand; single-buffered when supported."""
    if single_buffer:
        return pl.BlockSpec(shape, lambda i: (0, 0), pipeline_mode=pl.Buffered(1))
    return pl.BlockSpec(shape, lambda i: (0, 0))


def _dqn_forward_impl(x, prepared, *, single_buffer_weights):
    batch, in_dim = x.shape
    assert in_dim == prepared["in_dim"], "input feature dim mismatch"

    weights = prepared["weights"]
    bias = prepared["bias"]
    out_p = prepared["padded_out_dim"]
    out_dim = prepared["out_dim"]

    tb = _pick_batch_tile(batch)
    b_pad = _round_up(batch, tb)

    # Activations go in as bf16 (halves the x DMA); accumulation stays f32 in-kernel.
    xb = x.astype(jnp.bfloat16)
    if b_pad != batch:
        xb = jnp.zeros((b_pad, in_dim), jnp.bfloat16).at[:batch].set(xb)

    kernel = _make_dqn_kernel(prepared["bias_offsets"], prepared["layer_widths"])

    in_specs = [pl.BlockSpec((tb, in_dim), lambda i: (i, 0))]
    in_specs += [_const_spec(w.shape, single_buffer_weights) for w in weights]
    in_specs.append(_const_spec(bias.shape, single_buffer_weights))

    out = pl.pallas_call(
        kernel,
        out_shape=jax.ShapeDtypeStruct((b_pad, out_p), jnp.float32),
        grid=(b_pad // tb,),
        in_specs=in_specs,
        out_specs=pl.BlockSpec((tb, out_p), lambda i: (i, 0)),
        compiler_params=pltpu.CompilerParams(
            dimension_semantics=("parallel",),
            vmem_limit_bytes=32 * 1024 * 1024,
        ),
    )(xb, *weights, bias)

    # TODO(synk): for pure large-batch throughput, return the padded (b_pad, 128)
    # slab (optionally bf16) and let the consumer slice, to skip this HBM round trip.
    return out[:batch, :out_dim]


_SINGLE_BUFFER_OK = True


def dqn_forward(x, prepared):
    """Same math as the PyTorch DQN forward (bf16 MXU matmuls, f32 accumulate)."""
    global _SINGLE_BUFFER_OK
    if _SINGLE_BUFFER_OK:
        try:
            return _dqn_forward_impl(x, prepared, single_buffer_weights=True)
        except Exception:
            # pipeline_mode=pl.Buffered(1) unsupported on this JAX build -> fall back
            # to default double buffering (identical math, slightly more VMEM).
            _SINGLE_BUFFER_OK = False
    return _dqn_forward_impl(x, prepared, single_buffer_weights=False)


# ---------------------------------------------------------------------------
# Params / references / self-test
# ---------------------------------------------------------------------------
def init_params(key, input_size, output_size):
    """Deterministic init mimicking PyTorch nn.Linear default U[-1/sqrt(in), 1/sqrt(in)]."""
    dims = [input_size, 64, 128, 256, 1000, output_size]
    params = []
    for i in range(len(dims) - 1):
        fan_in, fan_out = dims[i], dims[i + 1]
        key, kw, kb = jax.random.split(key, 3)
        bound = 1.0 / jnp.sqrt(jnp.float32(fan_in))
        w = jax.random.uniform(kw, (fan_in, fan_out), jnp.float32, -bound, bound)
        b = jax.random.uniform(kb, (1, fan_out), jnp.float32, -bound, bound)
        params.append((w, b))
    return params


def reference_forward(x, params):
    """Pure-JAX reference with the same bf16-matmul / f32-accumulate recipe."""
    h = x
    for i, (w, b) in enumerate(params):
        h = jnp.dot(h.astype(jnp.bfloat16), w.astype(jnp.bfloat16),
                    preferred_element_type=jnp.float32) + b
        if i < len(params) - 1:
            h = jnp.maximum(h, 0.0)
    return h


def reference_forward_f32(x, params):
    h = x
    for i, (w, b) in enumerate(params):
        h = h @ w + b
        if i < len(params) - 1:
            h = jnp.maximum(h, 0.0)
    return h


if __name__ == "__main__":
    key = jax.random.PRNGKey(0)
    input_size, output_size = 32, 16

    kx, kx2, kp = jax.random.split(key, 3)
    params = init_params(kp, input_size, output_size)

    prepared = prepare_params(params)            # one-time, off the forward path
    jax.block_until_ready((prepared["weights"], prepared["bias"]))

    # Small latency-style batch (single grid step).
    x_small = jax.random.normal(kx, (8, input_size), jnp.float32)
    out_small = dqn_forward(x_small, prepared)
    jax.block_until_ready(out_small)
    assert out_small.shape == (8, output_size)

    # Larger batch: exercises batch padding and the multi-step "parallel" grid.
    x_big = jax.random.normal(kx2, (192, input_size), jnp.float32)
    out_big = dqn_forward(x_big, prepared)
    jax.block_until_ready(out_big)
    assert out_big.shape == (192, output_size)

    for xs, outs in ((x_small, out_small), (x_big, out_big)):
        ref_bf16 = reference_forward(xs, params)
        assert jnp.allclose(outs, ref_bf16, atol=1e-2, rtol=1e-2), "mismatch vs bf16 reference"
        ref_f32 = reference_forward_f32(xs, params)
        assert jnp.allclose(outs, ref_f32, atol=5e-2, rtol=5e-2), "mismatch vs f32 reference"

    print("KERNEL_OK")
</pallas_src>

<mosaic_0001>
module attributes {stable_mosaic.version = 11 : i64} {
  func.func @kernel(%arg0: i32, %arg1: memref<8x32xbf16, #tpu.memory_space<vmem>>, %arg2: memref<32x64xbf16, #tpu.memory_space<vmem>>, %arg3: memref<64x128xbf16, #tpu.memory_space<vmem>>, %arg4: memref<128x256xbf16, #tpu.memory_space<vmem>>, %arg5: memref<256x1024xbf16, #tpu.memory_space<vmem>>, %arg6: memref<1024x128xbf16, #tpu.memory_space<vmem>>, %arg7: memref<1x1664xf32, #tpu.memory_space<vmem>>, %arg8: memref<8x128xf32, #tpu.memory_space<vmem>>) attributes {dimension_semantics = [#tpu.dimension_semantics<parallel>], iteration_bounds = array<i64: 1>, scalar_prefetch = 0 : i64, scratch_operands = 0 : i64, tpu.core_type = #tpu.core_type<tc>, window_params = [{transform_indices = @transform_0, window_bounds = array<i64: 8, 32>}, {pipeline_mode = #tpu.pipeline_mode<synchronous>, transform_indices = @transform_1, window_bounds = array<i64: 32, 64>}, {pipeline_mode = #tpu.pipeline_mode<synchronous>, transform_indices = @transform_2, window_bounds = array<i64: 64, 128>}, {pipeline_mode = #tpu.pipeline_mode<synchronous>, transform_indices = @transform_3, window_bounds = array<i64: 128, 256>}, {pipeline_mode = #tpu.pipeline_mode<synchronous>, transform_indices = @transform_4, window_bounds = array<i64: 256, 1024>}, {pipeline_mode = #tpu.pipeline_mode<synchronous>, transform_indices = @transform_5, window_bounds = array<i64: 1024, 128>}, {pipeline_mode = #tpu.pipeline_mode<synchronous>, transform_indices = @transform_6, window_bounds = array<i64: 1, 1664>}, {transform_indices = @transform_7, window_bounds = array<i64: 8, 128>}]} {
    %c0 = arith.constant 0 : index
    %c0_0 = arith.constant 0 : index
    %0 = vector.load %arg1[%c0, %c0_0] : memref<8x32xbf16, #tpu.memory_space<vmem>>, vector<8x32xbf16>
    %c0_1 = arith.constant 0 : index
    %c0_2 = arith.constant 0 : index
    %1 = vector.load %arg2[%c0_1, %c0_2] : memref<32x64xbf16, #tpu.memory_space<vmem>>, vector<32x64xbf16>
    %cst = arith.constant dense<0.000000e+00> : vector<8x64xf32>
    %2 = tpu.matmul %0, %1, %cst {dimension_numbers = #tpu.dot_dimension_numbers<[1], [0], [0], [1], [0, 0, 1, 1], [], []>} : vector<8x32xbf16>, vector<32x64xbf16>, vector<8x64xf32> -> vector<8x64xf32>
    %c0_3 = arith.constant 0 : index
    %c0_4 = arith.constant 0 : index
    %3 = vector.load %arg7[%c0_3, %c0_4] : memref<1x1664xf32, #tpu.memory_space<vmem>>, vector<1x64xf32>
    %4 = vector.broadcast %3 : vector<1x64xf32> to vector<8x64xf32>
    %5 = arith.addf %2, %4 : vector<8x64xf32>
    %cst_5 = arith.constant 0.000000e+00 : f32
    %6 = vector.broadcast %cst_5 : f32 to vector<8x64xf32>
    %7 = arith.maximumf %5, %6 : vector<8x64xf32>
    %8 = arith.truncf %7 : vector<8x64xf32> to vector<8x64xbf16>
    %c0_6 = arith.constant 0 : index
    %c0_7 = arith.constant 0 : index
    %9 = vector.load %arg3[%c0_6, %c0_7] : memref<64x128xbf16, #tpu.memory_space<vmem>>, vector<64x128xbf16>
    %cst_8 = arith.constant dense<0.000000e+00> : vector<8x128xf32>
    %10 = tpu.matmul %8, %9, %cst_8 {dimension_numbers = #tpu.dot_dimension_numbers<[1], [0], [0], [1], [0, 0, 1, 1], [], []>} : vector<8x64xbf16>, vector<64x128xbf16>, vector<8x128xf32> -> vector<8x128xf32>
    %c0_9 = arith.constant 0 : index
    %c128 = arith.constant 128 : index
    %11 = vector.load %arg7[%c0_9, %c128] : memref<1x1664xf32, #tpu.memory_space<vmem>>, vector<1x128xf32>
    %12 = vector.broadcast %11 : vector<1x128xf32> to vector<8x128xf32>
    %13 = arith.addf %10, %12 : vector<8x128xf32>
    %cst_10 = arith.constant 0.000000e+00 : f32
    %14 = vector.broadcast %cst_10 : f32 to vector<8x128xf32>
    %15 = arith.maximumf %13, %14 : vector<8x128xf32>
    %16 = arith.truncf %15 : vector<8x128xf32> to vector<8x128xbf16>
    %c0_11 = arith.constant 0 : index
    %c0_12 = arith.constant 0 : index
    %17 = vector.load %arg4[%c0_11, %c0_12] : memref<128x256xbf16, #tpu.memory_space<vmem>>, vector<128x256xbf16>
    %cst_13 = arith.constant dense<0.000000e+00> : vector<8x256xf32>
    %18 = tpu.matmul %16, %17, %cst_13 {dimension_numbers = #tpu.dot_dimension_numbers<[1], [0], [0], [1], [0, 0, 1, 1], [], []>} : vector<8x128xbf16>, vector<128x256xbf16>, vector<8x256xf32> -> vector<8x256xf32>
    %c0_14 = arith.constant 0 : index
    %c256 = arith.constant 256 : index
    %19 = vector.load %arg7[%c0_14, %c256] : memref<1x1664xf32, #tpu.memory_space<vmem>>, vector<1x256xf32>
    %20 = vector.broadcast %19 : vector<1x256xf32> to vector<8x256xf32>
    %21 = arith.addf %18, %20 : vector<8x256xf32>
    %cst_15 = arith.constant 0.000000e+00 : f32
    %22 = vector.broadcast %cst_15 : f32 to vector<8x256xf32>
    %23 = arith.maximumf %21, %22 : vector<8x256xf32>
    %24 = arith.truncf %23 : vector<8x256xf32> to vector<8x256xbf16>
    %c0_16 = arith.constant 0 : index
    %c0_17 = arith.constant 0 : index
    %25 = vector.load %arg5[%c0_16, %c0_17] : memref<256x1024xbf16, #tpu.memory_space<vmem>>, vector<256x1024xbf16>
    %cst_18 = arith.constant dense<0.000000e+00> : vector<8x1024xf32>
    %26 = tpu.matmul %24, %25, %cst_18 {dimension_numbers = #tpu.dot_dimension_numbers<[1], [0], [0], [1], [0, 0, 1, 1], [], []>} : vector<8x256xbf16>, vector<256x1024xbf16>, vector<8x1024xf32> -> vector<8x1024xf32>
    %c0_19 = arith.constant 0 : index
    %c512 = arith.constant 512 : index
    %27 = vector.load %arg7[%c0_19, %c512] : memref<1x1664xf32, #tpu.memory_space<vmem>>, vector<1x1024xf32>
    %28 = vector.broadcast %27 : vector<1x1024xf32> to vector<8x1024xf32>
    %29 = arith.addf %26, %28 : vector<8x1024xf32>
    %cst_20 = arith.constant 0.000000e+00 : f32
    %30 = vector.broadcast %cst_20 : f32 to vector<8x1024xf32>
    %31 = arith.maximumf %29, %30 : vector<8x1024xf32>
    %32 = arith.truncf %31 : vector<8x1024xf32> to vector<8x1024xbf16>
    %c0_21 = arith.constant 0 : index
    %c0_22 = arith.constant 0 : index
    %33 = vector.load %arg6[%c0_21, %c0_22] : memref<1024x128xbf16, #tpu.memory_space<vmem>>, vector<1024x128xbf16>
    %cst_23 = arith.constant dense<0.000000e+00> : vector<8x128xf32>
    %34 = tpu.matmul %32, %33, %cst_23 {dimension_numbers = #tpu.dot_dimension_numbers<[1], [0], [0], [1], [0, 0, 1, 1], [], []>} : vector<8x1024xbf16>, vector<1024x128xbf16>, vector<8x128xf32> -> vector<8x128xf32>
    %c0_24 = arith.constant 0 : index
    %c1536 = arith.constant 1536 : index
    %35 = vector.load %arg7[%c0_24, %c1536] : memref<1x1664xf32, #tpu.memory_space<vmem>>, vector<1x128xf32>
    %36 = vector.broadcast %35 : vector<1x128xf32> to vector<8x128xf32>
    %37 = arith.addf %34, %36 : vector<8x128xf32>
    %c0_25 = arith.constant 0 : index
    %c0_26 = arith.constant 0 : index
    %38 = vector.load %arg8[%c0_25, %c0_26] : memref<8x128xf32, #tpu.memory_space<vmem>>, vector<8x128xf32>
    tpu.vector_store %arg8[%c0_25, %c0_26], %37 {strides = array<i32>} : memref<8x128xf32, #tpu.memory_space<vmem>>, vector<8x128xf32>,
    return
  }
  func.func @transform_0(%arg0: i32) -> (i32, i32) {
    %c0_i32 = arith.constant 0 : i32
    %c0_i32_0 = arith.constant 0 : i32
    return %arg0, %c0_i32 : i32, i32
  }
  func.func @transform_1(%arg0: i32) -> (i32, i32) {
    %c0_i32 = arith.constant 0 : i32
    %c0_i32_0 = arith.constant 0 : i32
    %c0_i32_1 = arith.constant 0 : i32
    return %c0_i32, %c0_i32_0 : i32, i32
  }
  func.func @transform_2(%arg0: i32) -> (i32, i32) {
    %c0_i32 = arith.constant 0 : i32
    %c0_i32_0 = arith.constant 0 : i32
    %c0_i32_1 = arith.constant 0 : i32
    return %c0_i32, %c0_i32_0 : i32, i32
  }
  func.func @transform_3(%arg0: i32) -> (i32, i32) {
    %c0_i32 = arith.constant 0 : i32
    %c0_i32_0 = arith.constant 0 : i32
    %c0_i32_1 = arith.constant 0 : i32
    return %c0_i32, %c0_i32_0 : i32, i32
  }
  func.func @transform_4(%arg0: i32) -> (i32, i32) {
    %c0_i32 = arith.constant 0 : i32
    %c0_i32_0 = arith.constant 0 : i32
    %c0_i32_1 = arith.constant 0 : i32
    return %c0_i32, %c0_i32_0 : i32, i32
  }
  func.func @transform_5(%arg0: i32) -> (i32, i32) {
    %c0_i32 = arith.constant 0 : i32
    %c0_i32_0 = arith.constant 0 : i32
    %c0_i32_1 = arith.constant 0 : i32
    return %c0_i32, %c0_i32_0 : i32, i32
  }
  func.func @transform_6(%arg0: i32) -> (i32, i32) {
    %c0_i32 = arith.constant 0 : i32
    %c0_i32_0 = arith.constant 0 : i32
    %c0_i32_1 = arith.constant 0 : i32
    return %c0_i32, %c0_i32_0 : i32, i32
  }
  func.func @transform_7(%arg0: i32) -> (i32, i32) {
    %c0_i32 = arith.constant 0 : i32
    %c0_i32_0 = arith.constant 0 : i32
    return %arg0, %c0_i32 : i32, i32
  }
}

module attributes {stable_mosaic.version = 11 : i64} {
  func.func @kernel(%arg0: i32, %arg1: memref<8x32xbf16, #tpu.memory_space<vmem>>, %arg2: memref<32x64xbf16, #tpu.memory_space<vmem>>, %arg3: memref<64x128xbf16, #tpu.memory_space<vmem>>, %arg4: memref<128x256xbf16, #tpu.memory_space<vmem>>, %arg5: memref<256x1024xbf16, #tpu.memory_space<vmem>>, %arg6: memref<1024x128xbf16, #tpu.memory_space<vmem>>, %arg7: memref<1x1664xf32, #tpu.memory_space<vmem>>, %arg8: memref<8x128xf32, #tpu.memory_space<vmem>>) attributes {dimension_semantics = [#tpu.dimension_semantics<parallel>], iteration_bounds = array<i64: 1>, scalar_prefetch = 0 : i64, scratch_operands = 0 : i64, tpu.core_type = #tpu.core_type<tc>, window_params = [{transform_indices = @transform_0, window_bounds = array<i64: 8, 32>}, {pipeline_mode = #tpu.pipeline_mode<synchronous>, transform_indices = @transform_1, window_bounds = array<i64: 32, 64>}, {pipeline_mode = #tpu.pipeline_mode<synchronous>, transform_indices = @transform_2, window_bounds = array<i64: 64, 128>}, {pipeline_mode = #tpu.pipeline_mode<synchronous>, transform_indices = @transform_3, window_bounds = array<i64: 128, 256>}, {pipeline_mode = #tpu.pipeline_mode<synchronous>, transform_indices = @transform_4, window_bounds = array<i64: 256, 1024>}, {pipeline_mode = #tpu.pipeline_mode<synchronous>, transform_indices = @transform_5, window_bounds = array<i64: 1024, 128>}, {pipeline_mode = #tpu.pipeline_mode<synchronous>, transform_indices = @transform_6, window_bounds = array<i64: 1, 1664>}, {transform_indices = @transform_7, window_bounds = array<i64: 8, 128>}]} {
    %c0 = arith.constant 0 : index
    %c0_0 = arith.constant 0 : index
    %0 = vector.load %arg1[%c0, %c0_0] : memref<8x32xbf16, #tpu.memory_space<vmem>>, vector<8x32xbf16>
    %c0_1 = arith.constant 0 : index
    %c0_2 = arith.constant 0 : index
    %1 = vector.load %arg2[%c0_1, %c0_2] : memref<32x64xbf16, #tpu.memory_space<vmem>>, vector<32x64xbf16>
    %cst = arith.constant dense<0.000000e+00> : vector<8x64xf32>
    %2 = tpu.matmul %0, %1, %cst {dimension_numbers = #tpu.dot_dimension_numbers<[1], [0], [0], [1], [0, 0, 1, 1], [], []>} : vector<8x32xbf16>, vector<32x64xbf16>, vector<8x64xf32> -> vector<8x64xf32>
    %c0_3 = arith.constant 0 : index
    %c0_4 = arith.constant 0 : index
    %3 = vector.load %arg7[%c0_3, %c0_4] : memref<1x1664xf32, #tpu.memory_space<vmem>>, vector<1x64xf32>
    %4 = vector.broadcast %3 : vector<1x64xf32> to vector<8x64xf32>
    %5 = arith.addf %2, %4 : vector<8x64xf32>
    %cst_5 = arith.constant 0.000000e+00 : f32
    %6 = vector.broadcast %cst_5 : f32 to vector<8x64xf32>
    %7 = arith.maximumf %5, %6 : vector<8x64xf32>
    %8 = arith.truncf %7 : vector<8x64xf32> to vector<8x64xbf16>
    %c0_6 = arith.constant 0 : index
    %c0_7 = arith.constant 0 : index
    %9 = vector.load %arg3[%c0_6, %c0_7] : memref<64x128xbf16, #tpu.memory_space<vmem>>, vector<64x128xbf16>
    %cst_8 = arith.constant dense<0.000000e+00> : vector<8x128xf32>
    %10 = tpu.matmul %8, %9, %cst_8 {dimension_numbers = #tpu.dot_dimension_numbers<[1], [0], [0], [1], [0, 0, 1, 1], [], []>} : vector<8x64xbf16>, vector<64x128xbf16>, vector<8x128xf32> -> vector<8x128xf32>
    %c0_9 = arith.constant 0 : index
    %c128 = arith.constant 128 : index
    %11 = vector.load %arg7[%c0_9, %c128] : memref<1x1664xf32, #tpu.memory_space<vmem>>, vector<1x128xf32>
    %12 = vector.broadcast %11 : vector<1x128xf32> to vector<8x128xf32>
    %13 = arith.addf %10, %12 : vector<8x128xf32>
    %cst_10 = arith.constant 0.000000e+00 : f32
    %14 = vector.broadcast %cst_10 : f32 to vector<8x128xf32>
    %15 = arith.maximumf %13, %14 : vector<8x128xf32>
    %16 = arith.truncf %15 : vector<8x128xf32> to vector<8x128xbf16>
    %c0_11 = arith.constant 0 : index
    %c0_12 = arith.constant 0 : index
    %17 = vector.load %arg4[%c0_11, %c0_12] : memref<128x256xbf16, #tpu.memory_space<vmem>>, vector<128x256xbf16>
    %cst_13 = arith.constant dense<0.000000e+00> : vector<8x256xf32>
    %18 = tpu.matmul %16, %17, %cst_13 {dimension_numbers = #tpu.dot_dimension_numbers<[1], [0], [0], [1], [0, 0, 1, 1], [], []>} : vector<8x128xbf16>, vector<128x256xbf16>, vector<8x256xf32> -> vector<8x256xf32>
    %c0_14 = arith.constant 0 : index
    %c256 = arith.constant 256 : index
    %19 = vector.load %arg7[%c0_14, %c256] : memref<1x1664xf32, #tpu.memory_space<vmem>>, vector<1x256xf32>
    %20 = vector.broadcast %19 : vector<1x256xf32> to vector<8x256xf32>
    %21 = arith.addf %18, %20 : vector<8x256xf32>
    %cst_15 = arith.constant 0.000000e+00 : f32
    %22 = vector.broadcast %cst_15 : f32 to vector<8x256xf32>
    %23 = arith.maximumf %21, %22 : vector<8x256xf32>
    %24 = arith.truncf %23 : vector<8x256xf32> to vector<8x256xbf16>
    %c0_16 = arith.constant 0 : index
    %c0_17 = arith.constant 0 : index
    %25 = vector.load %arg5[%c0_16, %c0_17] : memref<256x1024xbf16, #tpu.memory_space<vmem>>, vector<256x1024xbf16>
    %cst_18 = arith.constant dense<0.000000e+00> : vector<8x1024xf32>
    %26 = tpu.matmul %24, %25, %cst_18 {dimension_numbers = #tpu.dot_dimension_numbers<[1], [0], [0], [1], [0, 0, 1, 1], [], []>} : vector<8x256xbf16>, vector<256x1024xbf16>, vector<8x1024xf32> -> vector<8x1024xf32>
    %c0_19 = arith.constant 0 : index
    %c512 = arith.constant 512 : index
    %27 = vector.load %arg7[%c0_19, %c512] : memref<1x1664xf32, #tpu.memory_space<vmem>>, vector<1x1024xf32>
    %28 = vector.broadcast %27 : vector<1x1024xf32> to vector<8x1024xf32>
    %29 = arith.addf %26, %28 : vector<8x1024xf32>
    %cst_20 = arith.constant 0.000000e+00 : f32
    %30 = vector.broadcast %cst_20 : f32 to vector<8x1024xf32>
    %31 = arith.maximumf %29, %30 : vector<8x1024xf32>
    %32 = arith.truncf %31 : vector<8x1024xf32> to vector<8x1024xbf16>
    %c0_21 = arith.constant 0 : index
    %c0_22 = arith.constant 0 : index
    %33 = vector.load %arg6[%c0_21, %c0_22] : memref<1024x128xbf16, #tpu.memory_space<vmem>>, vector<1024x128xbf16>
    %cst_23 = arith.constant dense<0.000000e+00> : vector<8x128xf32>
    %34 = tpu.matmul %32, %33, %cst_23 {dimension_numbers = #tpu.dot_dimension_numbers<[1], [0], [0], [1], [0, 0, 1, 1], [], []>} : vector<8x1024xbf16>, vector<1024x128xbf16>, vector<8x128xf32> -> vector<8x128xf32>
    %c0_24 = arith.constant 0 : index
    %c1536 = arith.constant 1536 : index
    %35 = vector.load %arg7[%c0_24, %c1536] : memref<1x1664xf32, #tpu.memory_space<vmem>>, vector<1x128xf32>
    %36 = vector.broadcast %35 : vector<1x128xf32> to vector<8x128xf32>
    %37 = arith.addf %34, %36 : vector<8x128xf32>
    %c0_25 = arith.constant 0 : index
    %c0_26 = arith.constant 0 : index
    %38 = vector.load %arg8[%c0_25, %c0_26] : memref<8x128xf32, #tpu.memory_space<vmem>>, vector<8x128xf32>
    tpu.vector_store %arg8[%c0_25, %c0_26], %37 {strides = array<i32>} : memref<8x128xf32, #tpu.memory_space<vmem>>, vector<8x128xf32>,
    return
  }
  func.func @transform_0(%arg0: i32) -> (i32, i32) {
    %c0_i32 = arith.constant 0 : i32
    %c0_i32_0 = arith.constant 0 : i32
    return %arg0, %c0_i32 : i32, i32
  }
  func.func @transform_1(%arg0: i32) -> (i32, i32) {
    %c0_i32 = arith.constant 0 : i32
    %c0_i32_0 = arith.constant 0 : i32
    %c0_i32_1 = arith.constant 0 : i32
    return %c0_i32, %c0_i32_0 : i32, i32
  }
  func.func @transform_2(%arg0: i32) -> (i32, i32) {
    %c0_i32 = arith.constant 0 : i32
    %c0_i32_0 = arith.constant 0 : i32
    %c0_i32_1 = arith.constant 0 : i32
    return %c0_i32, %c0_i32_0 : i32, i32
  }
  func.func @transform_3(%arg0: i32) -> (i32, i32) {
    %c0_i32 = arith.constant 0 : i32
    %c0_i32_0 = arith.constant 0 : i32
    %c0_i32_1 = arith.constant 0 : i32
    return %c0_i32, %c0_i32_0 : i32, i32
  }
  func.func @transform_4(%arg0: i32) -> (i32, i32) {
    %c0_i32 = arith.constant 0 : i32
    %c0_i32_0 = arith.constant 0 : i32
    %c0_i32_1 = arith.constant 0 : i32
    return %c0_i32, %c0_i32_0 : i32, i32
  }
  func.func @transform_5(%arg0: i32) -> (i32, i32) {
    %c0_i32 = arith.constant 0 : i32
    %c0_i32_0 = arith.constant 0 : i32
    %c0_i32_1 = arith.constant 0 : i32
    return %c0_i32, %c0_i32_0 : i32, i32
  }
  func.func @transform_6(%arg0: i32) -> (i32, i32) {
    %c0_i32 = arith.constant 0 : i32
    %c0_i32_0 = arith.constant 0 : i32
    %c0_i32_1 = arith.constant 0 : i32
    return %c0_i32, %c0_i32_0 : i32, i32
  }
  func.func @transform_7(%arg0: i32) -> (i32, i32) {
    %c0_i32 = arith.constant 0 : i32
    %c0_i32_0 = arith.constant 0 : i32
    return %arg0, %c0_i32 : i32, i32
  }
}

</mosaic_0001>

<llo_original>
// kernel: tpu_custom_call.1
$region0: #{tpu_custom_call.1}
  #allocation0 [shape = 'u32[]', space=smem, size = 0x4, offset = 0x4, fixed_abs, tag = 'smem constant byte address 0x4 - core index']
  #allocation1 [shape = 'u32[144,128]{1,0:T(1,128)}', space=vmem, size = 0x12000, scoped, tag = 'internal scratch']
  %s0 = inlined_call_operand.hbm [shape: bf16[8,32], index: 0, kind: input, shape index: {}]
  %s1 = inlined_call_operand.hbm [shape: bf16[32,64], index: 1, kind: input, shape index: {}]
  %s2 = inlined_call_operand.hbm [shape: bf16[64,128], index: 2, kind: input, shape index: {}]
  %s3 = inlined_call_operand.hbm [shape: bf16[128,256], index: 3, kind: input, shape index: {}]
  %s4 = inlined_call_operand.hbm [shape: bf16[256,1024], index: 4, kind: input, shape index: {}]
  %s5 = inlined_call_operand.hbm [shape: bf16[1024,128], index: 5, kind: input, shape index: {}]
  %s6 = inlined_call_operand.vmem [shape: f32[1,1664], index: 6, kind: input, shape index: {}]
  %s7 = inlined_call_operand.hbm [shape: f32[8,128], index: 7, kind: output, shape index: {}]
  %s8 = sld [smem:[#allocation0]]
  $region62: #{tpu_custom_call.1} parent=0
    _
  %s10 = ssub.s32 1, %s8
  %s11 = scalar_select 0, %s10, %s8
  $region1: #{tpu_custom_call.1} parent=0
    #allocation2 [shape = 'u8[2048]{0}', space=vmem, size = 0x800, scoped, tag = 'input window, operand 0, single buffered']
    #allocation3 [shape = 's32[1]{0}', space=sflag, size = 0x4, scoped, tag = 'scoped memory for tpu_custom_call.1']
    #allocation4 [shape = 's32[1]{0}', space=sflag, size = 0x4, scoped, tag = 'scoped memory for tpu_custom_call.1']
    #allocation5 [shape = 'u8[8192]{0}', space=vmem, size = 0x2000, scoped, tag = 'input window, operand 1, single buffered']
    #allocation6 [shape = 's32[1]{0}', space=sflag, size = 0x4, scoped, tag = 'scoped memory for tpu_custom_call.1']
    #allocation7 [shape = 'u8[16384]{0}', space=vmem, size = 0x4000, scoped, tag = 'input window, operand 2, single buffered']
    #allocation8 [shape = 'u8[65536]{0}', space=vmem, size = 0x10000, scoped, tag = 'input window, operand 3, single buffered']
    #allocation9 [shape = 's32[1]{0}', space=sflag, size = 0x4, scoped, tag = 'scoped memory for tpu_custom_call.1']
    #allocation10 [shape = 'u8[524288]{0}', space=vmem, size = 0x80000, scoped, tag = 'input window, operand 4, single buffered']
    #allocation11 [shape = 'u8[262144]{0}', space=vmem, size = 0x40000, scoped, tag = 'input window, operand 5, single buffered']
    #allocation12 [shape = 's32[1]{0}', space=sflag, size = 0x4, scoped, tag = 'scoped memory for tpu_custom_call.1']
    #allocation13 [shape = 'u8[4096]{0}', space=vmem, size = 0x1000, scoped, tag = 'output window, operand 0, single buffered']
    %12 = vsyncpa [#allocation3], 0
    %13 = vsyncpa [#allocation6], 0
    %14 = vsyncpa [#allocation9], 0
    %15 = vsyncpa [#allocation12], 0
    %16 = vsyncpa [#allocation4], 0
    // Predicated region
    $region2: #{tpu_custom_call.1} parent=1 // pred_check
      _
    $region3: #{tpu_custom_call.1} parent=1 // pred_check_branch
      %18 = sbr.rel (0) target = $region5
    $region4: #{tpu_custom_call.1} parent=1 // pred_region
      %s20 = ssub.s32 64, 64
      %21 = vsyncadd [#allocation3], %s20
      %s23 = sshll.u32 [#allocation2], 4
      %s24 = int_to_ptr.vmem [resolvable:$true] %s23
      %26 = dma.hbm_to_vmem [thread:$0]  %s0, 64, %s24, [#allocation3]
    $region5: #{tpu_custom_call.1} parent=1 // pred_fallthru
      _
    // Predicated region
    $region6: #{tpu_custom_call.1} parent=1 // pred_check
      _
    $region7: #{tpu_custom_call.1} parent=1 // pred_check_branch
      %28 = sbr.rel (0) target = $region9
    $region8: #{tpu_custom_call.1} parent=1 // pred_region
      %s30 = ssub.s32 256, 256
      %31 = vsyncadd [#allocation6], %s30
      %s32 = sshll.u32 [#allocation5], 4
      %s33 = int_to_ptr.vmem [resolvable:$true] %s32
      %38 = dma.hbm_to_vmem [thread:$0]  %s1, 256, %s33, [#allocation6], 64, 64, 4
    $region9: #{tpu_custom_call.1} parent=1 // pred_fallthru
      _
    // Predicated region
    $region10: #{tpu_custom_call.1} parent=1 // pred_check
      _
    $region11: #{tpu_custom_call.1} parent=1 // pred_check_branch
      %40 = sbr.rel (0) target = $region13
    $region12: #{tpu_custom_call.1} parent=1 // pred_region
      %s42 = ssub.s32 512, 512
      %43 = vsyncadd [#allocation6], %s42
      %s44 = sshll.u32 [#allocation7], 4
      %s45 = int_to_ptr.vmem [resolvable:$true] %s44
      %50 = dma.hbm_to_vmem [thread:$0]  %s2, 512, %s45, [#allocation6], 64, 64, 4
    $region13: #{tpu_custom_call.1} parent=1 // pred_fallthru
      _
    // Predicated region
    $region14: #{tpu_custom_call.1} parent=1 // pred_check
      _
    $region15: #{tpu_custom_call.1} parent=1 // pred_check_branch
      %52 = sbr.rel (0) target = $region17
    $region16: #{tpu_custom_call.1} parent=1 // pred_region
      %s54 = ssub.s32 2048, 2048
      %55 = vsyncadd [#allocation9], %s54
      %s56 = sshll.u32 [#allocation8], 4
      %s57 = int_to_ptr.vmem [resolvable:$true] %s56
      %62 = dma.hbm_to_vmem [thread:$0]  %s3, 2048, %s57, [#allocation9], 128, 128, 8
    $region17: #{tpu_custom_call.1} parent=1 // pred_fallthru
      _
    // Predicated region
    $region18: #{tpu_custom_call.1} parent=1 // pred_check
      _
    $region19: #{tpu_custom_call.1} parent=1 // pred_check_branch
      %64 = sbr.rel (0) target = $region21
    $region20: #{tpu_custom_call.1} parent=1 // pred_region
      %s66 = ssub.s32 16384, 16384
      %67 = vsyncadd [#allocation9], %s66
      %s68 = sshll.u32 [#allocation10], 4
      %s69 = int_to_ptr.vmem [resolvable:$true] %s68
      %74 = dma.hbm_to_vmem [thread:$0]  %s4, 16384, %s69, [#allocation9], 512, 512, 32
    $region21: #{tpu_custom_call.1} parent=1 // pred_fallthru
      _
    // Predicated region
    $region22: #{tpu_custom_call.1} parent=1 // pred_check
      _
    $region23: #{tpu_custom_call.1} parent=1 // pred_check_branch
      %76 = sbr.rel (0) target = $region25
    $region24: #{tpu_custom_call.1} parent=1 // pred_region
      %s78 = ssub.s32 8192, 8192
      %79 = vsyncadd [#allocation12], %s78
      %s80 = sshll.u32 [#allocation11], 4
      %s81 = int_to_ptr.vmem [resolvable:$true] %s80
      %86 = dma.hbm_to_vmem [thread:$0]  %s5, 8192, %s81, [#allocation12], 64, 64, 4
    $region25: #{tpu_custom_call.1} parent=1 // pred_fallthru
      _
    // Predicated region
    $region26: #{tpu_custom_call.1} parent=1 // pred_check
      _
    $region27: #{tpu_custom_call.1} parent=1 // pred_check_branch
      %88 = sbr.rel (0) target = $region29
    $region28: #{tpu_custom_call.1} parent=1 // pred_region
      _
    $region29: #{tpu_custom_call.1} parent=1 // pred_fallthru
      _
    // Predicated region
    $region30: #{tpu_custom_call.1} parent=1 // pred_check
      _
    $region31: #{tpu_custom_call.1} parent=1 // pred_check_branch
      %90 = sbr.rel (0) target = $region33
    $region32: #{tpu_custom_call.1} parent=1 // pred_region
      %91 = dma.done [#allocation3], 64
    $region33: #{tpu_custom_call.1} parent=1 // pred_fallthru
      _
    // Predicated region
    $region34: #{tpu_custom_call.1} parent=1 // pred_check
      _
    $region35: #{tpu_custom_call.1} parent=1 // pred_check_branch
      %93 = sbr.rel (0) target = $region37
    $region36: #{tpu_custom_call.1} parent=1 // pred_region
      %94 = dma.done [#allocation6], 256
    $region37: #{tpu_custom_call.1} parent=1 // pred_fallthru
      _
    // Predicated region
    $region38: #{tpu_custom_call.1} parent=1 // pred_check
      _
    $region39: #{tpu_custom_call.1} parent=1 // pred_check_branch
      %96 = sbr.rel (0) target = $region41
    $region40: #{tpu_custom_call.1} parent=1 // pred_region
      %97 = dma.done [#allocation6], 512
    $region41: #{tpu_custom_call.1} parent=1 // pred_fallthru
      _
    // Predicated region
    $region42: #{tpu_custom_call.1} parent=1 // pred_check
      _
    $region43: #{tpu_custom_call.1} parent=1 // pred_check_branch
      %99 = sbr.rel (0) target = $region45
    $region44: #{tpu_custom_call.1} parent=1 // pred_region
      %100 = dma.done [#allocation9], 2048
    $region45: #{tpu_custom_call.1} parent=1 // pred_fallthru
      _
    // Predicated region
    $region46: #{tpu_custom_call.1} parent=1 // pred_check
      _
    $region47: #{tpu_custom_call.1} parent=1 // pred_check_branch
      %102 = sbr.rel (0) target = $region49
    $region48: #{tpu_custom_call.1} parent=1 // pred_region
      %103 = dma.done [#allocation9], 16384
    $region49: #{tpu_custom_call.1} parent=1 // pred_fallthru
      _
    // Predicated region
    $region50: #{tpu_custom_call.1} parent=1 // pred_check
      _
    $region51: #{tpu_custom_call.1} parent=1 // pred_check_branch
      %105 = sbr.rel (0) target = $region53
    $region52: #{tpu_custom_call.1} parent=1 // pred_region
      %106 = dma.done [#allocation12], 8192
    $region53: #{tpu_custom_call.1} parent=1 // pred_fallthru
      _
    %v108 = vld [vmem:[#allocation2] sm:$0xf]
    %v109 = vld [vmem:[#allocation5] sm:$0xf]
    %v110 = vld [vmem:[#allocation5 + $0x4] sm:$0xf]
    %v111 = vld [vmem:[#allocation5 + $0x8] sm:$0xf]
    %v112 = vld [vmem:[#allocation5 + $0xc] sm:$0xf]
    %v113 = vld [vmem:[%s6] sm:$0x1]
    %v115 = vlaneseq
    %v116 = vshrl.u32 %v115, 7
    %v117 = vsub.s32 0, %v116
    %v118 = vrot.slane %v113, %v117
    %v124 = vunpack.c.l.b16 %v109
    %v125 = vunpack.c.l.b16 %v110
    %v126 = vunpack.c.l.b16 %v111
    %v127 = vunpack.c.l.b16 %v112
    %v128 = vpack.c.b16 %v125, %v124
    %v129 = vpack.c.b16 %v127, %v126
    %vm132 = vcmask 261120
    %v134 = vsel %vm132, %v108, 0
    %136 = vmatprep.subr.bf16.mxu0 0
    %137 = vmatpush1.bf16.msra.mxu0 %v128
    %138 = vmatprep.subr.bf16.mxu0 0
    %139 = vmatpush1.bf16.msra.mxu0 %v129
    %140 = vmatprep.subr.bf16.mxu0 0
    %141 = vmatpush1.bf16.msra.mxu0 0
    %142 = vmatprep.subr.bf16.mxu0 0
    %143 = vmatpush1.bf16.msra.mxu0 0
    %144 = vmatprep.subr.bf16.mxu0 0
    %145 = vmatpush1.bf16.msra.mxu0 0
    %146 = vmatprep.subr.bf16.mxu0 0
    %147 = vmatpush1.bf16.msra.mxu0 0
    %148 = vmatprep.subr.bf16.mxu0 0
    %149 = vmatpush1.bf16.msra.mxu0 0
    %150 = vmatprep.subr.bf16.mxu0 0
    %151 = vmatpush1.bf16.msra.mxu0 0
    %152 = vmatprep.subr.bf16.mxu0 0
    %153 = vmatpush1.bf16.msra.mxu0 0
    %154 = vmatprep.subr.bf16.mxu0 0
    %155 = vmatpush1.bf16.msra.mxu0 0
    %156 = vmatprep.subr.bf16.mxu0 0
    %157 = vmatpush1.bf16.msra.mxu0 0
    %158 = vmatprep.subr.bf16.mxu0 0
    %159 = vmatpush1.bf16.msra.mxu0 0
    %160 = vmatprep.subr.bf16.mxu0 0
    %161 = vmatpush1.bf16.msra.mxu0 0
    %162 = vmatprep.subr.bf16.mxu0 0
    %163 = vmatpush1.bf16.msra.mxu0 0
    %164 = vmatprep.subr.bf16.mxu0 0
    %165 = vmatpush1.bf16.msra.mxu0 0
    %166 = vmatprep.subr.bf16.mxu0 0
    %167 = vmatpush1.bf16.msra.mxu0 0
    %168 = vmatprep.mubr.bf16.mxu0 0
    %169 = vmatmul.mubr.bf16.gmra.mrb[0].mxu0 %v134
    %v170 = vpop.f32.mrb[0].mxu0
    %v171 = vadd.f32 %v118, %v170
    %v172 = vpop.f32.mrb[0].mxu0
    %v173 = vpop.f32.mrb[0].mxu0
    %v174 = vpop.f32.mrb[0].mxu0
    %175 = vdwg.mxu0
    %v176 = vmax.f32 %v171, 0.0
    %v177 = vpack.c.bf16 %v176, %v176
    %v178 = vld [vmem:[#allocation7] sm:$0xf]
    %v179 = vld [vmem:[#allocation7 + $0x4] sm:$0xf]
    %v180 = vld [vmem:[#allocation7 + $0x8] sm:$0xf]
    %v181 = vld [vmem:[#allocation7 + $0xc] sm:$0xf]
    %v182 = vld [vmem:[#allocation7 + $0x10] sm:$0xf]
    %v183 = vld [vmem:[#allocation7 + $0x14] sm:$0xf]
    %v184 = vld [vmem:[#allocation7 + $0x18] sm:$0xf]
    %v185 = vld [vmem:[#allocation7 + $0x1c] sm:$0xf]
    %v186 = vld [vmem:[%s6 + $0x1] sm:$0x1]
    %v188 = vlaneseq
    %v189 = vshrl.u32 %v188, 7
    %v190 = vsub.s32 0, %v189
    %v191 = vrot.slane %v186, %v190
    %v201 = vunpack.c.l.b16 %v178
    %v202 = vunpack.c.l.b16 %v179
    %v203 = vunpack.c.l.b16 %v180
    %v204 = vunpack.c.l.b16 %v181
    %v205 = vunpack.c.l.b16 %v182
    %v206 = vunpack.c.l.b16 %v183
    %v207 = vunpack.c.l.b16 %v184
    %v208 = vunpack.c.l.b16 %v185
    %v209 = vpack.c.b16 %v202, %v201
    %v210 = vpack.c.b16 %v204, %v203
    %v211 = vpack.c.b16 %v206, %v205
    %v212 = vpack.c.b16 %v208, %v207
    %vm217 = vcmask 523264
    %v219 = vsel %vm217, %v177, 0
    %221 = vmatprep.subr.bf16.mxu0 0
    %222 = vmatpush1.bf16.msra.mxu0 %v209
    %223 = vmatprep.subr.bf16.mxu0 0
    %224 = vmatpush1.bf16.msra.mxu0 %v210
    %225 = vmatprep.subr.bf16.mxu0 0
    %226 = vmatpush1.bf16.msra.mxu0 %v211
    %227 = vmatprep.subr.bf16.mxu0 0
    %228 = vmatpush1.bf16.msra.mxu0 %v212
    %229 = vmatprep.subr.bf16.mxu0 0
    %230 = vmatpush1.bf16.msra.mxu0 0
    %231 = vmatprep.subr.bf16.mxu0 0
    %232 = vmatpush1.bf16.msra.mxu0 0
    %233 = vmatprep.subr.bf16.mxu0 0
    %234 = vmatpush1.bf16.msra.mxu0 0
    %235 = vmatprep.subr.bf16.mxu0 0
    %236 = vmatpush1.bf16.msra.mxu0 0
    %237 = vmatprep.subr.bf16.mxu0 0
    %238 = vmatpush1.bf16.msra.mxu0 0
    %239 = vmatprep.subr.bf16.mxu0 0
    %240 = vmatpush1.bf16.msra.mxu0 0
    %241 = vmatprep.subr.bf16.mxu0 0
    %242 = vmatpush1.bf16.msra.mxu0 0
    %243 = vmatprep.subr.bf16.mxu0 0
    %244 = vmatpush1.bf16.msra.mxu0 0
    %245 = vmatprep.subr.bf16.mxu0 0
    %246 = vmatpush1.bf16.msra.mxu0 0
    %247 = vmatprep.subr.bf16.mxu0 0
    %248 = vmatpush1.bf16.msra.mxu0 0
    %249 = vmatprep.subr.bf16.mxu0 0
    %250 = vmatpush1.bf16.msra.mxu0 0
    %251 = vmatprep.subr.bf16.mxu0 0
    %252 = vmatpush1.bf16.msra.mxu0 0
    %253 = vmatprep.mubr.bf16.mxu0 0
    %254 = vmatmul.mubr.bf16.gmra.mrb[0].mxu0 %v219
    %v255 = vpop.f32.mrb[0].mxu0
    %v256 = vadd.f32 %v191, %v255
    %v257 = vpop.f32.mrb[0].mxu0
    %v258 = vpop.f32.mrb[0].mxu0
    %v259 = vpop.f32.mrb[0].mxu0
    %260 = vdwg.mxu0
    %v261 = vmax.f32 %v256, 0.0
    %v262 = vpack.c.bf16 %v261, %v261
    %v263 = vld [vmem:[#allocation8] sm:$0xff]
    %v264 = vld [vmem:[#allocation8 + $0x8] sm:$0xff]
    %v265 = vld [vmem:[#allocation8 + $0x10] sm:$0xff]
    %v266 = vld [vmem:[#allocation8 + $0x18] sm:$0xff]
    %v267 = vld [vmem:[#allocation8 + $0x20] sm:$0xff]
    %v268 = vld [vmem:[#allocation8 + $0x28] sm:$0xff]
    %v269 = vld [vmem:[#allocation8 + $0x30] sm:$0xff]
    %v270 = vld [vmem:[#allocation8 + $0x38] sm:$0xff]
    %v271 = vld [vmem:[#allocation8 + $0x40] sm:$0xff]
    %v272 = vld [vmem:[#allocation8 + $0x48] sm:$0xff]
    %v273 = vld [vmem:[#allocation8 + $0x50] sm:$0xff]
    %v274 = vld [vmem:[#allocation8 + $0x58] sm:$0xff]
    %v275 = vld [vmem:[#allocation8 + $0x60] sm:$0xff]
    %v276 = vld [vmem:[#allocation8 + $0x68] sm:$0xff]
    %v277 = vld [vmem:[#allocation8 + $0x70] sm:$0xff]
    %v278 = vld [vmem:[#allocation8 + $0x78] sm:$0xff]
    %v279 = vld [vmem:[%s6 + $0x2] sm:$0x3]
    %v281 = vlaneseq
    %v282 = vshrl.u32 %v281, 7
    %v283 = vsub.s32 0, %v282
    %v284 = vrot.slane %v279, %v283
    %v285 = vlaneseq
    %v286 = vshrl.u32 %v285, 7
    %v287 = vsub.s32 1, %v286
    %v288 = vrot.slane %v279, %v287
    %v307 = vunpack.c.l.b16 %v263
    %v308 = vunpack.c.h.b16 %v263
    %v309 = vunpack.c.l.b16 %v264
    %v310 = vunpack.c.h.b16 %v264
    %v311 = vunpack.c.l.b16 %v265
    %v312 = vunpack.c.h.b16 %v265
    %v313 = vunpack.c.l.b16 %v266
    %v314 = vunpack.c.h.b16 %v266
    %v315 = vunpack.c.l.b16 %v267
    %v316 = vunpack.c.h.b16 %v267
    %v317 = vunpack.c.l.b16 %v268
    %v318 = vunpack.c.h.b16 %v268
    %v319 = vunpack.c.l.b16 %v269
    %v320 = vunpack.c.h.b16 %v269
    %v321 = vunpack.c.l.b16 %v270
    %v322 = vunpack.c.h.b16 %v270
    %v323 = vunpack.c.l.b16 %v271
    %v324 = vunpack.c.h.b16 %v271
    %v325 = vunpack.c.l.b16 %v272
    %v326 = vunpack.c.h.b16 %v272
    %v327 = vunpack.c.l.b16 %v273
    %v328 = vunpack.c.h.b16 %v273
    %v329 = vunpack.c.l.b16 %v274
    %v330 = vunpack.c.h.b16 %v274
    %v331 = vunpack.c.l.b16 %v275
    %v332 = vunpack.c.h.b16 %v275
    %v333 = vunpack.c.l.b16 %v276
    %v334 = vunpack.c.h.b16 %v276
    %v335 = vunpack.c.l.b16 %v277
    %v336 = vunpack.c.h.b16 %v277
    %v337 = vunpack.c.l.b16 %v278
    %v338 = vunpack.c.h.b16 %v278
    %v339 = vpack.c.b16 %v309, %v307
    %v340 = vpack.c.b16 %v310, %v308
    %v341 = vpack.c.b16 %v313, %v311
    %v342 = vpack.c.b16 %v314, %v312
    %v343 = vpack.c.b16 %v317, %v315
    %v344 = vpack.c.b16 %v318, %v316
    %v345 = vpack.c.b16 %v321, %v319
    %v346 = vpack.c.b16 %v322, %v320
    %v347 = vpack.c.b16 %v325, %v323
    %v348 = vpack.c.b16 %v326, %v324
    %v349 = vpack.c.b16 %v329, %v327
    %v350 = vpack.c.b16 %v330, %v328
    %v351 = vpack.c.b16 %v333, %v331
    %v352 = vpack.c.b16 %v334, %v332
    %v353 = vpack.c.b16 %v337, %v335
    %v354 = vpack.c.b16 %v338, %v336
    %371 = vmatprep.subr.bf16.mxu0 %v340
    %372 = vmatpush1.bf16.msra.mxu0 %v339
    %373 = vmatprep.subr.bf16.mxu0 %v342
    %374 = vmatpush1.bf16.msra.mxu0 %v341
    %375 = vmatprep.subr.bf16.mxu0 %v344
    %376 = vmatpush1.bf16.msra.mxu0 %v343
    %377 = vmatprep.subr.bf16.mxu0 %v346
    %378 = vmatpush1.bf16.msra.mxu0 %v345
    %379 = vmatprep.subr.bf16.mxu0 %v348
    %380 = vmatpush1.bf16.msra.mxu0 %v347
    %381 = vmatprep.subr.bf16.mxu0 %v350
    %382 = vmatpush1.bf16.msra.mxu0 %v349
    %383 = vmatprep.subr.bf16.mxu0 %v352
    %384 = vmatpush1.bf16.msra.mxu0 %v351
    %385 = vmatprep.subr.bf16.mxu0 %v354
    %386 = vmatpush1.bf16.msra.mxu0 %v353
    %387 = vmatprep.subr.bf16.mxu0 0
    %388 = vmatpush1.bf16.msra.mxu0 0
    %389 = vmatprep.subr.bf16.mxu0 0
    %390 = vmatpush1.bf16.msra.mxu0 0
    %391 = vmatprep.subr.bf16.mxu0 0
    %392 = vmatpush1.bf16.msra.mxu0 0
    %393 = vmatprep.subr.bf16.mxu0 0
    %394 = vmatpush1.bf16.msra.mxu0 0
    %395 = vmatprep.subr.bf16.mxu0 0
    %396 = vmatpush1.bf16.msra.mxu0 0
    %397 = vmatprep.subr.bf16.mxu0 0
    %398 = vmatpush1.bf16.msra.mxu0 0
    %399 = vmatprep.subr.bf16.mxu0 0
    %400 = vmatpush1.bf16.msra.mxu0 0
    %401 = vmatprep.subr.bf16.mxu0 0
    %402 = vmatpush1.bf16.msra.mxu0 0
    %403 = vmatprep.mubr.bf16.mxu0 0
    %404 = vmatmul.mubr.bf16.gmra.mrb[0].mxu0 %v262
    %v405 = vpop.f32.mrb[0].mxu0
    %v406 = vadd.f32 %v284, %v405
    %v407 = vpop.f32.mrb[0].mxu0
    %v408 = vadd.f32 %v288, %v407
    %v409 = vpop.f32.mrb[0].mxu0
    %v410 = vpop.f32.mrb[0].mxu0
    %411 = vdwg.mxu0
    %v412 = vmax.f32 %v406, 0.0
    %v413 = vmax.f32 %v408, 0.0
    %v414 = vpack.c.bf16 %v412, %v412
    %v415 = vpack.c.bf16 %v413, %v413
    %v416 = vld [vmem:[#allocation10] sm:$0xff]
    %v417 = vld [vmem:[#allocation10 + $0x8] sm:$0xff]
    %v418 = vld [vmem:[#allocation10 + $0x10] sm:$0xff]
    %v419 = vld [vmem:[#allocation10 + $0x18] sm:$0xff]
    %v420 = vld [vmem:[#allocation10 + $0x20] sm:$0xff]
    %v421 = vld [vmem:[#allocation10 + $0x28] sm:$0xff]
    %v422 = vld [vmem:[#allocation10 + $0x30] sm:$0xff]
    %v423 = vld [vmem:[#allocation10 + $0x38] sm:$0xff]
    %v424 = vld [vmem:[#allocation10 + $0x40] sm:$0xff]
    %v425 = vld [vmem:[#allocation10 + $0x48] sm:$0xff]
    %v426 = vld [vmem:[#allocation10 + $0x50] sm:$0xff]
    %v427 = vld [vmem:[#allocation10 + $0x58] sm:$0xff]
    %v428 = vld [vmem:[#allocation10 + $0x60] sm:$0xff]
    %v429 = vld [vmem:[#allocation10 + $0x68] sm:$0xff]
    %v430 = vld [vmem:[#allocation10 + $0x70] sm:$0xff]
    %v431 = vld [vmem:[#allocation10 + $0x78] sm:$0xff]
    %v432 = vld [vmem:[#allocation10 + $0x80] sm:$0xff]
    %v433 = vld [vmem:[#allocation10 + $0x88] sm:$0xff]
    %v434 = vld [vmem:[#allocation10 + $0x90] sm:$0xff]
    %v435 = vld [vmem:[#allocation10 + $0x98] sm:$0xff]
    %v436 = vld [vmem:[#allocation10 + $0xa0] sm:$0xff]
    %v437 = vld [vmem:[#allocation10 + $0xa8] sm:$0xff]
    %v438 = vld [vmem:[#allocation10 + $0xb0] sm:$0xff]
    %v439 = vld [vmem:[#allocation10 + $0xb8] sm:$0xff]
    %v440 = vld [vmem:[#allocation10 + $0xc0] sm:$0xff]
    %v441 = vld [vmem:[#allocation10 + $0xc8] sm:$0xff]
    %v442 = vld [vmem:[#allocation10 + $0xd0] sm:$0xff]
    %v443 = vld [vmem:[#allocation10 + $0xd8] sm:$0xff]
    %v444 = vld [vmem:[#allocation10 + $0xe0] sm:$0xff]
    %v445 = vld [vmem:[#allocation10 + $0xe8] sm:$0xff]
    %v446 = vld [vmem:[#allocation10 + $0xf0] sm:$0xff]
    %v447 = vld [vmem:[#allocation10 + $0xf8] sm:$0xff]
    %v448 = vld [vmem:[#allocation10 + $0x100] sm:$0xff]
    %v449 = vld [vmem:[#allocation10 + $0x108] sm:$0xff]
    %v450 = vld [vmem:[#allocation10 + $0x110] sm:$0xff]
    %v451 = vld [vmem:[#allocation10 + $0x118] sm:$0xff]
    %v452 = vld [vmem:[#allocation10 + $0x120] sm:$0xff]
    %v453 = vld [vmem:[#allocation10 + $0x128] sm:$0xff]
    %v454 = vld [vmem:[#allocation10 + $0x130] sm:$0xff]
    %v455 = vld [vmem:[#allocation10 + $0x138] sm:$0xff]
    %v456 = vld [vmem:[#allocation10 + $0x140] sm:$0xff]
    %v457 = vld [vmem:[#allocation10 + $0x148] sm:$0xff]
    %v458 = vld [vmem:[#allocation10 + $0x150] sm:$0xff]
    %v459 = vld [vmem:[#allocation10 + $0x158] sm:$0xff]
    %v460 = vld [vmem:[#allocation10 + $0x160] sm:$0xff]
    %v461 = vld [vmem:[#allocation10 + $0x168] sm:$0xff]
    %v462 = vld [vmem:[#allocation10 + $0x170] sm:$0xff]
    %v463 = vld [vmem:[#allocation10 + $0x178] sm:$0xff]
    %v464 = vld [vmem:[#allocation10 + $0x180] sm:$0xff]
    %v465 = vld [vmem:[#allocation10 + $0x188] sm:$0xff]
    %v466 = vld [vmem:[#allocation10 + $0x190] sm:$0xff]
    %v467 = vld [vmem:[#allocation10 + $0x198] sm:$0xff]
    %v468 = vld [vmem:[#allocation10 + $0x1a0] sm:$0xff]
    %v469 = vld [vmem:[#allocation10 + $0x1a8] sm:$0xff]
    %v470 = vld [vmem:[#allocation10 + $0x1b0] sm:$0xff]
    %v471 = vld [vmem:[#allocation10 + $0x1b8] sm:$0xff]
    %v472 = vld [vmem:[#allocation10 + $0x1c0] sm:$0xff]
    %v473 = vld [vmem:[#allocation10 + $0x1c8] sm:$0xff]
    %v474 = vld [vmem:[#allocation10 + $0x1d0] sm:$0xff]
    %v475 = vld [vmem:[#allocation10 + $0x1d8] sm:$0xff]
    %v476 = vld [vmem:[#allocation10 + $0x1e0] sm:$0xff]
    %v477 = vld [vmem:[#allocation10 + $0x1e8] sm:$0xff]
    %v478 = vld [vmem:[#allocation10 + $0x1f0] sm:$0xff]
    %v479 = vld [vmem:[#allocation10 + $0x1f8] sm:$0xff]
    %v480 = vld [vmem:[#allocation10 + $0x200] sm:$0xff]
    %v481 = vld [vmem:[#allocation10 + $0x208] sm:$0xff]
    %v482 = vld [vmem:[#allocation10 + $0x210] sm:$0xff]
    %v483 = vld [vmem:[#allocation10 + $0x218] sm:$0xff]
    %v484 = vld [vmem:[#allocation10 + $0x220] sm:$0xff]
    %v485 = vld [vmem:[#allocation10 + $0x228] sm:$0xff]
    %v486 = vld [vmem:[#allocation10 + $0x230] sm:$0xff]
    %v487 = vld [vmem:[#allocation10 + $0x238] sm:$0xff]
    %v488 = vld [vmem:[#allocation10 + $0x240] sm:$0xff]
    %v489 = vld [vmem:[#allocation10 + $0x248] sm:$0xff]
    %v490 = vld [vmem:[#allocation10 + $0x250] sm:$0xff]
    %v491 = vld [vmem:[#allocation10 + $0x258] sm:$0xff]
    %v492 = vld [vmem:[#allocation10 + $0x260] sm:$0xff]
    %v493 = vld [vmem:[#allocation10 + $0x268] sm:$0xff]
    %v494 = vld [vmem:[#allocation10 + $0x270] sm:$0xff]
    %v495 = vld [vmem:[#allocation10 + $0x278] sm:$0xff]
    %v496 = vld [vmem:[#allocation10 + $0x280] sm:$0xff]
    %v497 = vld [vmem:[#allocation10 + $0x288] sm:$0xff]
    %v498 = vld [vmem:[#allocation10 + $0x290] sm:$0xff]
    %v499 = vld [vmem:[#allocation10 + $0x298] sm:$0xff]
    %v500 = vld [vmem:[#allocation10 + $0x2a0] sm:$0xff]
    %v501 = vld [vmem:[#allocation10 + $0x2a8] sm:$0xff]
    %v502 = vld [vmem:[#allocation10 + $0x2b0] sm:$0xff]
    %v503 = vld [vmem:[#allocation10 + $0x2b8] sm:$0xff]
    %v504 = vld [vmem:[#allocation10 + $0x2c0] sm:$0xff]
    %v505 = vld [vmem:[#allocation10 + $0x2c8] sm:$0xff]
    %v506 = vld [vmem:[#allocation10 + $0x2d0] sm:$0xff]
    %v507 = vld [vmem:[#allocation10 + $0x2d8] sm:$0xff]
    %v508 = vld [vmem:[#allocation10 + $0x2e0] sm:$0xff]
    %v509 = vld [vmem:[#allocation10 + $0x2e8] sm:$0xff]
    %v510 = vld [vmem:[#allocation10 + $0x2f0] sm:$0xff]
    %v511 = vld [vmem:[#allocation10 + $0x2f8] sm:$0xff]
    %v512 = vld [vmem:[#allocation10 + $0x300] sm:$0xff]
    %v513 = vld [vmem:[#allocation10 + $0x308] sm:$0xff]
    %v514 = vld [vmem:[#allocation10 + $0x310] sm:$0xff]
    %v515 = vld [vmem:[#allocation10 + $0x318] sm:$0xff]
    %v516 = vld [vmem:[#allocation10 + $0x320] sm:$0xff]
    %v517 = vld [vmem:[#allocation10 + $0x328] sm:$0xff]
    %v518 = vld [vmem:[#allocation10 + $0x330] sm:$0xff]
    %v519 = vld [vmem:[#allocation10 + $0x338] sm:$0xff]
    %v520 = vld [vmem:[#allocation10 + $0x340] sm:$0xff]
    %v521 = vld [vmem:[#allocation10 + $0x348] sm:$0xff]
    %v522 = vld [vmem:[#allocation10 + $0x350] sm:$0xff]
    %v523 = vld [vmem:[#allocation10 + $0x358] sm:$0xff]
    %v524 = vld [vmem:[#allocation10 + $0x360] sm:$0xff]
    %v525 = vld [vmem:[#allocation10 + $0x368] sm:$0xff]
    %v526 = vld [vmem:[#allocation10 + $0x370] sm:$0xff]
    %v527 = vld [vmem:[#allocation10 + $0x378] sm:$0xff]
    %v528 = vld [vmem:[#allocation10 + $0x380] sm:$0xff]
    %v529 = vld [vmem:[#allocation10 + $0x388] sm:$0xff]
    %v530 = vld [vmem:[#allocation10 + $0x390] sm:$0xff]
    %v531 = vld [vmem:[#allocation10 + $0x398] sm:$0xff]
    %v532 = vld [vmem:[#allocation10 + $0x3a0] sm:$0xff]
    %v533 = vld [vmem:[#allocation10 + $0x3a8] sm:$0xff]
    %v534 = vld [vmem:[#allocation10 + $0x3b0] sm:$0xff]
    %v535 = vld [vmem:[#allocation10 + $0x3b8] sm:$0xff]
    %v536 = vld [vmem:[#allocation10 + $0x3c0] sm:$0xff]
    %v537 = vld [vmem:[#allocation10 + $0x3c8] sm:$0xff]
    %v538 = vld [vmem:[#allocation10 + $0x3d0] sm:$0xff]
    %v539 = vld [vmem:[#allocation10 + $0x3d8] sm:$0xff]
    %v540 = vld [vmem:[#allocation10 + $0x3e0] sm:$0xff]
    %v541 = vld [vmem:[#allocation10 + $0x3e8] sm:$0xff]
    %v542 = vld [vmem:[#allocation10 + $0x3f0] sm:$0xff]
    %v543 = vld [vmem:[#allocation10 + $0x3f8] sm:$0xff]
    %v544 = vld [vmem:[%s6 + $0x4] sm:$0xff]
    %v546 = vlaneseq
    %v547 = vshrl.u32 %v546, 7
    %v548 = vsub.s32 0, %v547
    %v549 = vrot.slane %v544, %v548
    %v550 = vlaneseq
    %v551 = vshrl.u32 %v550, 7
    %v552 = vsub.s32 1, %v551
    %v553 = vrot.slane %v544, %v552
    %v554 = vlaneseq
    %v555 = vshrl.u32 %v554, 7
    %v556 = vsub.s32 2, %v555
    %v557 = vrot.slane %v544, %v556
    %v558 = vlaneseq
    %v559 = vshrl.u32 %v558, 7
    %v560 = vsub.s32 3, %v559
    %v561 = vrot.slane %v544, %v560
    %v562 = vlaneseq
    %v563 = vshrl.u32 %v562, 7
    %v564 = vsub.s32 4, %v563
    %v565 = vrot.slane %v544, %v564
    %v566 = vlaneseq
    %v567 = vshrl.u32 %v566, 7
    %v568 = vsub.s32 5, %v567
    %v569 = vrot.slane %v544, %v568
    %v570 = vlaneseq
    %v571 = vshrl.u32 %v570, 7
    %v572 = vsub.s32 6, %v571
    %v573 = vrot.slane %v544, %v572
    %v574 = vlaneseq
    %v575 = vshrl.u32 %v574, 7
    %v576 = vsub.s32 7, %v575
    %v577 = vrot.slane %v544, %v576
    %v714 = vunpack.c.l.b16 %v416
    %v715 = vunpack.c.h.b16 %v416
    %v716 = vunpack.c.l.b16 %v417
    %v717 = vunpack.c.h.b16 %v417
    %v718 = vunpack.c.l.b16 %v418
    %v719 = vunpack.c.h.b16 %v418
    %v720 = vunpack.c.l.b16 %v419
    %v721 = vunpack.c.h.b16 %v419
    %v722 = vunpack.c.l.b16 %v420
    %v723 = vunpack.c.h.b16 %v420
    %v724 = vunpack.c.l.b16 %v421
    %v725 = vunpack.c.h.b16 %v421
    %v726 = vunpack.c.l.b16 %v422
    %v727 = vunpack.c.h.b16 %v422
    %v728 = vunpack.c.l.b16 %v423
    %v729 = vunpack.c.h.b16 %v423
    %v730 = vunpack.c.l.b16 %v424
    %v731 = vunpack.c.h.b16 %v424
    %v732 = vunpack.c.l.b16 %v425
    %v733 = vunpack.c.h.b16 %v425
    %v734 = vunpack.c.l.b16 %v426
    %v735 = vunpack.c.h.b16 %v426
    %v736 = vunpack.c.l.b16 %v427
    %v737 = vunpack.c.h.b16 %v427
    %v738 = vunpack.c.l.b16 %v428
    %v739 = vunpack.c.h.b16 %v428
    %v740 = vunpack.c.l.b16 %v429
    %v741 = vunpack.c.h.b16 %v429
    %v742 = vunpack.c.l.b16 %v430
    %v743 = vunpack.c.h.b16 %v430
    %v744 = vunpack.c.l.b16 %v431
    %v745 = vunpack.c.h.b16 %v431
    %v746 = vunpack.c.l.b16 %v432
    %v747 = vunpack.c.h.b16 %v432
    %v748 = vunpack.c.l.b16 %v433
    %v749 = vunpack.c.h.b16 %v433
    %v750 = vunpack.c.l.b16 %v434
    %v751 = vunpack.c.h.b16 %v434
    %v752 = vunpack.c.l.b16 %v435
    %v753 = vunpack.c.h.b16 %v435
    %v754 = vunpack.c.l.b16 %v436
    %v755 = vunpack.c.h.b16 %v436
    %v756 = vunpack.c.l.b16 %v437
    %v757 = vunpack.c.h.b16 %v437
    %v758 = vunpack.c.l.b16 %v438
    %v759 = vunpack.c.h.b16 %v438
    %v760 = vunpack.c.l.b16 %v439
    %v761 = vunpack.c.h.b16 %v439
    %v762 = vunpack.c.l.b16 %v440
    %v763 = vunpack.c.h.b16 %v440
    %v764 = vunpack.c.l.b16 %v441
    %v765 = vunpack.c.h.b16 %v441
    %v766 = vunpack.c.l.b16 %v442
    %v767 = vunpack.c.h.b16 %v442
    %v768 = vunpack.c.l.b16 %v443
    %v769 = vunpack.c.h.b16 %v443
    %v770 = vunpack.c.l.b16 %v444
    %v771 = vunpack.c.h.b16 %v444
    %v772 = vunpack.c.l.b16 %v445
    %v773 = vunpack.c.h.b16 %v445
    %v774 = vunpack.c.l.b16 %v446
    %v775 = vunpack.c.h.b16 %v446
    %v776 = vunpack.c.l.b16 %v447
    %v777 = vunpack.c.h.b16 %v447
    %v778 = vunpack.c.l.b16 %v448
    %v779 = vunpack.c.h.b16 %v448
    %v780 = vunpack.c.l.b16 %v449
    %v781 = vunpack.c.h.b16 %v449
    %v782 = vunpack.c.l.b16 %v450
    %v783 = vunpack.c.h.b16 %v450
    %v784 = vunpack.c.l.b16 %v451
    %v785 = vunpack.c.h.b16 %v451
    %v786 = vunpack.c.l.b16 %v452
    %v787 = vunpack.c.h.b16 %v452
    %v788 = vunpack.c.l.b16 %v453
    %v789 = vunpack.c.h.b16 %v453
    %v790 = vunpack.c.l.b16 %v454
    %v791 = vunpack.c.h.b16 %v454
    %v792 = vunpack.c.l.b16 %v455
    %v793 = vunpack.c.h.b16 %v455
    %v794 = vunpack.c.l.b16 %v456
    %v795 = vunpack.c.h.b16 %v456
    %v796 = vunpack.c.l.b16 %v457
    %v797 = vunpack.c.h.b16 %v457
    %v798 = vunpack.c.l.b16 %v458
    %v799 = vunpack.c.h.b16 %v458
    %v800 = vunpack.c.l.b16 %v459
    %v801 = vunpack.c.h.b16 %v459
    %v802 = vunpack.c.l.b16 %v460
    %v803 = vunpack.c.h.b16 %v460
    %v804 = vunpack.c.l.b16 %v461
    %v805 = vunpack.c.h.b16 %v461
    %v806 = vunpack.c.l.b16 %v462
    %v807 = vunpack.c.h.b16 %v462
    %v808 = vunpack.c.l.b16 %v463
    %v809 = vunpack.c.h.b16 %v463
    %v810 = vunpack.c.l.b16 %v464
    %v811 = vunpack.c.h.b16 %v464
    %v812 = vunpack.c.l.b16 %v465
    %v813 = vunpack.c.h.b16 %v465
    %v814 = vunpack.c.l.b16 %v466
    %v815 = vunpack.c.h.b16 %v466
    %v816 = vunpack.c.l.b16 %v467
    %v817 = vunpack.c.h.b16 %v467
    %v818 = vunpack.c.l.b16 %v468
    %v819 = vunpack.c.h.b16 %v468
    %v820 = vunpack.c.l.b16 %v469
    %v821 = vunpack.c.h.b16 %v469
    %v822 = vunpack.c.l.b16 %v470
    %v823 = vunpack.c.h.b16 %v470
    %v824 = vunpack.c.l.b16 %v471
    %v825 = vunpack.c.h.b16 %v471
    %v826 = vunpack.c.l.b16 %v472
    %v827 = vunpack.c.h.b16 %v472
    %v828 = vunpack.c.l.b16 %v473
    %v829 = vunpack.c.h.b16 %v473
    %v830 = vunpack.c.l.b16 %v474
    %v831 = vunpack.c.h.b16 %v474
    %v832 = vunpack.c.l.b16 %v475
    %v833 = vunpack.c.h.b16 %v475
    %v834 = vunpack.c.l.b16 %v476
    %v835 = vunpack.c.h.b16 %v476
    %v836 = vunpack.c.l.b16 %v477
    %v837 = vunpack.c.h.b16 %v477
    %v838 = vunpack.c.l.b16 %v478
    %v839 = vunpack.c.h.b16 %v478
    %v840 = vunpack.c.l.b16 %v479
    %v841 = vunpack.c.h.b16 %v479
    %v842 = vunpack.c.l.b16 %v480
    %v843 = vunpack.c.h.b16 %v480
    %v844 = vunpack.c.l.b16 %v481
    %v845 = vunpack.c.h.b16 %v481
    %v846 = vunpack.c.l.b16 %v482
    %v847 = vunpack.c.h.b16 %v482
    %v848 = vunpack.c.l.b16 %v483
    %v849 = vunpack.c.h.b16 %v483
    %v850 = vunpack.c.l.b16 %v484
    %v851 = vunpack.c.h.b16 %v484
    %v852 = vunpack.c.l.b16 %v485
    %v853 = vunpack.c.h.b16 %v485
    %v854 = vunpack.c.l.b16 %v486
    %v855 = vunpack.c.h.b16 %v486
    %v856 = vunpack.c.l.b16 %v487
    %v857 = vunpack.c.h.b16 %v487
    %v858 = vunpack.c.l.b16 %v488
    %v859 = vunpack.c.h.b16 %v488
    %v860 = vunpack.c.l.b16 %v489
    %v861 = vunpack.c.h.b16 %v489
    %v862 = vunpack.c.l.b16 %v490
    %v863 = vunpack.c.h.b16 %v490
    %v864 = vunpack.c.l.b16 %v491
    %v865 = vunpack.c.h.b16 %v491
    %v866 = vunpack.c.l.b16 %v492
    %v867 = vunpack.c.h.b16 %v492
    %v868 = vunpack.c.l.b16 %v493
    %v869 = vunpack.c.h.b16 %v493
    %v870 = vunpack.c.l.b16 %v494
    %v871 = vunpack.c.h.b16 %v494
    %v872 = vunpack.c.l.b16 %v495
    %v873 = vunpack.c.h.b16 %v495
    %v874 = vunpack.c.l.b16 %v496
    %v875 = vunpack.c.h.b16 %v496
    %v876 = vunpack.c.l.b16 %v497
    %v877 = vunpack.c.h.b16 %v497
    %v878 = vunpack.c.l.b16 %v498
    %v879 = vunpack.c.h.b16 %v498
    %v880 = vunpack.c.l.b16 %v499
    %v881 = vunpack.c.h.b16 %v499
    %v882 = vunpack.c.l.b16 %v500
    %v883 = vunpack.c.h.b16 %v500
    %v884 = vunpack.c.l.b16 %v501
    %v885 = vunpack.c.h.b16 %v501
    %v886 = vunpack.c.l.b16 %v502
    %v887 = vunpack.c.h.b16 %v502
    %v888 = vunpack.c.l.b16 %v503
    %v889 = vunpack.c.h.b16 %v503
    %v890 = vunpack.c.l.b16 %v504
    %v891 = vunpack.c.h.b16 %v504
    %v892 = vunpack.c.l.b16 %v505
    %v893 = vunpack.c.h.b16 %v505
    %v894 = vunpack.c.l.b16 %v506
    %v895 = vunpack.c.h.b16 %v506
    %v896 = vunpack.c.l.b16 %v507
    %v897 = vunpack.c.h.b16 %v507
    %v898 = vunpack.c.l.b16 %v508
    %v899 = vunpack.c.h.b16 %v508
    %v900 = vunpack.c.l.b16 %v509
    %v901 = vunpack.c.h.b16 %v509
    %v902 = vunpack.c.l.b16 %v510
    %v903 = vunpack.c.h.b16 %v510
    %v904 = vunpack.c.l.b16 %v511
    %v905 = vunpack.c.h.b16 %v511
    %v906 = vunpack.c.l.b16 %v512
    %v907 = vunpack.c.h.b16 %v512
    %v908 = vunpack.c.l.b16 %v513
    %v909 = vunpack.c.h.b16 %v513
    %v910 = vunpack.c.l.b16 %v514
    %v911 = vunpack.c.h.b16 %v514
    %v912 = vunpack.c.l.b16 %v515
    %v913 = vunpack.c.h.b16 %v515
    %v914 = vunpack.c.l.b16 %v516
    %v915 = vunpack.c.h.b16 %v516
    %v916 = vunpack.c.l.b16 %v517
    %v917 = vunpack.c.h.b16 %v517
    %v918 = vunpack.c.l.b16 %v518
    %v919 = vunpack.c.h.b16 %v518
    %v920 = vunpack.c.l.b16 %v519
    %v921 = vunpack.c.h.b16 %v519
    %v922 = vunpack.c.l.b16 %v520
    %v923 = vunpack.c.h.b16 %v520
    %v924 = vunpack.c.l.b16 %v521
    %v925 = vunpack.c.h.b16 %v521
    %v926 = vunpack.c.l.b16 %v522
    %v927 = vunpack.c.h.b16 %v522
    %v928 = vunpack.c.l.b16 %v523
    %v929 = vunpack.c.h.b16 %v523
    %v930 = vunpack.c.l.b16 %v524
    %v931 = vunpack.c.h.b16 %v524
    %v932 = vunpack.c.l.b16 %v525
    %v933 = vunpack.c.h.b16 %v525
    %v934 = vunpack.c.l.b16 %v526
    %v935 = vunpack.c.h.b16 %v526
    %v936 = vunpack.c.l.b16 %v527
    %v937 = vunpack.c.h.b16 %v527
    %v938 = vunpack.c.l.b16 %v528
    %v939 = vunpack.c.h.b16 %v528
    %v940 = vunpack.c.l.b16 %v529
    %v941 = vunpack.c.h.b16 %v529
    %v942 = vunpack.c.l.b16 %v530
    %v943 = vunpack.c.h.b16 %v530
    %v944 = vunpack.c.l.b16 %v531
    %v945 = vunpack.c.h.b16 %v531
    %v946 = vunpack.c.l.b16 %v532
    %v947 = vunpack.c.h.b16 %v532
    %v948 = vunpack.c.l.b16 %v533
    %v949 = vunpack.c.h.b16 %v533
    %v950 = vunpack.c.l.b16 %v534
    %v951 = vunpack.c.h.b16 %v534
    %v952 = vunpack.c.l.b16 %v535
    %v953 = vunpack.c.h.b16 %v535
    %v954 = vunpack.c.l.b16 %v536
    %v955 = vunpack.c.h.b16 %v536
    %v956 = vunpack.c.l.b16 %v537
    %v957 = vunpack.c.h.b16 %v537
    %v958 = vunpack.c.l.b16 %v538
    %v959 = vunpack.c.h.b16 %v538
    %v960 = vunpack.c.l.b16 %v539
    %v961 = vunpack.c.h.b16 %v539
    %v962 = vunpack.c.l.b16 %v540
    %v963 = vunpack.c.h.b16 %v540
    %v964 = vunpack.c.l.b16 %v541
    %v965 = vunpack.c.h.b16 %v541
    %v966 = vunpack.c.l.b16 %v542
    %v967 = vunpack.c.h.b16 %v542
    %v968 = vunpack.c.l.b16 %v543
    %v969 = vunpack.c.h.b16 %v543
    %v970 = vpack.c.b16 %v722, %v714
    %v971 = vpack.c.b16 %v723, %v715
    %v972 = vpack.c.b16 %v724, %v716
    %v973 = vpack.c.b16 %v725, %v717
    %v974 = vpack.c.b16 %v726, %v718
    %v975 = vpack.c.b16 %v727, %v719
    %v976 = vpack.c.b16 %v728, %v720
    %v977 = vpack.c.b16 %v729, %v721
    %v978 = vpack.c.b16 %v738, %v730
    %v979 = vpack.c.b16 %v739, %v731
    %v980 = vpack.c.b16 %v740, %v732
    %v981 = vpack.c.b16 %v741, %v733
    %v982 = vpack.c.b16 %v742, %v734
    %v983 = vpack.c.b16 %v743, %v735
    %v984 = vpack.c.b16 %v744, %v736
    %v985 = vpack.c.b16 %v745, %v737
    %v986 = vpack.c.b16 %v754, %v746
    %v987 = vpack.c.b16 %v755, %v747
    %v988 = vpack.c.b16 %v756, %v748
    %v989 = vpack.c.b16 %v757, %v749
    %v990 = vpack.c.b16 %v758, %v750
    %v991 = vpack.c.b16 %v759, %v751
    %v992 = vpack.c.b16 %v760, %v752
    %v993 = vpack.c.b16 %v761, %v753
    %v994 = vpack.c.b16 %v770, %v762
    %v995 = vpack.c.b16 %v771, %v763
    %v996 = vpack.c.b16 %v772, %v764
    %v997 = vpack.c.b16 %v773, %v765
    %v998 = vpack.c.b16 %v774, %v766
    %v999 = vpack.c.b16 %v775, %v767
    %v1000 = vpack.c.b16 %v776, %v768
    %v1001 = vpack.c.b16 %v777, %v769
    %v1002 = vpack.c.b16 %v786, %v778
    %v1003 = vpack.c.b16 %v787, %v779
    %v1004 = vpack.c.b16 %v788, %v780
    %v1005 = vpack.c.b16 %v789, %v781
    %v1006 = vpack.c.b16 %v790, %v782
    %v1007 = vpack.c.b16 %v791, %v783
    %v1008 = vpack.c.b16 %v792, %v784
    %v1009 = vpack.c.b16 %v793, %v785
    %v1010 = vpack.c.b16 %v802, %v794
    %v1011 = vpack.c.b16 %v803, %v795
    %v1012 = vpack.c.b16 %v804, %v796
    %v1013 = vpack.c.b16 %v805, %v797
    %v1014 = vpack.c.b16 %v806, %v798
    %v1015 = vpack.c.b16 %v807, %v799
    %v1016 = vpack.c.b16 %v808, %v800
    %v1017 = vpack.c.b16 %v809, %v801
    %v1018 = vpack.c.b16 %v818, %v810
    %v1019 = vpack.c.b16 %v819, %v811
    %v1020 = vpack.c.b16 %v820, %v812
    %v1021 = vpack.c.b16 %v821, %v813
    %v1022 = vpack.c.b16 %v822, %v814
    %v1023 = vpack.c.b16 %v823, %v815
    %v1024 = vpack.c.b16 %v824, %v816
    %v1025 = vpack.c.b16 %v825, %v817
    %v1026 = vpack.c.b16 %v834, %v826
    %v1027 = vpack.c.b16 %v835, %v827
    %v1028 = vpack.c.b16 %v836, %v828
    %v1029 = vpack.c.b16 %v837, %v829
    %v1030 = vpack.c.b16 %v838, %v830
    %v1031 = vpack.c.b16 %v839, %v831
    %v1032 = vpack.c.b16 %v840, %v832
    %v1033 = vpack.c.b16 %v841, %v833
    %v1034 = vpack.c.b16 %v850, %v842
    %v1035 = vpack.c.b16 %v851, %v843
    %v1036 = vpack.c.b16 %v852, %v844
    %v1037 = vpack.c.b16 %v853, %v845
    %v1038 = vpack.c.b16 %v854, %v846
    %v1039 = vpack.c.b16 %v855, %v847
    %v1040 = vpack.c.b16 %v856, %v848
    %v1041 = vpack.c.b16 %v857, %v849
    %v1042 = vpack.c.b16 %v866, %v858
    %v1043 = vpack.c.b16 %v867, %v859
    %v1044 = vpack.c.b16 %v868, %v860
    %v1045 = vpack.c.b16 %v869, %v861
    %v1046 = vpack.c.b16 %v870, %v862
    %v1047 = vpack.c.b16 %v871, %v863
    %v1048 = vpack.c.b16 %v872, %v864
    %v1049 = vpack.c.b16 %v873, %v865
    %v1050 = vpack.c.b16 %v882, %v874
    %v1051 = vpack.c.b16 %v883, %v875
    %v1052 = vpack.c.b16 %v884, %v876
    %v1053 = vpack.c.b16 %v885, %v877
    %v1054 = vpack.c.b16 %v886, %v878
    %v1055 = vpack.c.b16 %v887, %v879
    %v1056 = vpack.c.b16 %v888, %v880
    %v1057 = vpack.c.b16 %v889, %v881
    %v1058 = vpack.c.b16 %v898, %v890
    %v1059 = vpack.c.b16 %v899, %v891
    %v1060 = vpack.c.b16 %v900, %v892
    %v1061 = vpack.c.b16 %v901, %v893
    %v1062 = vpack.c.b16 %v902, %v894
    %v1063 = vpack.c.b16 %v903, %v895
    %v1064 = vpack.c.b16 %v904, %v896
    %v1065 = vpack.c.b16 %v905, %v897
    %v1066 = vpack.c.b16 %v914, %v906
    %v1067 = vpack.c.b16 %v915, %v907
    %v1068 = vpack.c.b16 %v916, %v908
    %v1069 = vpack.c.b16 %v917, %v909
    %v1070 = vpack.c.b16 %v918, %v910
    %v1071 = vpack.c.b16 %v919, %v911
    %v1072 = vpack.c.b16 %v920, %v912
    %v1073 = vpack.c.b16 %v921, %v913
    %v1074 = vpack.c.b16 %v930, %v922
    %v1075 = vpack.c.b16 %v931, %v923
    %v1076 = vpack.c.b16 %v932, %v924
    %v1077 = vpack.c.b16 %v933, %v925
    %v1078 = vpack.c.b16 %v934, %v926
    %v1079 = vpack.c.b16 %v935, %v927
    %v1080 = vpack.c.b16 %v936, %v928
    %v1081 = vpack.c.b16 %v937, %v929
    %v1082 = vpack.c.b16 %v946, %v938
    %v1083 = vpack.c.b16 %v947, %v939
    %v1084 = vpack.c.b16 %v948, %v940
    %v1085 = vpack.c.b16 %v949, %v941
    %v1086 = vpack.c.b16 %v950, %v942
    %v1087 = vpack.c.b16 %v951, %v943
    %v1088 = vpack.c.b16 %v952, %v944
    %v1089 = vpack.c.b16 %v953, %v945
    %v1090 = vpack.c.b16 %v962, %v954
    %v1091 = vpack.c.b16 %v963, %v955
    %v1092 = vpack.c.b16 %v964, %v956
    %v1093 = vpack.c.b16 %v965, %v957
    %v1094 = vpack.c.b16 %v966, %v958
    %v1095 = vpack.c.b16 %v967, %v959
    %v1096 = vpack.c.b16 %v968, %v960
    %v1097 = vpack.c.b16 %v969, %v961
    %1226 = vmatprep.subr.bf16.mxu0 %v971
    %1227 = vmatpush1.bf16.msra.mxu0 %v970
    %1228 = vmatprep.subr.bf16.mxu0 %v979
    %1229 = vmatpush1.bf16.msra.mxu0 %v978
    %1230 = vmatprep.subr.bf16.mxu0 %v987
    %1231 = vmatpush1.bf16.msra.mxu0 %v986
    %1232 = vmatprep.subr.bf16.mxu0 %v995
    %1233 = vmatpush1.bf16.msra.mxu0 %v994
    %1234 = vmatprep.subr.bf16.mxu0 %v1003
    %1235 = vmatpush1.bf16.msra.mxu0 %v1002
    %1236 = vmatprep.subr.bf16.mxu0 %v1011
    %1237 = vmatpush1.bf16.msra.mxu0 %v1010
    %1238 = vmatprep.subr.bf16.mxu0 %v1019
    %1239 = vmatpush1.bf16.msra.mxu0 %v1018
    %1240 = vmatprep.subr.bf16.mxu0 %v1027
    %1241 = vmatpush1.bf16.msra.mxu0 %v1026
    %1242 = vmatprep.subr.bf16.mxu0 %v1035
    %1243 = vmatpush1.bf16.msra.mxu0 %v1034
    %1244 = vmatprep.subr.bf16.mxu0 %v1043
    %1245 = vmatpush1.bf16.msra.mxu0 %v1042
    %1246 = vmatprep.subr.bf16.mxu0 %v1051
    %1247 = vmatpush1.bf16.msra.mxu0 %v1050
    %1248 = vmatprep.subr.bf16.mxu0 %v1059
    %1249 = vmatpush1.bf16.msra.mxu0 %v1058
    %1250 = vmatprep.subr.bf16.mxu0 %v1067
    %1251 = vmatpush1.bf16.msra.mxu0 %v1066
    %1252 = vmatprep.subr.bf16.mxu0 %v1075
    %1253 = vmatpush1.bf16.msra.mxu0 %v1074
    %1254 = vmatprep.subr.bf16.mxu0 %v1083
    %1255 = vmatpush1.bf16.msra.mxu0 %v1082
    %1256 = vmatprep.subr.bf16.mxu0 %v1091
    %1257 = vmatpush1.bf16.msra.mxu0 %v1090
    %1258 = vmatprep.mubr.bf16.mxu0 %v415
    %1259 = vmatmul.mubr.bf16.gmra.mrb[0].mxu0 %v414
    %v1260 = vpop.f32.mrb[0].mxu0
    %v1261 = vadd.f32 %v549, %v1260
    %v1262 = vpop.f32.mrb[0].mxu0
    %v1263 = vadd.f32 %v553, %v1262
    %v1264 = vpop.f32.mrb[0].mxu0
    %v1265 = vpop.f32.mrb[0].mxu0
    %1266 = vdwg.mxu0
    %1267 = vmatprep.subr.bf16.mxu0 %v973
    %1268 = vmatpush1.bf16.msra.mxu0 %v972
    %1269 = vmatprep.subr.bf16.mxu0 %v981
    %1270 = vmatpush1.bf16.msra.mxu0 %v980
    %1271 = vmatprep.subr.bf16.mxu0 %v989
    %1272 = vmatpush1.bf16.msra.mxu0 %v988
    %1273 = vmatprep.subr.bf16.mxu0 %v997
    %1274 = vmatpush1.bf16.msra.mxu0 %v996
    %1275 = vmatprep.subr.bf16.mxu0 %v1005
    %1276 = vmatpush1.bf16.msra.mxu0 %v1004
    %1277 = vmatprep.subr.bf16.mxu0 %v1013
    %1278 = vmatpush1.bf16.msra.mxu0 %v1012
    %1279 = vmatprep.subr.bf16.mxu0 %v1021
    %1280 = vmatpush1.bf16.msra.mxu0 %v1020
    %1281 = vmatprep.subr.bf16.mxu0 %v1029
    %1282 = vmatpush1.bf16.msra.mxu0 %v1028
    %1283 = vmatprep.subr.bf16.mxu0 %v1037
    %1284 = vmatpush1.bf16.msra.mxu0 %v1036
    %1285 = vmatprep.subr.bf16.mxu0 %v1045
    %1286 = vmatpush1.bf16.msra.mxu0 %v1044
    %1287 = vmatprep.subr.bf16.mxu0 %v1053
    %1288 = vmatpush1.bf16.msra.mxu0 %v1052
    %1289 = vmatprep.subr.bf16.mxu0 %v1061
    %1290 = vmatpush1.bf16.msra.mxu0 %v1060
    %1291 = vmatprep.subr.bf16.mxu0 %v1069
    %1292 = vmatpush1.bf16.msra.mxu0 %v1068
    %1293 = vmatprep.subr.bf16.mxu0 %v1077
    %1294 = vmatpush1.bf16.msra.mxu0 %v1076
    %1295 = vmatprep.subr.bf16.mxu0 %v1085
    %1296 = vmatpush1.bf16.msra.mxu0 %v1084
    %1297 = vmatprep.subr.bf16.mxu0 %v1093
    %1298 = vmatpush1.bf16.msra.mxu0 %v1092
    %1299 = vmatprep.mubr.bf16.mxu0 %v415
    %1300 = vmatmul.mubr.bf16.gmra.mrb[0].mxu0 %v414
    %v1301 = vpop.f32.mrb[0].mxu0
    %v1302 = vadd.f32 %v557, %v1301
    %v1303 = vpop.f32.mrb[0].mxu0
    %v1304 = vadd.f32 %v561, %v1303
    %v1305 = vpop.f32.mrb[0].mxu0
    %v1306 = vpop.f32.mrb[0].mxu0
    %1307 = vdwg.mxu0
    %1308 = vmatprep.subr.bf16.mxu0 %v975
    %1309 = vmatpush1.bf16.msra.mxu0 %v974
    %1310 = vmatprep.subr.bf16.mxu0 %v983
    %1311 = vmatpush1.bf16.msra.mxu0 %v982
    %1312 = vmatprep.subr.bf16.mxu0 %v991
    %1313 = vmatpush1.bf16.msra.mxu0 %v990
    %1314 = vmatprep.subr.bf16.mxu0 %v999
    %1315 = vmatpush1.bf16.msra.mxu0 %v998
    %1316 = vmatprep.subr.bf16.mxu0 %v1007
    %1317 = vmatpush1.bf16.msra.mxu0 %v1006
    %1318 = vmatprep.subr.bf16.mxu0 %v1015
    %1319 = vmatpush1.bf16.msra.mxu0 %v1014
    %1320 = vmatprep.subr.bf16.mxu0 %v1023
    %1321 = vmatpush1.bf16.msra.mxu0 %v1022
    %1322 = vmatprep.subr.bf16.mxu0 %v1031
    %1323 = vmatpush1.bf16.msra.mxu0 %v1030
    %1324 = vmatprep.subr.bf16.mxu0 %v1039
    %1325 = vmatpush1.bf16.msra.mxu0 %v1038
    %1326 = vmatprep.subr.bf16.mxu0 %v1047
    %1327 = vmatpush1.bf16.msra.mxu0 %v1046
    %1328 = vmatprep.subr.bf16.mxu0 %v1055
    %1329 = vmatpush1.bf16.msra.mxu0 %v1054
    %1330 = vmatprep.subr.bf16.mxu0 %v1063
    %1331 = vmatpush1.bf16.msra.mxu0 %v1062
    %1332 = vmatprep.subr.bf16.mxu0 %v1071
    %1333 = vmatpush1.bf16.msra.mxu0 %v1070
    %1334 = vmatprep.subr.bf16.mxu0 %v1079
    %1335 = vmatpush1.bf16.msra.mxu0 %v1078
    %1336 = vmatprep.subr.bf16.mxu0 %v1087
    %1337 = vmatpush1.bf16.msra.mxu0 %v1086
    %1338 = vmatprep.subr.bf16.mxu0 %v1095
    %1339 = vmatpush1.bf16.msra.mxu0 %v1094
    %1340 = vmatprep.mubr.bf16.mxu0 %v415
    %1341 = vmatmul.mubr.bf16.gmra.mrb[0].mxu0 %v414
    %v1342 = vpop.f32.mrb[0].mxu0
    %v1343 = vadd.f32 %v565, %v1342
    %v1344 = vpop.f32.mrb[0].mxu0
    %v1345 = vadd.f32 %v569, %v1344
    %v1346 = vpop.f32.mrb[0].mxu0
    %v1347 = vpop.f32.mrb[0].mxu0
    %1348 = vdwg.mxu0
    %1349 = vmatprep.subr.bf16.mxu0 %v977
    %1350 = vmatpush1.bf16.msra.mxu0 %v976
    %1351 = vmatprep.subr.bf16.mxu0 %v985
    %1352 = vmatpush1.bf16.msra.mxu0 %v984
    %1353 = vmatprep.subr.bf16.mxu0 %v993
    %1354 = vmatpush1.bf16.msra.mxu0 %v992
    %1355 = vmatprep.subr.bf16.mxu0 %v1001
    %1356 = vmatpush1.bf16.msra.mxu0 %v1000
    %1357 = vmatprep.subr.bf16.mxu0 %v1009
    %1358 = vmatpush1.bf16.msra.mxu0 %v1008
    %1359 = vmatprep.subr.bf16.mxu0 %v1017
    %1360 = vmatpush1.bf16.msra.mxu0 %v1016
    %1361 = vmatprep.subr.bf16.mxu0 %v1025
    %1362 = vmatpush1.bf16.msra.mxu0 %v1024
    %1363 = vmatprep.subr.bf16.mxu0 %v1033
    %1364 = vmatpush1.bf16.msra.mxu0 %v1032
    %1365 = vmatprep.subr.bf16.mxu0 %v1041
    %1366 = vmatpush1.bf16.msra.mxu0 %v1040
    %1367 = vmatprep.subr.bf16.mxu0 %v1049
    %1368 = vmatpush1.bf16.msra.mxu0 %v1048
    %1369 = vmatprep.subr.bf16.mxu0 %v1057
    %1370 = vmatpush1.bf16.msra.mxu0 %v1056
    %1371 = vmatprep.subr.bf16.mxu0 %v1065
    %1372 = vmatpush1.bf16.msra.mxu0 %v1064
    %1373 = vmatprep.subr.bf16.mxu0 %v1073
    %1374 = vmatpush1.bf16.msra.mxu0 %v1072
    %1375 = vmatprep.subr.bf16.mxu0 %v1081
    %1376 = vmatpush1.bf16.msra.mxu0 %v1080
    %1377 = vmatprep.subr.bf16.mxu0 %v1089
    %1378 = vmatpush1.bf16.msra.mxu0 %v1088
    %1379 = vmatprep.subr.bf16.mxu0 %v1097
    %1380 = vmatpush1.bf16.msra.mxu0 %v1096
    %1381 = vmatprep.mubr.bf16.mxu0 %v415
    %1382 = vmatmul.mubr.bf16.gmra.mrb[0].mxu0 %v414
    %v1383 = vpop.f32.mrb[0].mxu0
    %v1384 = vadd.f32 %v573, %v1383
    %v1385 = vpop.f32.mrb[0].mxu0
    %v1386 = vadd.f32 %v577, %v1385
    %v1387 = vpop.f32.mrb[0].mxu0
    %v1388 = vpop.f32.mrb[0].mxu0
    %1389 = vdwg.mxu0
    %v1390 = vmax.f32 %v1261, 0.0
    %v1391 = vmax.f32 %v1263, 0.0
    %v1392 = vmax.f32 %v1302, 0.0
    %v1393 = vmax.f32 %v1304, 0.0
    %v1394 = vmax.f32 %v1343, 0.0
    %v1395 = vmax.f32 %v1345, 0.0
    %v1396 = vmax.f32 %v1384, 0.0
    %v1397 = vmax.f32 %v1386, 0.0
    %v1398 = vpack.c.bf16 %v1390, %v1390
    %v1399 = vpack.c.bf16 %v1391, %v1391
    %v1400 = vpack.c.bf16 %v1392, %v1392
    %v1401 = vpack.c.bf16 %v1393, %v1393
    %v1402 = vpack.c.bf16 %v1394, %v1394
    %v1403 = vpack.c.bf16 %v1395, %v1395
    %v1404 = vpack.c.bf16 %v1396, %v1396
    %v1405 = vpack.c.bf16 %v1397, %v1397
    %v1406 = vld [vmem:[#allocation11] sm:$0xf]
    %v1407 = vld [vmem:[#allocation11 + $0x4] sm:$0xf]
    %v1408 = vld [vmem:[#allocation11 + $0x8] sm:$0xf]
    %v1409 = vld [vmem:[#allocation11 + $0xc] sm:$0xf]
    %v1410 = vld [vmem:[#allocation11 + $0x10] sm:$0xf]
    %v1411 = vld [vmem:[#allocation11 + $0x14] sm:$0xf]
    %v1412 = vld [vmem:[#allocation11 + $0x18] sm:$0xf]
    %v1413 = vld [vmem:[#allocation11 + $0x1c] sm:$0xf]
    %v1414 = vld [vmem:[#allocation11 + $0x20] sm:$0xf]
    %v1415 = vld [vmem:[#allocation11 + $0x24] sm:$0xf]
    %v1416 = vld [vmem:[#allocation11 + $0x28] sm:$0xf]
    %v1417 = vld [vmem:[#allocation11 + $0x2c] sm:$0xf]
    %v1418 = vld [vmem:[#allocation11 + $0x30] sm:$0xf]
    %v1419 = vld [vmem:[#allocation11 + $0x34] sm:$0xf]
    %v1420 = vld [vmem:[#allocation11 + $0x38] sm:$0xf]
    %v1421 = vld [vmem:[#allocation11 + $0x3c] sm:$0xf]
    %v1422 = vld [vmem:[#allocation11 + $0x40] sm:$0xf]
    %v1423 = vld [vmem:[#allocation11 + $0x44] sm:$0xf]
    %v1424 = vld [vmem:[#allocation11 + $0x48] sm:$0xf]
    %v1425 = vld [vmem:[#allocation11 + $0x4c] sm:$0xf]
    %v1426 = vld [vmem:[#allocation11 + $0x50] sm:$0xf]
    %v1427 = vld [vmem:[#allocation11 + $0x54] sm:$0xf]
    %v1428 = vld [vmem:[#allocation11 + $0x58] sm:$0xf]
    %v1429 = vld [vmem:[#allocation11 + $0x5c] sm:$0xf]
    %v1430 = vld [vmem:[#allocation11 + $0x60] sm:$0xf]
    %v1431 = vld [vmem:[#allocation11 + $0x64] sm:$0xf]
    %v1432 = vld [vmem:[#allocation11 + $0x68] sm:$0xf]
    %v1433 = vld [vmem:[#allocation11 + $0x6c] sm:$0xf]
    %v1434 = vld [vmem:[#allocation11 + $0x70] sm:$0xf]
    %v1435 = vld [vmem:[#allocation11 + $0x74] sm:$0xf]
    %v1436 = vld [vmem:[#allocation11 + $0x78] sm:$0xf]
    %v1437 = vld [vmem:[#allocation11 + $0x7c] sm:$0xf]
    %v1438 = vld [vmem:[#allocation11 + $0x80] sm:$0xf]
    %v1439 = vld [vmem:[#allocation11 + $0x84] sm:$0xf]
    %v1440 = vld [vmem:[#allocation11 + $0x88] sm:$0xf]
    %v1441 = vld [vmem:[#allocation11 + $0x8c] sm:$0xf]
    %v1442 = vld [vmem:[#allocation11 + $0x90] sm:$0xf]
    %v1443 = vld [vmem:[#allocation11 + $0x94] sm:$0xf]
    %v1444 = vld [vmem:[#allocation11 + $0x98] sm:$0xf]
    %v1445 = vld [vmem:[#allocation11 + $0x9c] sm:$0xf]
    %v1446 = vld [vmem:[#allocation11 + $0xa0] sm:$0xf]
    %v1447 = vld [vmem:[#allocation11 + $0xa4] sm:$0xf]
    %v1448 = vld [vmem:[#allocation11 + $0xa8] sm:$0xf]
    %v1449 = vld [vmem:[#allocation11 + $0xac] sm:$0xf]
    %v1450 = vld [vmem:[#allocation11 + $0xb0] sm:$0xf]
    %v1451 = vld [vmem:[#allocation11 + $0xb4] sm:$0xf]
    %v1452 = vld [vmem:[#allocation11 + $0xb8] sm:$0xf]
    %v1453 = vld [vmem:[#allocation11 + $0xbc] sm:$0xf]
    %v1454 = vld [vmem:[#allocation11 + $0xc0] sm:$0xf]
    %v1455 = vld [vmem:[#allocation11 + $0xc4] sm:$0xf]
    %v1456 = vld [vmem:[#allocation11 + $0xc8] sm:$0xf]
    %v1457 = vld [vmem:[#allocation11 + $0xcc] sm:$0xf]
    %v1458 = vld [vmem:[#allocation11 + $0xd0] sm:$0xf]
    %v1459 = vld [vmem:[#allocation11 + $0xd4] sm:$0xf]
    %v1460 = vld [vmem:[#allocation11 + $0xd8] sm:$0xf]
    %v1461 = vld [vmem:[#allocation11 + $0xdc] sm:$0xf]
    %v1462 = vld [vmem:[#allocation11 + $0xe0] sm:$0xf]
    %v1463 = vld [vmem:[#allocation11 + $0xe4] sm:$0xf]
    %v1464 = vld [vmem:[#allocation11 + $0xe8] sm:$0xf]
    %v1465 = vld [vmem:[#allocation11 + $0xec] sm:$0xf]
    %v1466 = vld [vmem:[#allocation11 + $0xf0] sm:$0xf]
    %v1467 = vld [vmem:[#allocation11 + $0xf4] sm:$0xf]
    %v1468 = vld [vmem:[#allocation11 + $0xf8] sm:$0xf]
    %v1469 = vld [vmem:[#allocation11 + $0xfc] sm:$0xf]
    %v1470 = vld [vmem:[#allocation11 + $0x100] sm:$0xf]
    %v1471 = vld [vmem:[#allocation11 + $0x104] sm:$0xf]
    %v1472 = vld [vmem:[#allocation11 + $0x108] sm:$0xf]
    %v1473 = vld [vmem:[#allocation11 + $0x10c] sm:$0xf]
    %v1474 = vld [vmem:[#allocation11 + $0x110] sm:$0xf]
    %v1475 = vld [vmem:[#allocation11 + $0x114] sm:$0xf]
    %v1476 = vld [vmem:[#allocation11 + $0x118] sm:$0xf]
    %v1477 = vld [vmem:[#allocation11 + $0x11c] sm:$0xf]
    %v1478 = vld [vmem:[#allocation11 + $0x120] sm:$0xf]
    %v1479 = vld [vmem:[#allocation11 + $0x124] sm:$0xf]
    %v1480 = vld [vmem:[#allocation11 + $0x128] sm:$0xf]
    %v1481 = vld [vmem:[#allocation11 + $0x12c] sm:$0xf]
    %v1482 = vld [vmem:[#allocation11 + $0x130] sm:$0xf]
    %v1483 = vld [vmem:[#allocation11 + $0x134] sm:$0xf]
    %v1484 = vld [vmem:[#allocation11 + $0x138] sm:$0xf]
    %v1485 = vld [vmem:[#allocation11 + $0x13c] sm:$0xf]
    %v1486 = vld [vmem:[#allocation11 + $0x140] sm:$0xf]
    %v1487 = vld [vmem:[#allocation11 + $0x144] sm:$0xf]
    %v1488 = vld [vmem:[#allocation11 + $0x148] sm:$0xf]
    %v1489 = vld [vmem:[#allocation11 + $0x14c] sm:$0xf]
    %v1490 = vld [vmem:[#allocation11 + $0x150] sm:$0xf]
    %v1491 = vld [vmem:[#allocation11 + $0x154] sm:$0xf]
    %v1492 = vld [vmem:[#allocation11 + $0x158] sm:$0xf]
    %v1493 = vld [vmem:[#allocation11 + $0x15c] sm:$0xf]
    %v1494 = vld [vmem:[#allocation11 + $0x160] sm:$0xf]
    %v1495 = vld [vmem:[#allocation11 + $0x164] sm:$0xf]
    %v1496 = vld [vmem:[#allocation11 + $0x168] sm:$0xf]
    %v1497 = vld [vmem:[#allocation11 + $0x16c] sm:$0xf]
    %v1498 = vld [vmem:[#allocation11 + $0x170] sm:$0xf]
    %v1499 = vld [vmem:[#allocation11 + $0x174] sm:$0xf]
    %v1500 = vld [vmem:[#allocation11 + $0x178] sm:$0xf]
    %v1501 = vld [vmem:[#allocation11 + $0x17c] sm:$0xf]
    %v1502 = vld [vmem:[#allocation11 + $0x180] sm:$0xf]
    %v1503 = vld [vmem:[#allocation11 + $0x184] sm:$0xf]
    %v1504 = vld [vmem:[#allocation11 + $0x188] sm:$0xf]
    %v1505 = vld [vmem:[#allocation11 + $0x18c] sm:$0xf]
    %v1506 = vld [vmem:[#allocation11 + $0x190] sm:$0xf]
    %v1507 = vld [vmem:[#allocation11 + $0x194] sm:$0xf]
    %v1508 = vld [vmem:[#allocation11 + $0x198] sm:$0xf]
    %v1509 = vld [vmem:[#allocation11 + $0x19c] sm:$0xf]
    %v1510 = vld [vmem:[#allocation11 + $0x1a0] sm:$0xf]
    %v1511 = vld [vmem:[#allocation11 + $0x1a4] sm:$0xf]
    %v1512 = vld [vmem:[#allocation11 + $0x1a8] sm:$0xf]
    %v1513 = vld [vmem:[#allocation11 + $0x1ac] sm:$0xf]
    %v1514 = vld [vmem:[#allocation11 + $0x1b0] sm:$0xf]
    %v1515 = vld [vmem:[#allocation11 + $0x1b4] sm:$0xf]
    %v1516 = vld [vmem:[#allocation11 + $0x1b8] sm:$0xf]
    %v1517 = vld [vmem:[#allocation11 + $0x1bc] sm:$0xf]
    %v1518 = vld [vmem:[#allocation11 + $0x1c0] sm:$0xf]
    %v1519 = vld [vmem:[#allocation11 + $0x1c4] sm:$0xf]
    %v1520 = vld [vmem:[#allocation11 + $0x1c8] sm:$0xf]
    %v1521 = vld [vmem:[#allocation11 + $0x1cc] sm:$0xf]
    %v1522 = vld [vmem:[#allocation11 + $0x1d0] sm:$0xf]
    %v1523 = vld [vmem:[#allocation11 + $0x1d4] sm:$0xf]
    %v1524 = vld [vmem:[#allocation11 + $0x1d8] sm:$0xf]
    %v1525 = vld [vmem:[#allocation11 + $0x1dc] sm:$0xf]
    %v1526 = vld [vmem:[#allocation11 + $0x1e0] sm:$0xf]
    %v1527 = vld [vmem:[#allocation11 + $0x1e4] sm:$0xf]
    %v1528 = vld [vmem:[#allocation11 + $0x1e8] sm:$0xf]
    %v1529 = vld [vmem:[#allocation11 + $0x1ec] sm:$0xf]
    %v1530 = vld [vmem:[#allocation11 + $0x1f0] sm:$0xf]
    %v1531 = vld [vmem:[#allocation11 + $0x1f4] sm:$0xf]
    %v1532 = vld [vmem:[#allocation11 + $0x1f8] sm:$0xf]
    %v1533 = vld [vmem:[#allocation11 + $0x1fc] sm:$0xf]
    %v1534 = vld [vmem:[%s6 + $0xc] sm:$0x1]
    %v1536 = vlaneseq
    %v1537 = vshrl.u32 %v1536, 7
    %v1538 = vsub.s32 0, %v1537
    %v1539 = vrot.slane %v1534, %v1538
    %v1669 = vunpack.c.l.b16 %v1406
    %v1670 = vunpack.c.l.b16 %v1407
    %v1671 = vunpack.c.l.b16 %v1408
    %v1672 = vunpack.c.l.b16 %v1409
    %v1673 = vunpack.c.l.b16 %v1410
    %v1674 = vunpack.c.l.b16 %v1411
    %v1675 = vunpack.c.l.b16 %v1412
    %v1676 = vunpack.c.l.b16 %v1413
    %v1677 = vunpack.c.l.b16 %v1414
    %v1678 = vunpack.c.l.b16 %v1415
    %v1679 = vunpack.c.l.b16 %v1416
    %v1680 = vunpack.c.l.b16 %v1417
    %v1681 = vunpack.c.l.b16 %v1418
    %v1682 = vunpack.c.l.b16 %v1419
    %v1683 = vunpack.c.l.b16 %v1420
    %v1684 = vunpack.c.l.b16 %v1421
    %v1685 = vunpack.c.l.b16 %v1422
    %v1686 = vunpack.c.l.b16 %v1423
    %v1687 = vunpack.c.l.b16 %v1424
    %v1688 = vunpack.c.l.b16 %v1425
    %v1689 = vunpack.c.l.b16 %v1426
    %v1690 = vunpack.c.l.b16 %v1427
    %v1691 = vunpack.c.l.b16 %v1428
    %v1692 = vunpack.c.l.b16 %v1429
    %v1693 = vunpack.c.l.b16 %v1430
    %v1694 = vunpack.c.l.b16 %v1431
    %v1695 = vunpack.c.l.b16 %v1432
    %v1696 = vunpack.c.l.b16 %v1433
    %v1697 = vunpack.c.l.b16 %v1434
    %v1698 = vunpack.c.l.b16 %v1435
    %v1699 = vunpack.c.l.b16 %v1436
    %v1700 = vunpack.c.l.b16 %v1437
    %v1701 = vunpack.c.l.b16 %v1438
    %v1702 = vunpack.c.l.b16 %v1439
    %v1703 = vunpack.c.l.b16 %v1440
    %v1704 = vunpack.c.l.b16 %v1441
    %v1705 = vunpack.c.l.b16 %v1442
    %v1706 = vunpack.c.l.b16 %v1443
    %v1707 = vunpack.c.l.b16 %v1444
    %v1708 = vunpack.c.l.b16 %v1445
    %v1709 = vunpack.c.l.b16 %v1446
    %v1710 = vunpack.c.l.b16 %v1447
    %v1711 = vunpack.c.l.b16 %v1448
    %v1712 = vunpack.c.l.b16 %v1449
    %v1713 = vunpack.c.l.b16 %v1450
    %v1714 = vunpack.c.l.b16 %v1451
    %v1715 = vunpack.c.l.b16 %v1452
    %v1716 = vunpack.c.l.b16 %v1453
    %v1717 = vunpack.c.l.b16 %v1454
    %v1718 = vunpack.c.l.b16 %v1455
    %v1719 = vunpack.c.l.b16 %v1456
    %v1720 = vunpack.c.l.b16 %v1457
    %v1721 = vunpack.c.l.b16 %v1458
    %v1722 = vunpack.c.l.b16 %v1459
    %v1723 = vunpack.c.l.b16 %v1460
    %v1724 = vunpack.c.l.b16 %v1461
    %v1725 = vunpack.c.l.b16 %v1462
    %v1726 = vunpack.c.l.b16 %v1463
    %v1727 = vunpack.c.l.b16 %v1464
    %v1728 = vunpack.c.l.b16 %v1465
    %v1729 = vunpack.c.l.b16 %v1466
    %v1730 = vunpack.c.l.b16 %v1467
    %v1731 = vunpack.c.l.b16 %v1468
    %v1732 = vunpack.c.l.b16 %v1469
    %v1733 = vunpack.c.l.b16 %v1470
    %v1734 = vunpack.c.l.b16 %v1471
    %v1735 = vunpack.c.l.b16 %v1472
    %v1736 = vunpack.c.l.b16 %v1473
    %v1737 = vunpack.c.l.b16 %v1474
    %v1738 = vunpack.c.l.b16 %v1475
    %v1739 = vunpack.c.l.b16 %v1476
    %v1740 = vunpack.c.l.b16 %v1477
    %v1741 = vunpack.c.l.b16 %v1478
    %v1742 = vunpack.c.l.b16 %v1479
    %v1743 = vunpack.c.l.b16 %v1480
    %v1744 = vunpack.c.l.b16 %v1481
    %v1745 = vunpack.c.l.b16 %v1482
    %v1746 = vunpack.c.l.b16 %v1483
    %v1747 = vunpack.c.l.b16 %v1484
    %v1748 = vunpack.c.l.b16 %v1485
    %v1749 = vunpack.c.l.b16 %v1486
    %v1750 = vunpack.c.l.b16 %v1487
    %v1751 = vunpack.c.l.b16 %v1488
    %v1752 = vunpack.c.l.b16 %v1489
    %v1753 = vunpack.c.l.b16 %v1490
    %v1754 = vunpack.c.l.b16 %v1491
    %v1755 = vunpack.c.l.b16 %v1492
    %v1756 = vunpack.c.l.b16 %v1493
    %v1757 = vunpack.c.l.b16 %v1494
    %v1758 = vunpack.c.l.b16 %v1495
    %v1759 = vunpack.c.l.b16 %v1496
    %v1760 = vunpack.c.l.b16 %v1497
    %v1761 = vunpack.c.l.b16 %v1498
    %v1762 = vunpack.c.l.b16 %v1499
    %v1763 = vunpack.c.l.b16 %v1500
    %v1764 = vunpack.c.l.b16 %v1501
    %v1765 = vunpack.c.l.b16 %v1502
    %v1766 = vunpack.c.l.b16 %v1503
    %v1767 = vunpack.c.l.b16 %v1504
    %v1768 = vunpack.c.l.b16 %v1505
    %v1769 = vunpack.c.l.b16 %v1506
    %v1770 = vunpack.c.l.b16 %v1507
    %v1771 = vunpack.c.l.b16 %v1508
    %v1772 = vunpack.c.l.b16 %v1509
    %v1773 = vunpack.c.l.b16 %v1510
    %v1774 = vunpack.c.l.b16 %v1511
    %v1775 = vunpack.c.l.b16 %v1512
    %v1776 = vunpack.c.l.b16 %v1513
    %v1777 = vunpack.c.l.b16 %v1514
    %v1778 = vunpack.c.l.b16 %v1515
    %v1779 = vunpack.c.l.b16 %v1516
    %v1780 = vunpack.c.l.b16 %v1517
    %v1781 = vunpack.c.l.b16 %v1518
    %v1782 = vunpack.c.l.b16 %v1519
    %v1783 = vunpack.c.l.b16 %v1520
    %v1784 = vunpack.c.l.b16 %v1521
    %v1785 = vunpack.c.l.b16 %v1522
    %v1786 = vunpack.c.l.b16 %v1523
    %v1787 = vunpack.c.l.b16 %v1524
    %v1788 = vunpack.c.l.b16 %v1525
    %v1789 = vunpack.c.l.b16 %v1526
    %v1790 = vunpack.c.l.b16 %v1527
    %v1791 = vunpack.c.l.b16 %v1528
    %v1792 = vunpack.c.l.b16 %v1529
    %v1793 = vunpack.c.l.b16 %v1530
    %v1794 = vunpack.c.l.b16 %v1531
    %v1795 = vunpack.c.l.b16 %v1532
    %v1796 = vunpack.c.l.b16 %v1533
    %v1797 = vpack.c.b16 %v1670, %v1669
    %v1798 = vpack.c.b16 %v1672, %v1671
    %v1799 = vpack.c.b16 %v1674, %v1673
    %v1800 = vpack.c.b16 %v1676, %v1675
    %v1801 = vpack.c.b16 %v1678, %v1677
    %v1802 = vpack.c.b16 %v1680, %v1679
    %v1803 = vpack.c.b16 %v1682, %v1681
    %v1804 = vpack.c.b16 %v1684, %v1683
    %v1805 = vpack.c.b16 %v1686, %v1685
    %v1806 = vpack.c.b16 %v1688, %v1687
    %v1807 = vpack.c.b16 %v1690, %v1689
    %v1808 = vpack.c.b16 %v1692, %v1691
    %v1809 = vpack.c.b16 %v1694, %v1693
    %v1810 = vpack.c.b16 %v1696, %v1695
    %v1811 = vpack.c.b16 %v1698, %v1697
    %v1812 = vpack.c.b16 %v1700, %v1699
    %v1813 = vpack.c.b16 %v1702, %v1701
    %v1814 = vpack.c.b16 %v1704, %v1703
    %v1815 = vpack.c.b16 %v1706, %v1705
    %v1816 = vpack.c.b16 %v1708, %v1707
    %v1817 = vpack.c.b16 %v1710, %v1709
    %v1818 = vpack.c.b16 %v1712, %v1711
    %v1819 = vpack.c.b16 %v1714, %v1713
    %v1820 = vpack.c.b16 %v1716, %v1715
    %v1821 = vpack.c.b16 %v1718, %v1717
    %v1822 = vpack.c.b16 %v1720, %v1719
    %v1823 = vpack.c.b16 %v1722, %v1721
    %v1824 = vpack.c.b16 %v1724, %v1723
    %v1825 = vpack.c.b16 %v1726, %v1725
    %v1826 = vpack.c.b16 %v1728, %v1727
    %v1827 = vpack.c.b16 %v1730, %v1729
    %v1828 = vpack.c.b16 %v1732, %v1731
    %v1829 = vpack.c.b16 %v1734, %v1733
    %v1830 = vpack.c.b16 %v1736, %v1735
    %v1831 = vpack.c.b16 %v1738, %v1737
    %v1832 = vpack.c.b16 %v1740, %v1739
    %v1833 = vpack.c.b16 %v1742, %v1741
    %v1834 = vpack.c.b16 %v1744, %v1743
    %v1835 = vpack.c.b16 %v1746, %v1745
    %v1836 = vpack.c.b16 %v1748, %v1747
    %v1837 = vpack.c.b16 %v1750, %v1749
    %v1838 = vpack.c.b16 %v1752, %v1751
    %v1839 = vpack.c.b16 %v1754, %v1753
    %v1840 = vpack.c.b16 %v1756, %v1755
    %v1841 = vpack.c.b16 %v1758, %v1757
    %v1842 = vpack.c.b16 %v1760, %v1759
    %v1843 = vpack.c.b16 %v1762, %v1761
    %v1844 = vpack.c.b16 %v1764, %v1763
    %v1845 = vpack.c.b16 %v1766, %v1765
    %v1846 = vpack.c.b16 %v1768, %v1767
    %v1847 = vpack.c.b16 %v1770, %v1769
    %v1848 = vpack.c.b16 %v1772, %v1771
    %v1849 = vpack.c.b16 %v1774, %v1773
    %v1850 = vpack.c.b16 %v1776, %v1775
    %v1851 = vpack.c.b16 %v1778, %v1777
    %v1852 = vpack.c.b16 %v1780, %v1779
    %v1853 = vpack.c.b16 %v1782, %v1781
    %v1854 = vpack.c.b16 %v1784, %v1783
    %v1855 = vpack.c.b16 %v1786, %v1785
    %v1856 = vpack.c.b16 %v1788, %v1787
    %v1857 = vpack.c.b16 %v1790, %v1789
    %v1858 = vpack.c.b16 %v1792, %v1791
    %v1859 = vpack.c.b16 %v1794, %v1793
    %v1860 = vpack.c.b16 %v1796, %v1795
    %1925 = vmatprep.subr.bf16.mxu0 0
    %1926 = vmatpush1.bf16.msra.mxu0 %v1797
    %1927 = vmatprep.subr.bf16.mxu0 0
    %1928 = vmatpush1.bf16.msra.mxu0 %v1798
    %1929 = vmatprep.subr.bf16.mxu0 0
    %1930 = vmatpush1.bf16.msra.mxu0 %v1799
    %1931 = vmatprep.subr.bf16.mxu0 0
    %1932 = vmatpush1.bf16.msra.mxu0 %v1800
    %1933 = vmatprep.subr.bf16.mxu0 0
    %1934 = vmatpush1.bf16.msra.mxu0 %v1801
    %1935 = vmatprep.subr.bf16.mxu0 0
    %1936 = vmatpush1.bf16.msra.mxu0 %v1802
    %1937 = vmatprep.subr.bf16.mxu0 0
    %1938 = vmatpush1.bf16.msra.mxu0 %v1803
    %1939 = vmatprep.subr.bf16.mxu0 0
    %1940 = vmatpush1.bf16.msra.mxu0 %v1804
    %1941 = vmatprep.subr.bf16.mxu0 0
    %1942 = vmatpush1.bf16.msra.mxu0 %v1805
    %1943 = vmatprep.subr.bf16.mxu0 0
    %1944 = vmatpush1.bf16.msra.mxu0 %v1806
    %1945 = vmatprep.subr.bf16.mxu0 0
    %1946 = vmatpush1.bf16.msra.mxu0 %v1807
    %1947 = vmatprep.subr.bf16.mxu0 0
    %1948 = vmatpush1.bf16.msra.mxu0 %v1808
    %1949 = vmatprep.subr.bf16.mxu0 0
    %1950 = vmatpush1.bf16.msra.mxu0 %v1809
    %1951 = vmatprep.subr.bf16.mxu0 0
    %1952 = vmatpush1.bf16.msra.mxu0 %v1810
    %1953 = vmatprep.subr.bf16.mxu0 0
    %1954 = vmatpush1.bf16.msra.mxu0 %v1811
    %1955 = vmatprep.subr.bf16.mxu0 0
    %1956 = vmatpush1.bf16.msra.mxu0 %v1812
    %1957 = vmatprep.mubr.bf16.mxu0 %v1399
    %1958 = vmatmul.mubr.bf16.gmra.mrb[0].mxu0 %v1398
    %v1959 = vpop.f32.mrb[0].mxu0
    %v1960 = vadd.f32 %v1539, %v1959
    %v1961 = vpop.f32.mrb[0].mxu0
    %v1962 = vpop.f32.mrb[0].mxu0
    %v1963 = vpop.f32.mrb[0].mxu0
    %1964 = vdwg.mxu0
    %1965 = vmatprep.subr.bf16.mxu0 0
    %1966 = vmatpush1.bf16.msra.mxu0 %v1813
    %1967 = vmatprep.subr.bf16.mxu0 0
    %1968 = vmatpush1.bf16.msra.mxu0 %v1814
    %1969 = vmatprep.subr.bf16.mxu0 0
    %1970 = vmatpush1.bf16.msra.mxu0 %v1815
    %1971 = vmatprep.subr.bf16.mxu0 0
    %1972 = vmatpush1.bf16.msra.mxu0 %v1816
    %1973 = vmatprep.subr.bf16.mxu0 0
    %1974 = vmatpush1.bf16.msra.mxu0 %v1817
    %1975 = vmatprep.subr.bf16.mxu0 0
    %1976 = vmatpush1.bf16.msra.mxu0 %v1818
    %1977 = vmatprep.subr.bf16.mxu0 0
    %1978 = vmatpush1.bf16.msra.mxu0 %v1819
    %1979 = vmatprep.subr.bf16.mxu0 0
    %1980 = vmatpush1.bf16.msra.mxu0 %v1820
    %1981 = vmatprep.subr.bf16.mxu0 0
    %1982 = vmatpush1.bf16.msra.mxu0 %v1821
    %1983 = vmatprep.subr.bf16.mxu0 0
    %1984 = vmatpush1.bf16.msra.mxu0 %v1822
    %1985 = vmatprep.subr.bf16.mxu0 0
    %1986 = vmatpush1.bf16.msra.mxu0 %v1823
    %1987 = vmatprep.subr.bf16.mxu0 0
    %1988 = vmatpush1.bf16.msra.mxu0 %v1824
    %1989 = vmatprep.subr.bf16.mxu0 0
    %1990 = vmatpush1.bf16.msra.mxu0 %v1825
    %1991 = vmatprep.subr.bf16.mxu0 0
    %1992 = vmatpush1.bf16.msra.mxu0 %v1826
    %1993 = vmatprep.subr.bf16.mxu0 0
    %1994 = vmatpush1.bf16.msra.mxu0 %v1827
    %1995 = vmatprep.subr.bf16.mxu0 0
    %1996 = vmatpush1.bf16.msra.mxu0 %v1828
    %1997 = vmatprep.mubr.bf16.mxu0 %v1401
    %1998 = vmatmul.mubr.bf16.gmra.mrb[0].mxu0 %v1400
    %v1999 = vpop.f32.mrb[0].mxu0
    %v2000 = vadd.f32 %v1960, %v1999
    %v2001 = vpop.f32.mrb[0].mxu0
    %v2002 = vpop.f32.mrb[0].mxu0
    %v2003 = vpop.f32.mrb[0].mxu0
    %2004 = vdwg.mxu0
    %2005 = vmatprep.subr.bf16.mxu0 0
    %2006 = vmatpush1.bf16.msra.mxu0 %v1829
    %2007 = vmatprep.subr.bf16.mxu0 0
    %2008 = vmatpush1.bf16.msra.mxu0 %v1830
    %2009 = vmatprep.subr.bf16.mxu0 0
    %2010 = vmatpush1.bf16.msra.mxu0 %v1831
    %2011 = vmatprep.subr.bf16.mxu0 0
    %2012 = vmatpush1.bf16.msra.mxu0 %v1832
    %2013 = vmatprep.subr.bf16.mxu0 0
    %2014 = vmatpush1.bf16.msra.mxu0 %v1833
    %2015 = vmatprep.subr.bf16.mxu0 0
    %2016 = vmatpush1.bf16.msra.mxu0 %v1834
    %2017 = vmatprep.subr.bf16.mxu0 0
    %2018 = vmatpush1.bf16.msra.mxu0 %v1835
    %2019 = vmatprep.subr.bf16.mxu0 0
    %2020 = vmatpush1.bf16.msra.mxu0 %v1836
    %2021 = vmatprep.subr.bf16.mxu0 0
    %2022 = vmatpush1.bf16.msra.mxu0 %v1837
    %2023 = vmatprep.subr.bf16.mxu0 0
    %2024 = vmatpush1.bf16.msra.mxu0 %v1838
    %2025 = vmatprep.subr.bf16.mxu0 0
    %2026 = vmatpush1.bf16.msra.mxu0 %v1839
    %2027 = vmatprep.subr.bf16.mxu0 0
    %2028 = vmatpush1.bf16.msra.mxu0 %v1840
    %2029 = vmatprep.subr.bf16.mxu0 0
    %2030 = vmatpush1.bf16.msra.mxu0 %v1841
    %2031 = vmatprep.subr.bf16.mxu0 0
    %2032 = vmatpush1.bf16.msra.mxu0 %v1842
    %2033 = vmatprep.subr.bf16.mxu0 0
    %2034 = vmatpush1.bf16.msra.mxu0 %v1843
    %2035 = vmatprep.subr.bf16.mxu0 0
    %2036 = vmatpush1.bf16.msra.mxu0 %v1844
    %2037 = vmatprep.mubr.bf16.mxu0 %v1403
    %2038 = vmatmul.mubr.bf16.gmra.mrb[0].mxu0 %v1402
    %v2039 = vpop.f32.mrb[0].mxu0
    %v2040 = vadd.f32 %v2000, %v2039
    %v2041 = vpop.f32.mrb[0].mxu0
    %v2042 = vpop.f32.mrb[0].mxu0
    %v2043 = vpop.f32.mrb[0].mxu0
    %2044 = vdwg.mxu0
    %2045 = vmatprep.subr.bf16.mxu0 0
    %2046 = vmatpush1.bf16.msra.mxu0 %v1845
    %2047 = vmatprep.subr.bf16.mxu0 0
    %2048 = vmatpush1.bf16.msra.mxu0 %v1846
    %2049 = vmatprep.subr.bf16.mxu0 0
    %2050 = vmatpush1.bf16.msra.mxu0 %v1847
    %2051 = vmatprep.subr.bf16.mxu0 0
    %2052 = vmatpush1.bf16.msra.mxu0 %v1848
    %2053 = vmatprep.subr.bf16.mxu0 0
    %2054 = vmatpush1.bf16.msra.mxu0 %v1849
    %2055 = vmatprep.subr.bf16.mxu0 0
    %2056 = vmatpush1.bf16.msra.mxu0 %v1850
    %2057 = vmatprep.subr.bf16.mxu0 0
    %2058 = vmatpush1.bf16.msra.mxu0 %v1851
    %2059 = vmatprep.subr.bf16.mxu0 0
    %2060 = vmatpush1.bf16.msra.mxu0 %v1852
    %2061 = vmatprep.subr.bf16.mxu0 0
    %2062 = vmatpush1.bf16.msra.mxu0 %v1853
    %2063 = vmatprep.subr.bf16.mxu0 0
    %2064 = vmatpush1.bf16.msra.mxu0 %v1854
    %2065 = vmatprep.subr.bf16.mxu0 0
    %2066 = vmatpush1.bf16.msra.mxu0 %v1855
    %2067 = vmatprep.subr.bf16.mxu0 0
    %2068 = vmatpush1.bf16.msra.mxu0 %v1856
    %2069 = vmatprep.subr.bf16.mxu0 0
    %2070 = vmatpush1.bf16.msra.mxu0 %v1857
    %2071 = vmatprep.subr.bf16.mxu0 0
    %2072 = vmatpush1.bf16.msra.mxu0 %v1858
    %2073 = vmatprep.subr.bf16.mxu0 0
    %2074 = vmatpush1.bf16.msra.mxu0 %v1859
    %2075 = vmatprep.subr.bf16.mxu0 0
    %2076 = vmatpush1.bf16.msra.mxu0 %v1860
    %2077 = vmatprep.mubr.bf16.mxu0 %v1405
    %2078 = vmatmul.mubr.bf16.gmra.mrb[0].mxu0 %v1404
    %v2079 = vpop.f32.mrb[0].mxu0
    %v2080 = vadd.f32 %v2040, %v2079
    %v2081 = vpop.f32.mrb[0].mxu0
    %v2082 = vpop.f32.mrb[0].mxu0
    %v2083 = vpop.f32.mrb[0].mxu0
    %2084 = vdwg.mxu0
    %2085 = vst [vmem:[#allocation13] sm:$0xff] %v2080
    // Predicated region
    $region54: #{tpu_custom_call.1} parent=1 // pred_check
      _
    $region55: #{tpu_custom_call.1} parent=1 // pred_check_branch
      %2087 = sbr.rel (0) target = $region57
    $region56: #{tpu_custom_call.1} parent=1 // pred_region
      %s2089 = ssub.s32 128, 128
      %2090 = vsyncadd [#allocation4], %s2089
      %s2092 = sshll.u32 [#allocation13], 4
      %s2093 = int_to_ptr.vmem [resolvable:$true] %s2092
      %2095 = dma.vmem_to_hbm [thread:$0]  %s2093, 128, %s7, [#allocation4]
    $region57: #{tpu_custom_call.1} parent=1 // pred_fallthru
      _
    // Predicated region
    $region58: #{tpu_custom_call.1} parent=1 // pred_check
      _
    $region59: #{tpu_custom_call.1} parent=1 // pred_check_branch
      %2097 = sbr.rel (0) target = $region61
    $region60: #{tpu_custom_call.1} parent=1 // pred_region
      %2098 = dma.done [#allocation4], 128
    $region61: #{tpu_custom_call.1} parent=1 // pred_fallthru
      _
    %2099 = vsyncpa [#allocation3], 1
    %2100 = vsyncpa [#allocation6], 1
    %2101 = vsyncpa [#allocation9], 1
    %2102 = vsyncpa [#allocation12], 1
    %2103 = vsyncpa [#allocation4], 1

// kernel: tpu_custom_call.1
$region0: #{tpu_custom_call.1}
  #allocation0 [shape = 'u32[]', space=smem, size = 0x4, offset = 0x4, fixed_abs, tag = 'smem constant byte address 0x4 - core index']
  #allocation1 [shape = 'u32[144,128]{1,0:T(1,128)}', space=vmem, size = 0x12000, scoped, tag = 'internal scratch']
  %s0 = inlined_call_operand.hbm [shape: bf16[8,32], index: 0, kind: input, shape index: {}]
  %s1 = inlined_call_operand.hbm [shape: bf16[32,64], index: 1, kind: input, shape index: {}]
  %s2 = inlined_call_operand.hbm [shape: bf16[64,128], index: 2, kind: input, shape index: {}]
  %s3 = inlined_call_operand.hbm [shape: bf16[128,256], index: 3, kind: input, shape index: {}]
  %s4 = inlined_call_operand.hbm [shape: bf16[256,1024], index: 4, kind: input, shape index: {}]
  %s5 = inlined_call_operand.hbm [shape: bf16[1024,128], index: 5, kind: input, shape index: {}]
  %s6 = inlined_call_operand.vmem [shape: f32[1,1664], index: 6, kind: input, shape index: {}]
  %s7 = inlined_call_operand.hbm [shape: f32[8,128], index: 7, kind: output, shape index: {}]
  %s8 = sld [smem:[#allocation0]]
  $region62: #{tpu_custom_call.1} parent=0
    _
  %s10 = ssub.s32 1, %s8
  %s11 = scalar_select 0, %s10, %s8
  $region1: #{tpu_custom_call.1} parent=0
    #allocation2 [shape = 'u8[2048]{0}', space=vmem, size = 0x800, scoped, tag = 'input window, operand 0, single buffered']
    #allocation3 [shape = 's32[1]{0}', space=sflag, size = 0x4, scoped, tag = 'scoped memory for tpu_custom_call.1']
    #allocation4 [shape = 's32[1]{0}', space=sflag, size = 0x4, scoped, tag = 'scoped memory for tpu_custom_call.1']
    #allocation5 [shape = 'u8[8192]{0}', space=vmem, size = 0x2000, scoped, tag = 'input window, operand 1, single buffered']
    #allocation6 [shape = 's32[1]{0}', space=sflag, size = 0x4, scoped, tag = 'scoped memory for tpu_custom_call.1']
    #allocation7 [shape = 'u8[16384]{0}', space=vmem, size = 0x4000, scoped, tag = 'input window, operand 2, single buffered']
    #allocation8 [shape = 'u8[65536]{0}', space=vmem, size = 0x10000, scoped, tag = 'input window, operand 3, single buffered']
    #allocation9 [shape = 's32[1]{0}', space=sflag, size = 0x4, scoped, tag = 'scoped memory for tpu_custom_call.1']
    #allocation10 [shape = 'u8[524288]{0}', space=vmem, size = 0x80000, scoped, tag = 'input window, operand 4, single buffered']
    #allocation11 [shape = 'u8[262144]{0}', space=vmem, size = 0x40000, scoped, tag = 'input window, operand 5, single buffered']
    #allocation12 [shape = 's32[1]{0}', space=sflag, size = 0x4, scoped, tag = 'scoped memory for tpu_custom_call.1']
    #allocation13 [shape = 'u8[4096]{0}', space=vmem, size = 0x1000, scoped, tag = 'output window, operand 0, single buffered']
    %12 = vsyncpa [#allocation3], 0
    %13 = vsyncpa [#allocation6], 0
    %14 = vsyncpa [#allocation9], 0
    %15 = vsyncpa [#allocation12], 0
    %16 = vsyncpa [#allocation4], 0
    // Predicated region
    $region2: #{tpu_custom_call.1} parent=1 // pred_check
      _
    $region3: #{tpu_custom_call.1} parent=1 // pred_check_branch
      %18 = sbr.rel (0) target = $region5
    $region4: #{tpu_custom_call.1} parent=1 // pred_region
      %s20 = ssub.s32 64, 64
      %21 = vsyncadd [#allocation3], %s20
      %s23 = sshll.u32 [#allocation2], 4
      %s24 = int_to_ptr.vmem [resolvable:$true] %s23
      %26 = dma.hbm_to_vmem [thread:$0]  %s0, 64, %s24, [#allocation3]
    $region5: #{tpu_custom_call.1} parent=1 // pred_fallthru
      _
    // Predicated region
    $region6: #{tpu_custom_call.1} parent=1 // pred_check
      _
    $region7: #{tpu_custom_call.1} parent=1 // pred_check_branch
      %28 = sbr.rel (0) target = $region9
    $region8: #{tpu_custom_call.1} parent=1 // pred_region
      %s30 = ssub.s32 256, 256
      %31 = vsyncadd [#allocation6], %s30
      %s32 = sshll.u32 [#allocation5], 4
      %s33 = int_to_ptr.vmem [resolvable:$true] %s32
      %38 = dma.hbm_to_vmem [thread:$0]  %s1, 256, %s33, [#allocation6], 64, 64, 4
    $region9: #{tpu_custom_call.1} parent=1 // pred_fallthru
      _
    // Predicated region
    $region10: #{tpu_custom_call.1} parent=1 // pred_check
      _
    $region11: #{tpu_custom_call.1} parent=1 // pred_check_branch
      %40 = sbr.rel (0) target = $region13
    $region12: #{tpu_custom_call.1} parent=1 // pred_region
      %s42 = ssub.s32 512, 512
      %43 = vsyncadd [#allocation6], %s42
      %s44 = sshll.u32 [#allocation7], 4
      %s45 = int_to_ptr.vmem [resolvable:$true] %s44
      %50 = dma.hbm_to_vmem [thread:$0]  %s2, 512, %s45, [#allocation6], 64, 64, 4
    $region13: #{tpu_custom_call.1} parent=1 // pred_fallthru
      _
    // Predicated region
    $region14: #{tpu_custom_call.1} parent=1 // pred_check
      _
    $region15: #{tpu_custom_call.1} parent=1 // pred_check_branch
      %52 = sbr.rel (0) target = $region17
    $region16: #{tpu_custom_call.1} parent=1 // pred_region
      %s54 = ssub.s32 2048, 2048
      %55 = vsyncadd [#allocation9], %s54
      %s56 = sshll.u32 [#allocation8], 4
      %s57 = int_to_ptr.vmem [resolvable:$true] %s56
      %62 = dma.hbm_to_vmem [thread:$0]  %s3, 2048, %s57, [#allocation9], 128, 128, 8
    $region17: #{tpu_custom_call.1} parent=1 // pred_fallthru
      _
    // Predicated region
    $region18: #{tpu_custom_call.1} parent=1 // pred_check
      _
    $region19: #{tpu_custom_call.1} parent=1 // pred_check_branch
      %64 = sbr.rel (0) target = $region21
    $region20: #{tpu_custom_call.1} parent=1 // pred_region
      %s66 = ssub.s32 16384, 16384
      %67 = vsyncadd [#allocation9], %s66
      %s68 = sshll.u32 [#allocation10], 4
      %s69 = int_to_ptr.vmem [resolvable:$true] %s68
      %74 = dma.hbm_to_vmem [thread:$0]  %s4, 16384, %s69, [#allocation9], 512, 512, 32
    $region21: #{tpu_custom_call.1} parent=1 // pred_fallthru
      _
    // Predicated region
    $region22: #{tpu_custom_call.1} parent=1 // pred_check
      _
    $region23: #{tpu_custom_call.1} parent=1 // pred_check_branch
      %76 = sbr.rel (0) target = $region25
    $region24: #{tpu_custom_call.1} parent=1 // pred_region
      %s78 = ssub.s32 8192, 8192
      %79 = vsyncadd [#allocation12], %s78
      %s80 = sshll.u32 [#allocation11], 4
      %s81 = int_to_ptr.vmem [resolvable:$true] %s80
      %86 = dma.hbm_to_vmem [thread:$0]  %s5, 8192, %s81, [#allocation12], 64, 64, 4
    $region25: #{tpu_custom_call.1} parent=1 // pred_fallthru
      _
    // Predicated region
    $region26: #{tpu_custom_call.1} parent=1 // pred_check
      _
    $region27: #{tpu_custom_call.1} parent=1 // pred_check_branch
      %88 = sbr.rel (0) target = $region29
    $region28: #{tpu_custom_call.1} parent=1 // pred_region
      _
    $region29: #{tpu_custom_call.1} parent=1 // pred_fallthru
      _
    // Predicated region
    $region30: #{tpu_custom_call.1} parent=1 // pred_check
      _
    $region31: #{tpu_custom_call.1} parent=1 // pred_check_branch
      %90 = sbr.rel (0) target = $region33
    $region32: #{tpu_custom_call.1} parent=1 // pred_region
      %91 = dma.done [#allocation3], 64
    $region33: #{tpu_custom_call.1} parent=1 // pred_fallthru
      _
    // Predicated region
    $region34: #{tpu_custom_call.1} parent=1 // pred_check
      _
    $region35: #{tpu_custom_call.1} parent=1 // pred_check_branch
      %93 = sbr.rel (0) target = $region37
    $region36: #{tpu_custom_call.1} parent=1 // pred_region
      %94 = dma.done [#allocation6], 256
    $region37: #{tpu_custom_call.1} parent=1 // pred_fallthru
      _
    // Predicated region
    $region38: #{tpu_custom_call.1} parent=1 // pred_check
      _
    $region39: #{tpu_custom_call.1} parent=1 // pred_check_branch
      %96 = sbr.rel (0) target = $region41
    $region40: #{tpu_custom_call.1} parent=1 // pred_region
      %97 = dma.done [#allocation6], 512
    $region41: #{tpu_custom_call.1} parent=1 // pred_fallthru
      _
    // Predicated region
    $region42: #{tpu_custom_call.1} parent=1 // pred_check
      _
    $region43: #{tpu_custom_call.1} parent=1 // pred_check_branch
      %99 = sbr.rel (0) target = $region45
    $region44: #{tpu_custom_call.1} parent=1 // pred_region
      %100 = dma.done [#allocation9], 2048
    $region45: #{tpu_custom_call.1} parent=1 // pred_fallthru
      _
    // Predicated region
    $region46: #{tpu_custom_call.1} parent=1 // pred_check
      _
    $region47: #{tpu_custom_call.1} parent=1 // pred_check_branch
      %102 = sbr.rel (0) target = $region49
    $region48: #{tpu_custom_call.1} parent=1 // pred_region
      %103 = dma.done [#allocation9], 16384
    $region49: #{tpu_custom_call.1} parent=1 // pred_fallthru
      _
    // Predicated region
    $region50: #{tpu_custom_call.1} parent=1 // pred_check
      _
    $region51: #{tpu_custom_call.1} parent=1 // pred_check_branch
      %105 = sbr.rel (0) target = $region53
    $region52: #{tpu_custom_call.1} parent=1 // pred_region
      %106 = dma.done [#allocation12], 8192
    $region53: #{tpu_custom_call.1} parent=1 // pred_fallthru
      _
    %v108 = vld [vmem:[#allocation2] sm:$0xf]
    %v109 = vld [vmem:[#allocation5] sm:$0xf]
    %v110 = vld [vmem:[#allocation5 + $0x4] sm:$0xf]
    %v111 = vld [vmem:[#allocation5 + $0x8] sm:$0xf]
    %v112 = vld [vmem:[#allocation5 + $0xc] sm:$0xf]
    %v113 = vld [vmem:[%s6] sm:$0x1]
    %v115 = vlaneseq
    %v116 = vshrl.u32 %v115, 7
    %v117 = vsub.s32 0, %v116
    %v118 = vrot.slane %v113, %v117
    %v124 = vunpack.c.l.b16 %v109
    %v125 = vunpack.c.l.b16 %v110
    %v126 = vunpack.c.l.b16 %v111
    %v127 = vunpack.c.l.b16 %v112
    %v128 = vpack.c.b16 %v125, %v124
    %v129 = vpack.c.b16 %v127, %v126
    %vm132 = vcmask 261120
    %v134 = vsel %vm132, %v108, 0
    %136 = vmatprep.subr.bf16.mxu0 0
    %137 = vmatpush1.bf16.msra.mxu0 %v128
    %138 = vmatprep.subr.bf16.mxu0 0
    %139 = vmatpush1.bf16.msra.mxu0 %v129
    %140 = vmatprep.subr.bf16.mxu0 0
    %141 = vmatpush1.bf16.msra.mxu0 0
    %142 = vmatprep.subr.bf16.mxu0 0
    %143 = vmatpush1.bf16.msra.mxu0 0
    %144 = vmatprep.subr.bf16.mxu0 0
    %145 = vmatpush1.bf16.msra.mxu0 0
    %146 = vmatprep.subr.bf16.mxu0 0
    %147 = vmatpush1.bf16.msra.mxu0 0
    %148 = vmatprep.subr.bf16.mxu0 0
    %149 = vmatpush1.bf16.msra.mxu0 0
    %150 = vmatprep.subr.bf16.mxu0 0
    %151 = vmatpush1.bf16.msra.mxu0 0
    %152 = vmatprep.subr.bf16.mxu0 0
    %153 = vmatpush1.bf16.msra.mxu0 0
    %154 = vmatprep.subr.bf16.mxu0 0
    %155 = vmatpush1.bf16.msra.mxu0 0
    %156 = vmatprep.subr.bf16.mxu0 0
    %157 = vmatpush1.bf16.msra.mxu0 0
    %158 = vmatprep.subr.bf16.mxu0 0
    %159 = vmatpush1.bf16.msra.mxu0 0
    %160 = vmatprep.subr.bf16.mxu0 0
    %161 = vmatpush1.bf16.msra.mxu0 0
    %162 = vmatprep.subr.bf16.mxu0 0
    %163 = vmatpush1.bf16.msra.mxu0 0
    %164 = vmatprep.subr.bf16.mxu0 0
    %165 = vmatpush1.bf16.msra.mxu0 0
    %166 = vmatprep.subr.bf16.mxu0 0
    %167 = vmatpush1.bf16.msra.mxu0 0
    %168 = vmatprep.mubr.bf16.mxu0 0
    %169 = vmatmul.mubr.bf16.gmra.mrb[0].mxu0 %v134
    %v170 = vpop.f32.mrb[0].mxu0
    %v171 = vadd.f32 %v118, %v170
    %v172 = vpop.f32.mrb[0].mxu0
    %v173 = vpop.f32.mrb[0].mxu0
    %v174 = vpop.f32.mrb[0].mxu0
    %175 = vdwg.mxu0
    %v176 = vmax.f32 %v171, 0.0
    %v177 = vpack.c.bf16 %v176, %v176
    %v178 = vld [vmem:[#allocation7] sm:$0xf]
    %v179 = vld [vmem:[#allocation7 + $0x4] sm:$0xf]
    %v180 = vld [vmem:[#allocation7 + $0x8] sm:$0xf]
    %v181 = vld [vmem:[#allocation7 + $0xc] sm:$0xf]
    %v182 = vld [vmem:[#allocation7 + $0x10] sm:$0xf]
    %v183 = vld [vmem:[#allocation7 + $0x14] sm:$0xf]
    %v184 = vld [vmem:[#allocation7 + $0x18] sm:$0xf]
    %v185 = vld [vmem:[#allocation7 + $0x1c] sm:$0xf]
    %v186 = vld [vmem:[%s6 + $0x1] sm:$0x1]
    %v188 = vlaneseq
    %v189 = vshrl.u32 %v188, 7
    %v190 = vsub.s32 0, %v189
    %v191 = vrot.slane %v186, %v190
    %v201 = vunpack.c.l.b16 %v178
    %v202 = vunpack.c.l.b16 %v179
    %v203 = vunpack.c.l.b16 %v180
    %v204 = vunpack.c.l.b16 %v181
    %v205 = vunpack.c.l.b16 %v182
    %v206 = vunpack.c.l.b16 %v183
    %v207 = vunpack.c.l.b16 %v184
    %v208 = vunpack.c.l.b16 %v185
    %v209 = vpack.c.b16 %v202, %v201
    %v210 = vpack.c.b16 %v204, %v203
    %v211 = vpack.c.b16 %v206, %v205
    %v212 = vpack.c.b16 %v208, %v207
    %vm217 = vcmask 523264
    %v219 = vsel %vm217, %v177, 0
    %221 = vmatprep.subr.bf16.mxu0 0
    %222 = vmatpush1.bf16.msra.mxu0 %v209
    %223 = vmatprep.subr.bf16.mxu0 0
    %224 = vmatpush1.bf16.msra.mxu0 %v210
    %225 = vmatprep.subr.bf16.mxu0 0
    %226 = vmatpush1.bf16.msra.mxu0 %v211
    %227 = vmatprep.subr.bf16.mxu0 0
    %228 = vmatpush1.bf16.msra.mxu0 %v212
    %229 = vmatprep.subr.bf16.mxu0 0
    %230 = vmatpush1.bf16.msra.mxu0 0
    %231 = vmatprep.subr.bf16.mxu0 0
    %232 = vmatpush1.bf16.msra.mxu0 0
    %233 = vmatprep.subr.bf16.mxu0 0
    %234 = vmatpush1.bf16.msra.mxu0 0
    %235 = vmatprep.subr.bf16.mxu0 0
    %236 = vmatpush1.bf16.msra.mxu0 0
    %237 = vmatprep.subr.bf16.mxu0 0
    %238 = vmatpush1.bf16.msra.mxu0 0
    %239 = vmatprep.subr.bf16.mxu0 0
    %240 = vmatpush1.bf16.msra.mxu0 0
    %241 = vmatprep.subr.bf16.mxu0 0
    %242 = vmatpush1.bf16.msra.mxu0 0
    %243 = vmatprep.subr.bf16.mxu0 0
    %244 = vmatpush1.bf16.msra.mxu0 0
    %245 = vmatprep.subr.bf16.mxu0 0
    %246 = vmatpush1.bf16.msra.mxu0 0
    %247 = vmatprep.subr.bf16.mxu0 0
    %248 = vmatpush1.bf16.msra.mxu0 0
    %249 = vmatprep.subr.bf16.mxu0 0
    %250 = vmatpush1.bf16.msra.mxu0 0
    %251 = vmatprep.subr.bf16.mxu0 0
    %252 = vmatpush1.bf16.msra.mxu0 0
    %253 = vmatprep.mubr.bf16.mxu0 0
    %254 = vmatmul.mubr.bf16.gmra.mrb[0].mxu0 %v219
    %v255 = vpop.f32.mrb[0].mxu0
    %v256 = vadd.f32 %v191, %v255
    %v257 = vpop.f32.mrb[0].mxu0
    %v258 = vpop.f32.mrb[0].mxu0
    %v259 = vpop.f32.mrb[0].mxu0
    %260 = vdwg.mxu0
    %v261 = vmax.f32 %v256, 0.0
    %v262 = vpack.c.bf16 %v261, %v261
    %v263 = vld [vmem:[#allocation8] sm:$0xff]
    %v264 = vld [vmem:[#allocation8 + $0x8] sm:$0xff]
    %v265 = vld [vmem:[#allocation8 + $0x10] sm:$0xff]
    %v266 = vld [vmem:[#allocation8 + $0x18] sm:$0xff]
    %v267 = vld [vmem:[#allocation8 + $0x20] sm:$0xff]
    %v268 = vld [vmem:[#allocation8 + $0x28] sm:$0xff]
    %v269 = vld [vmem:[#allocation8 + $0x30] sm:$0xff]
    %v270 = vld [vmem:[#allocation8 + $0x38] sm:$0xff]
    %v271 = vld [vmem:[#allocation8 + $0x40] sm:$0xff]
    %v272 = vld [vmem:[#allocation8 + $0x48] sm:$0xff]
    %v273 = vld [vmem:[#allocation8 + $0x50] sm:$0xff]
    %v274 = vld [vmem:[#allocation8 + $0x58] sm:$0xff]
    %v275 = vld [vmem:[#allocation8 + $0x60] sm:$0xff]
    %v276 = vld [vmem:[#allocation8 + $0x68] sm:$0xff]
    %v277 = vld [vmem:[#allocation8 + $0x70] sm:$0xff]
    %v278 = vld [vmem:[#allocation8 + $0x78] sm:$0xff]
    %v279 = vld [vmem:[%s6 + $0x2] sm:$0x3]
    %v281 = vlaneseq
    %v282 = vshrl.u32 %v281, 7
    %v283 = vsub.s32 0, %v282
    %v284 = vrot.slane %v279, %v283
    %v285 = vlaneseq
    %v286 = vshrl.u32 %v285, 7
    %v287 = vsub.s32 1, %v286
    %v288 = vrot.slane %v279, %v287
    %v307 = vunpack.c.l.b16 %v263
    %v308 = vunpack.c.h.b16 %v263
    %v309 = vunpack.c.l.b16 %v264
    %v310 = vunpack.c.h.b16 %v264
    %v311 = vunpack.c.l.b16 %v265
    %v312 = vunpack.c.h.b16 %v265
    %v313 = vunpack.c.l.b16 %v266
    %v314 = vunpack.c.h.b16 %v266
    %v315 = vunpack.c.l.b16 %v267
    %v316 = vunpack.c.h.b16 %v267
    %v317 = vunpack.c.l.b16 %v268
    %v318 = vunpack.c.h.b16 %v268
    %v319 = vunpack.c.l.b16 %v269
    %v320 = vunpack.c.h.b16 %v269
    %v321 = vunpack.c.l.b16 %v270
    %v322 = vunpack.c.h.b16 %v270
    %v323 = vunpack.c.l.b16 %v271
    %v324 = vunpack.c.h.b16 %v271
    %v325 = vunpack.c.l.b16 %v272
    %v326 = vunpack.c.h.b16 %v272
    %v327 = vunpack.c.l.b16 %v273
    %v328 = vunpack.c.h.b16 %v273
    %v329 = vunpack.c.l.b16 %v274
    %v330 = vunpack.c.h.b16 %v274
    %v331 = vunpack.c.l.b16 %v275
    %v332 = vunpack.c.h.b16 %v275
    %v333 = vunpack.c.l.b16 %v276
    %v334 = vunpack.c.h.b16 %v276
    %v335 = vunpack.c.l.b16 %v277
    %v336 = vunpack.c.h.b16 %v277
    %v337 = vunpack.c.l.b16 %v278
    %v338 = vunpack.c.h.b16 %v278
    %v339 = vpack.c.b16 %v309, %v307
    %v340 = vpack.c.b16 %v310, %v308
    %v341 = vpack.c.b16 %v313, %v311
    %v342 = vpack.c.b16 %v314, %v312
    %v343 = vpack.c.b16 %v317, %v315
    %v344 = vpack.c.b16 %v318, %v316
    %v345 = vpack.c.b16 %v321, %v319
    %v346 = vpack.c.b16 %v322, %v320
    %v347 = vpack.c.b16 %v325, %v323
    %v348 = vpack.c.b16 %v326, %v324
    %v349 = vpack.c.b16 %v329, %v327
    %v350 = vpack.c.b16 %v330, %v328
    %v351 = vpack.c.b16 %v333, %v331
    %v352 = vpack.c.b16 %v334, %v332
    %v353 = vpack.c.b16 %v337, %v335
    %v354 = vpack.c.b16 %v338, %v336
    %371 = vmatprep.subr.bf16.mxu0 %v340
    %372 = vmatpush1.bf16.msra.mxu0 %v339
    %373 = vmatprep.subr.bf16.mxu0 %v342
    %374 = vmatpush1.bf16.msra.mxu0 %v341
    %375 = vmatprep.subr.bf16.mxu0 %v344
    %376 = vmatpush1.bf16.msra.mxu0 %v343
    %377 = vmatprep.subr.bf16.mxu0 %v346
    %378 = vmatpush1.bf16.msra.mxu0 %v345
    %379 = vmatprep.subr.bf16.mxu0 %v348
    %380 = vmatpush1.bf16.msra.mxu0 %v347
    %381 = vmatprep.subr.bf16.mxu0 %v350
    %382 = vmatpush1.bf16.msra.mxu0 %v349
    %383 = vmatprep.subr.bf16.mxu0 %v352
    %384 = vmatpush1.bf16.msra.mxu0 %v351
    %385 = vmatprep.subr.bf16.mxu0 %v354
    %386 = vmatpush1.bf16.msra.mxu0 %v353
    %387 = vmatprep.subr.bf16.mxu0 0
    %388 = vmatpush1.bf16.msra.mxu0 0
    %389 = vmatprep.subr.bf16.mxu0 0
    %390 = vmatpush1.bf16.msra.mxu0 0
    %391 = vmatprep.subr.bf16.mxu0 0
    %392 = vmatpush1.bf16.msra.mxu0 0
    %393 = vmatprep.subr.bf16.mxu0 0
    %394 = vmatpush1.bf16.msra.mxu0 0
    %395 = vmatprep.subr.bf16.mxu0 0
    %396 = vmatpush1.bf16.msra.mxu0 0
    %397 = vmatprep.subr.bf16.mxu0 0
    %398 = vmatpush1.bf16.msra.mxu0 0
    %399 = vmatprep.subr.bf16.mxu0 0
    %400 = vmatpush1.bf16.msra.mxu0 0
    %401 = vmatprep.subr.bf16.mxu0 0
    %402 = vmatpush1.bf16.msra.mxu0 0
    %403 = vmatprep.mubr.bf16.mxu0 0
    %404 = vmatmul.mubr.bf16.gmra.mrb[0].mxu0 %v262
    %v405 = vpop.f32.mrb[0].mxu0
    %v406 = vadd.f32 %v284, %v405
    %v407 = vpop.f32.mrb[0].mxu0
    %v408 = vadd.f32 %v288, %v407
    %v409 = vpop.f32.mrb[0].mxu0
    %v410 = vpop.f32.mrb[0].mxu0
    %411 = vdwg.mxu0
    %v412 = vmax.f32 %v406, 0.0
    %v413 = vmax.f32 %v408, 0.0
    %v414 = vpack.c.bf16 %v412, %v412
    %v415 = vpack.c.bf16 %v413, %v413
    %v416 = vld [vmem:[#allocation10] sm:$0xff]
    %v417 = vld [vmem:[#allocation10 + $0x8] sm:$0xff]
    %v418 = vld [vmem:[#allocation10 + $0x10] sm:$0xff]
    %v419 = vld [vmem:[#allocation10 + $0x18] sm:$0xff]
    %v420 = vld [vmem:[#allocation10 + $0x20] sm:$0xff]
    %v421 = vld [vmem:[#allocation10 + $0x28] sm:$0xff]
    %v422 = vld [vmem:[#allocation10 + $0x30] sm:$0xff]
    %v423 = vld [vmem:[#allocation10 + $0x38] sm:$0xff]
    %v424 = vld [vmem:[#allocation10 + $0x40] sm:$0xff]
    %v425 = vld [vmem:[#allocation10 + $0x48] sm:$0xff]
    %v426 = vld [vmem:[#allocation10 + $0x50] sm:$0xff]
    %v427 = vld [vmem:[#allocation10 + $0x58] sm:$0xff]
    %v428 = vld [vmem:[#allocation10 + $0x60] sm:$0xff]
    %v429 = vld [vmem:[#allocation10 + $0x68] sm:$0xff]
    %v430 = vld [vmem:[#allocation10 + $0x70] sm:$0xff]
    %v431 = vld [vmem:[#allocation10 + $0x78] sm:$0xff]
    %v432 = vld [vmem:[#allocation10 + $0x80] sm:$0xff]
    %v433 = vld [vmem:[#allocation10 + $0x88] sm:$0xff]
    %v434 = vld [vmem:[#allocation10 + $0x90] sm:$0xff]
    %v435 = vld [vmem:[#allocation10 + $0x98] sm:$0xff]
    %v436 = vld [vmem:[#allocation10 + $0xa0] sm:$0xff]
    %v437 = vld [vmem:[#allocation10 + $0xa8] sm:$0xff]
    %v438 = vld [vmem:[#allocation10 + $0xb0] sm:$0xff]
    %v439 = vld [vmem:[#allocation10 + $0xb8] sm:$0xff]
    %v440 = vld [vmem:[#allocation10 + $0xc0] sm:$0xff]
    %v441 = vld [vmem:[#allocation10 + $0xc8] sm:$0xff]
    %v442 = vld [vmem:[#allocation10 + $0xd0] sm:$0xff]
    %v443 = vld [vmem:[#allocation10 + $0xd8] sm:$0xff]
    %v444 = vld [vmem:[#allocation10 + $0xe0] sm:$0xff]
    %v445 = vld [vmem:[#allocation10 + $0xe8] sm:$0xff]
    %v446 = vld [vmem:[#allocation10 + $0xf0] sm:$0xff]
    %v447 = vld [vmem:[#allocation10 + $0xf8] sm:$0xff]
    %v448 = vld [vmem:[#allocation10 + $0x100] sm:$0xff]
    %v449 = vld [vmem:[#allocation10 + $0x108] sm:$0xff]
    %v450 = vld [vmem:[#allocation10 + $0x110] sm:$0xff]
    %v451 = vld [vmem:[#allocation10 + $0x118] sm:$0xff]
    %v452 = vld [vmem:[#allocation10 + $0x120] sm:$0xff]
    %v453 = vld [vmem:[#allocation10 + $0x128] sm:$0xff]
    %v454 = vld [vmem:[#allocation10 + $0x130] sm:$0xff]
    %v455 = vld [vmem:[#allocation10 + $0x138] sm:$0xff]
    %v456 = vld [vmem:[#allocation10 + $0x140] sm:$0xff]
    %v457 = vld [vmem:[#allocation10 + $0x148] sm:$0xff]
    %v458 = vld [vmem:[#allocation10 + $0x150] sm:$0xff]
    %v459 = vld [vmem:[#allocation10 + $0x158] sm:$0xff]
    %v460 = vld [vmem:[#allocation10 + $0x160] sm:$0xff]
    %v461 = vld [vmem:[#allocation10 + $0x168] sm:$0xff]
    %v462 = vld [vmem:[#allocation10 + $0x170] sm:$0xff]
    %v463 = vld [vmem:[#allocation10 + $0x178] sm:$0xff]
    %v464 = vld [vmem:[#allocation10 + $0x180] sm:$0xff]
    %v465 = vld [vmem:[#allocation10 + $0x188] sm:$0xff]
    %v466 = vld [vmem:[#allocation10 + $0x190] sm:$0xff]
    %v467 = vld [vmem:[#allocation10 + $0x198] sm:$0xff]
    %v468 = vld [vmem:[#allocation10 + $0x1a0] sm:$0xff]
    %v469 = vld [vmem:[#allocation10 + $0x1a8] sm:$0xff]
    %v470 = vld [vmem:[#allocation10 + $0x1b0] sm:$0xff]
    %v471 = vld [vmem:[#allocation10 + $0x1b8] sm:$0xff]
    %v472 = vld [vmem:[#allocation10 + $0x1c0] sm:$0xff]
    %v473 = vld [vmem:[#allocation10 + $0x1c8] sm:$0xff]
    %v474 = vld [vmem:[#allocation10 + $0x1d0] sm:$0xff]
    %v475 = vld [vmem:[#allocation10 + $0x1d8] sm:$0xff]
    %v476 = vld [vmem:[#allocation10 + $0x1e0] sm:$0xff]
    %v477 = vld [vmem:[#allocation10 + $0x1e8] sm:$0xff]
    %v478 = vld [vmem:[#allocation10 + $0x1f0] sm:$0xff]
    %v479 = vld [vmem:[#allocation10 + $0x1f8] sm:$0xff]
    %v480 = vld [vmem:[#allocation10 + $0x200] sm:$0xff]
    %v481 = vld [vmem:[#allocation10 + $0x208] sm:$0xff]
    %v482 = vld [vmem:[#allocation10 + $0x210] sm:$0xff]
    %v483 = vld [vmem:[#allocation10 + $0x218] sm:$0xff]
    %v484 = vld [vmem:[#allocation10 + $0x220] sm:$0xff]
    %v485 = vld [vmem:[#allocation10 + $0x228] sm:$0xff]
    %v486 = vld [vmem:[#allocation10 + $0x230] sm:$0xff]
    %v487 = vld [vmem:[#allocation10 + $0x238] sm:$0xff]
    %v488 = vld [vmem:[#allocation10 + $0x240] sm:$0xff]
    %v489 = vld [vmem:[#allocation10 + $0x248] sm:$0xff]
    %v490 = vld [vmem:[#allocation10 + $0x250] sm:$0xff]
    %v491 = vld [vmem:[#allocation10 + $0x258] sm:$0xff]
    %v492 = vld [vmem:[#allocation10 + $0x260] sm:$0xff]
    %v493 = vld [vmem:[#allocation10 + $0x268] sm:$0xff]
    %v494 = vld [vmem:[#allocation10 + $0x270] sm:$0xff]
    %v495 = vld [vmem:[#allocation10 + $0x278] sm:$0xff]
    %v496 = vld [vmem:[#allocation10 + $0x280] sm:$0xff]
    %v497 = vld [vmem:[#allocation10 + $0x288] sm:$0xff]
    %v498 = vld [vmem:[#allocation10 + $0x290] sm:$0xff]
    %v499 = vld [vmem:[#allocation10 + $0x298] sm:$0xff]
    %v500 = vld [vmem:[#allocation10 + $0x2a0] sm:$0xff]
    %v501 = vld [vmem:[#allocation10 + $0x2a8] sm:$0xff]
    %v502 = vld [vmem:[#allocation10 + $0x2b0] sm:$0xff]
    %v503 = vld [vmem:[#allocation10 + $0x2b8] sm:$0xff]
    %v504 = vld [vmem:[#allocation10 + $0x2c0] sm:$0xff]
    %v505 = vld [vmem:[#allocation10 + $0x2c8] sm:$0xff]
    %v506 = vld [vmem:[#allocation10 + $0x2d0] sm:$0xff]
    %v507 = vld [vmem:[#allocation10 + $0x2d8] sm:$0xff]
    %v508 = vld [vmem:[#allocation10 + $0x2e0] sm:$0xff]
    %v509 = vld [vmem:[#allocation10 + $0x2e8] sm:$0xff]
    %v510 = vld [vmem:[#allocation10 + $0x2f0] sm:$0xff]
    %v511 = vld [vmem:[#allocation10 + $0x2f8] sm:$0xff]
    %v512 = vld [vmem:[#allocation10 + $0x300] sm:$0xff]
    %v513 = vld [vmem:[#allocation10 + $0x308] sm:$0xff]
    %v514 = vld [vmem:[#allocation10 + $0x310] sm:$0xff]
    %v515 = vld [vmem:[#allocation10 + $0x318] sm:$0xff]
    %v516 = vld [vmem:[#allocation10 + $0x320] sm:$0xff]
    %v517 = vld [vmem:[#allocation10 + $0x328] sm:$0xff]
    %v518 = vld [vmem:[#allocation10 + $0x330] sm:$0xff]
    %v519 = vld [vmem:[#allocation10 + $0x338] sm:$0xff]
    %v520 = vld [vmem:[#allocation10 + $0x340] sm:$0xff]
    %v521 = vld [vmem:[#allocation10 + $0x348] sm:$0xff]
    %v522 = vld [vmem:[#allocation10 + $0x350] sm:$0xff]
    %v523 = vld [vmem:[#allocation10 + $0x358] sm:$0xff]
    %v524 = vld [vmem:[#allocation10 + $0x360] sm:$0xff]
    %v525 = vld [vmem:[#allocation10 + $0x368] sm:$0xff]
    %v526 = vld [vmem:[#allocation10 + $0x370] sm:$0xff]
    %v527 = vld [vmem:[#allocation10 + $0x378] sm:$0xff]
    %v528 = vld [vmem:[#allocation10 + $0x380] sm:$0xff]
    %v529 = vld [vmem:[#allocation10 + $0x388] sm:$0xff]
    %v530 = vld [vmem:[#allocation10 + $0x390] sm:$0xff]
    %v531 = vld [vmem:[#allocation10 + $0x398] sm:$0xff]
    %v532 = vld [vmem:[#allocation10 + $0x3a0] sm:$0xff]
    %v533 = vld [vmem:[#allocation10 + $0x3a8] sm:$0xff]
    %v534 = vld [vmem:[#allocation10 + $0x3b0] sm:$0xff]
    %v535 = vld [vmem:[#allocation10 + $0x3b8] sm:$0xff]
    %v536 = vld [vmem:[#allocation10 + $0x3c0] sm:$0xff]
    %v537 = vld [vmem:[#allocation10 + $0x3c8] sm:$0xff]
    %v538 = vld [vmem:[#allocation10 + $0x3d0] sm:$0xff]
    %v539 = vld [vmem:[#allocation10 + $0x3d8] sm:$0xff]
    %v540 = vld [vmem:[#allocation10 + $0x3e0] sm:$0xff]
    %v541 = vld [vmem:[#allocation10 + $0x3e8] sm:$0xff]
    %v542 = vld [vmem:[#allocation10 + $0x3f0] sm:$0xff]
    %v543 = vld [vmem:[#allocation10 + $0x3f8] sm:$0xff]
    %v544 = vld [vmem:[%s6 + $0x4] sm:$0xff]
    %v546 = vlaneseq
    %v547 = vshrl.u32 %v546, 7
    %v548 = vsub.s32 0, %v547
    %v549 = vrot.slane %v544, %v548
    %v550 = vlaneseq
    %v551 = vshrl.u32 %v550, 7
    %v552 = vsub.s32 1, %v551
    %v553 = vrot.slane %v544, %v552
    %v554 = vlaneseq
    %v555 = vshrl.u32 %v554, 7
    %v556 = vsub.s32 2, %v555
    %v557 = vrot.slane %v544, %v556
    %v558 = vlaneseq
    %v559 = vshrl.u32 %v558, 7
    %v560 = vsub.s32 3, %v559
    %v561 = vrot.slane %v544, %v560
    %v562 = vlaneseq
    %v563 = vshrl.u32 %v562, 7
    %v564 = vsub.s32 4, %v563
    %v565 = vrot.slane %v544, %v564
    %v566 = vlaneseq
    %v567 = vshrl.u32 %v566, 7
    %v568 = vsub.s32 5, %v567
    %v569 = vrot.slane %v544, %v568
    %v570 = vlaneseq
    %v571 = vshrl.u32 %v570, 7
    %v572 = vsub.s32 6, %v571
    %v573 = vrot.slane %v544, %v572
    %v574 = vlaneseq
    %v575 = vshrl.u32 %v574, 7
    %v576 = vsub.s32 7, %v575
    %v577 = vrot.slane %v544, %v576
    %v714 = vunpack.c.l.b16 %v416
    %v715 = vunpack.c.h.b16 %v416
    %v716 = vunpack.c.l.b16 %v417
    %v717 = vunpack.c.h.b16 %v417
    %v718 = vunpack.c.l.b16 %v418
    %v719 = vunpack.c.h.b16 %v418
    %v720 = vunpack.c.l.b16 %v419
    %v721 = vunpack.c.h.b16 %v419
    %v722 = vunpack.c.l.b16 %v420
    %v723 = vunpack.c.h.b16 %v420
    %v724 = vunpack.c.l.b16 %v421
    %v725 = vunpack.c.h.b16 %v421
    %v726 = vunpack.c.l.b16 %v422
    %v727 = vunpack.c.h.b16 %v422
    %v728 = vunpack.c.l.b16 %v423
    %v729 = vunpack.c.h.b16 %v423
    %v730 = vunpack.c.l.b16 %v424
    %v731 = vunpack.c.h.b16 %v424
    %v732 = vunpack.c.l.b16 %v425
    %v733 = vunpack.c.h.b16 %v425
    %v734 = vunpack.c.l.b16 %v426
    %v735 = vunpack.c.h.b16 %v426
    %v736 = vunpack.c.l.b16 %v427
    %v737 = vunpack.c.h.b16 %v427
    %v738 = vunpack.c.l.b16 %v428
    %v739 = vunpack.c.h.b16 %v428
    %v740 = vunpack.c.l.b16 %v429
    %v741 = vunpack.c.h.b16 %v429
    %v742 = vunpack.c.l.b16 %v430
    %v743 = vunpack.c.h.b16 %v430
    %v744 = vunpack.c.l.b16 %v431
    %v745 = vunpack.c.h.b16 %v431
    %v746 = vunpack.c.l.b16 %v432
    %v747 = vunpack.c.h.b16 %v432
    %v748 = vunpack.c.l.b16 %v433
    %v749 = vunpack.c.h.b16 %v433
    %v750 = vunpack.c.l.b16 %v434
    %v751 = vunpack.c.h.b16 %v434
    %v752 = vunpack.c.l.b16 %v435
    %v753 = vunpack.c.h.b16 %v435
    %v754 = vunpack.c.l.b16 %v436
    %v755 = vunpack.c.h.b16 %v436
    %v756 = vunpack.c.l.b16 %v437
    %v757 = vunpack.c.h.b16 %v437
    %v758 = vunpack.c.l.b16 %v438
    %v759 = vunpack.c.h.b16 %v438
    %v760 = vunpack.c.l.b16 %v439
    %v761 = vunpack.c.h.b16 %v439
    %v762 = vunpack.c.l.b16 %v440
    %v763 = vunpack.c.h.b16 %v440
    %v764 = vunpack.c.l.b16 %v441
    %v765 = vunpack.c.h.b16 %v441
    %v766 = vunpack.c.l.b16 %v442
    %v767 = vunpack.c.h.b16 %v442
    %v768 = vunpack.c.l.b16 %v443
    %v769 = vunpack.c.h.b16 %v443
    %v770 = vunpack.c.l.b16 %v444
    %v771 = vunpack.c.h.b16 %v444
    %v772 = vunpack.c.l.b16 %v445
    %v773 = vunpack.c.h.b16 %v445
    %v774 = vunpack.c.l.b16 %v446
    %v775 = vunpack.c.h.b16 %v446
    %v776 = vunpack.c.l.b16 %v447
    %v777 = vunpack.c.h.b16 %v447
    %v778 = vunpack.c.l.b16 %v448
    %v779 = vunpack.c.h.b16 %v448
    %v780 = vunpack.c.l.b16 %v449
    %v781 = vunpack.c.h.b16 %v449
    %v782 = vunpack.c.l.b16 %v450
    %v783 = vunpack.c.h.b16 %v450
    %v784 = vunpack.c.l.b16 %v451
    %v785 = vunpack.c.h.b16 %v451
    %v786 = vunpack.c.l.b16 %v452
    %v787 = vunpack.c.h.b16 %v452
    %v788 = vunpack.c.l.b16 %v453
    %v789 = vunpack.c.h.b16 %v453
    %v790 = vunpack.c.l.b16 %v454
    %v791 = vunpack.c.h.b16 %v454
    %v792 = vunpack.c.l.b16 %v455
    %v793 = vunpack.c.h.b16 %v455
    %v794 = vunpack.c.l.b16 %v456
    %v795 = vunpack.c.h.b16 %v456
    %v796 = vunpack.c.l.b16 %v457
    %v797 = vunpack.c.h.b16 %v457
    %v798 = vunpack.c.l.b16 %v458
    %v799 = vunpack.c.h.b16 %v458
    %v800 = vunpack.c.l.b16 %v459
    %v801 = vunpack.c.h.b16 %v459
    %v802 = vunpack.c.l.b16 %v460
    %v803 = vunpack.c.h.b16 %v460
    %v804 = vunpack.c.l.b16 %v461
    %v805 = vunpack.c.h.b16 %v461
    %v806 = vunpack.c.l.b16 %v462
    %v807 = vunpack.c.h.b16 %v462
    %v808 = vunpack.c.l.b16 %v463
    %v809 = vunpack.c.h.b16 %v463
    %v810 = vunpack.c.l.b16 %v464
    %v811 = vunpack.c.h.b16 %v464
    %v812 = vunpack.c.l.b16 %v465
    %v813 = vunpack.c.h.b16 %v465
    %v814 = vunpack.c.l.b16 %v466
    %v815 = vunpack.c.h.b16 %v466
    %v816 = vunpack.c.l.b16 %v467
    %v817 = vunpack.c.h.b16 %v467
    %v818 = vunpack.c.l.b16 %v468
    %v819 = vunpack.c.h.b16 %v468
    %v820 = vunpack.c.l.b16 %v469
    %v821 = vunpack.c.h.b16 %v469
    %v822 = vunpack.c.l.b16 %v470
    %v823 = vunpack.c.h.b16 %v470
    %v824 = vunpack.c.l.b16 %v471
    %v825 = vunpack.c.h.b16 %v471
    %v826 = vunpack.c.l.b16 %v472
    %v827 = vunpack.c.h.b16 %v472
    %v828 = vunpack.c.l.b16 %v473
    %v829 = vunpack.c.h.b16 %v473
    %v830 = vunpack.c.l.b16 %v474
    %v831 = vunpack.c.h.b16 %v474
    %v832 = vunpack.c.l.b16 %v475
    %v833 = vunpack.c.h.b16 %v475
    %v834 = vunpack.c.l.b16 %v476
    %v835 = vunpack.c.h.b16 %v476
    %v836 = vunpack.c.l.b16 %v477
    %v837 = vunpack.c.h.b16 %v477
    %v838 = vunpack.c.l.b16 %v478
    %v839 = vunpack.c.h.b16 %v478
    %v840 = vunpack.c.l.b16 %v479
    %v841 = vunpack.c.h.b16 %v479
    %v842 = vunpack.c.l.b16 %v480
    %v843 = vunpack.c.h.b16 %v480
    %v844 = vunpack.c.l.b16 %v481
    %v845 = vunpack.c.h.b16 %v481
    %v846 = vunpack.c.l.b16 %v482
    %v847 = vunpack.c.h.b16 %v482
    %v848 = vunpack.c.l.b16 %v483
    %v849 = vunpack.c.h.b16 %v483
    %v850 = vunpack.c.l.b16 %v484
    %v851 = vunpack.c.h.b16 %v484
    %v852 = vunpack.c.l.b16 %v485
    %v853 = vunpack.c.h.b16 %v485
    %v854 = vunpack.c.l.b16 %v486
    %v855 = vunpack.c.h.b16 %v486
    %v856 = vunpack.c.l.b16 %v487
    %v857 = vunpack.c.h.b16 %v487
    %v858 = vunpack.c.l.b16 %v488
    %v859 = vunpack.c.h.b16 %v488
    %v860 = vunpack.c.l.b16 %v489
    %v861 = vunpack.c.h.b16 %v489
    %v862 = vunpack.c.l.b16 %v490
    %v863 = vunpack.c.h.b16 %v490
    %v864 = vunpack.c.l.b16 %v491
    %v865 = vunpack.c.h.b16 %v491
    %v866 = vunpack.c.l.b16 %v492
    %v867 = vunpack.c.h.b16 %v492
    %v868 = vunpack.c.l.b16 %v493
    %v869 = vunpack.c.h.b16 %v493
    %v870 = vunpack.c.l.b16 %v494
    %v871 = vunpack.c.h.b16 %v494
    %v872 = vunpack.c.l.b16 %v495
    %v873 = vunpack.c.h.b16 %v495
    %v874 = vunpack.c.l.b16 %v496
    %v875 = vunpack.c.h.b16 %v496
    %v876 = vunpack.c.l.b16 %v497
    %v877 = vunpack.c.h.b16 %v497
    %v878 = vunpack.c.l.b16 %v498
    %v879 = vunpack.c.h.b16 %v498
    %v880 = vunpack.c.l.b16 %v499
    %v881 = vunpack.c.h.b16 %v499
    %v882 = vunpack.c.l.b16 %v500
    %v883 = vunpack.c.h.b16 %v500
    %v884 = vunpack.c.l.b16 %v501
    %v885 = vunpack.c.h.b16 %v501
    %v886 = vunpack.c.l.b16 %v502
    %v887 = vunpack.c.h.b16 %v502
    %v888 = vunpack.c.l.b16 %v503
    %v889 = vunpack.c.h.b16 %v503
    %v890 = vunpack.c.l.b16 %v504
    %v891 = vunpack.c.h.b16 %v504
    %v892 = vunpack.c.l.b16 %v505
    %v893 = vunpack.c.h.b16 %v505
    %v894 = vunpack.c.l.b16 %v506
    %v895 = vunpack.c.h.b16 %v506
    %v896 = vunpack.c.l.b16 %v507
    %v897 = vunpack.c.h.b16 %v507
    %v898 = vunpack.c.l.b16 %v508
    %v899 = vunpack.c.h.b16 %v508
    %v900 = vunpack.c.l.b16 %v509
    %v901 = vunpack.c.h.b16 %v509
    %v902 = vunpack.c.l.b16 %v510
    %v903 = vunpack.c.h.b16 %v510
    %v904 = vunpack.c.l.b16 %v511
    %v905 = vunpack.c.h.b16 %v511
    %v906 = vunpack.c.l.b16 %v512
    %v907 = vunpack.c.h.b16 %v512
    %v908 = vunpack.c.l.b16 %v513
    %v909 = vunpack.c.h.b16 %v513
    %v910 = vunpack.c.l.b16 %v514
    %v911 = vunpack.c.h.b16 %v514
    %v912 = vunpack.c.l.b16 %v515
    %v913 = vunpack.c.h.b16 %v515
    %v914 = vunpack.c.l.b16 %v516
    %v915 = vunpack.c.h.b16 %v516
    %v916 = vunpack.c.l.b16 %v517
    %v917 = vunpack.c.h.b16 %v517
    %v918 = vunpack.c.l.b16 %v518
    %v919 = vunpack.c.h.b16 %v518
    %v920 = vunpack.c.l.b16 %v519
    %v921 = vunpack.c.h.b16 %v519
    %v922 = vunpack.c.l.b16 %v520
    %v923 = vunpack.c.h.b16 %v520
    %v924 = vunpack.c.l.b16 %v521
    %v925 = vunpack.c.h.b16 %v521
    %v926 = vunpack.c.l.b16 %v522
    %v927 = vunpack.c.h.b16 %v522
    %v928 = vunpack.c.l.b16 %v523
    %v929 = vunpack.c.h.b16 %v523
    %v930 = vunpack.c.l.b16 %v524
    %v931 = vunpack.c.h.b16 %v524
    %v932 = vunpack.c.l.b16 %v525
    %v933 = vunpack.c.h.b16 %v525
    %v934 = vunpack.c.l.b16 %v526
    %v935 = vunpack.c.h.b16 %v526
    %v936 = vunpack.c.l.b16 %v527
    %v937 = vunpack.c.h.b16 %v527
    %v938 = vunpack.c.l.b16 %v528
    %v939 = vunpack.c.h.b16 %v528
    %v940 = vunpack.c.l.b16 %v529
    %v941 = vunpack.c.h.b16 %v529
    %v942 = vunpack.c.l.b16 %v530
    %v943 = vunpack.c.h.b16 %v530
    %v944 = vunpack.c.l.b16 %v531
    %v945 = vunpack.c.h.b16 %v531
    %v946 = vunpack.c.l.b16 %v532
    %v947 = vunpack.c.h.b16 %v532
    %v948 = vunpack.c.l.b16 %v533
    %v949 = vunpack.c.h.b16 %v533
    %v950 = vunpack.c.l.b16 %v534
    %v951 = vunpack.c.h.b16 %v534
    %v952 = vunpack.c.l.b16 %v535
    %v953 = vunpack.c.h.b16 %v535
    %v954 = vunpack.c.l.b16 %v536
    %v955 = vunpack.c.h.b16 %v536
    %v956 = vunpack.c.l.b16 %v537
    %v957 = vunpack.c.h.b16 %v537
    %v958 = vunpack.c.l.b16 %v538
    %v959 = vunpack.c.h.b16 %v538
    %v960 = vunpack.c.l.b16 %v539
    %v961 = vunpack.c.h.b16 %v539
    %v962 = vunpack.c.l.b16 %v540
    %v963 = vunpack.c.h.b16 %v540
    %v964 = vunpack.c.l.b16 %v541
    %v965 = vunpack.c.h.b16 %v541
    %v966 = vunpack.c.l.b16 %v542
    %v967 = vunpack.c.h.b16 %v542
    %v968 = vunpack.c.l.b16 %v543
    %v969 = vunpack.c.h.b16 %v543
    %v970 = vpack.c.b16 %v722, %v714
    %v971 = vpack.c.b16 %v723, %v715
    %v972 = vpack.c.b16 %v724, %v716
    %v973 = vpack.c.b16 %v725, %v717
    %v974 = vpack.c.b16 %v726, %v718
    %v975 = vpack.c.b16 %v727, %v719
    %v976 = vpack.c.b16 %v728, %v720
    %v977 = vpack.c.b16 %v729, %v721
    %v978 = vpack.c.b16 %v738, %v730
    %v979 = vpack.c.b16 %v739, %v731
    %v980 = vpack.c.b16 %v740, %v732
    %v981 = vpack.c.b16 %v741, %v733
    %v982 = vpack.c.b16 %v742, %v734
    %v983 = vpack.c.b16 %v743, %v735
    %v984 = vpack.c.b16 %v744, %v736
    %v985 = vpack.c.b16 %v745, %v737
    %v986 = vpack.c.b16 %v754, %v746
    %v987 = vpack.c.b16 %v755, %v747
    %v988 = vpack.c.b16 %v756, %v748
    %v989 = vpack.c.b16 %v757, %v749
    %v990 = vpack.c.b16 %v758, %v750
    %v991 = vpack.c.b16 %v759, %v751
    %v992 = vpack.c.b16 %v760, %v752
    %v993 = vpack.c.b16 %v761, %v753
    %v994 = vpack.c.b16 %v770, %v762
    %v995 = vpack.c.b16 %v771, %v763
    %v996 = vpack.c.b16 %v772, %v764
    %v997 = vpack.c.b16 %v773, %v765
    %v998 = vpack.c.b16 %v774, %v766
    %v999 = vpack.c.b16 %v775, %v767
    %v1000 = vpack.c.b16 %v776, %v768
    %v1001 = vpack.c.b16 %v777, %v769
    %v1002 = vpack.c.b16 %v786, %v778
    %v1003 = vpack.c.b16 %v787, %v779
    %v1004 = vpack.c.b16 %v788, %v780
    %v1005 = vpack.c.b16 %v789, %v781
    %v1006 = vpack.c.b16 %v790, %v782
    %v1007 = vpack.c.b16 %v791, %v783
    %v1008 = vpack.c.b16 %v792, %v784
    %v1009 = vpack.c.b16 %v793, %v785
    %v1010 = vpack.c.b16 %v802, %v794
    %v1011 = vpack.c.b16 %v803, %v795
    %v1012 = vpack.c.b16 %v804, %v796
    %v1013 = vpack.c.b16 %v805, %v797
    %v1014 = vpack.c.b16 %v806, %v798
    %v1015 = vpack.c.b16 %v807, %v799
    %v1016 = vpack.c.b16 %v808, %v800
    %v1017 = vpack.c.b16 %v809, %v801
    %v1018 = vpack.c.b16 %v818, %v810
    %v1019 = vpack.c.b16 %v819, %v811
    %v1020 = vpack.c.b16 %v820, %v812
    %v1021 = vpack.c.b16 %v821, %v813
    %v1022 = vpack.c.b16 %v822, %v814
    %v1023 = vpack.c.b16 %v823, %v815
    %v1024 = vpack.c.b16 %v824, %v816
    %v1025 = vpack.c.b16 %v825, %v817
    %v1026 = vpack.c.b16 %v834, %v826
    %v1027 = vpack.c.b16 %v835, %v827
    %v1028 = vpack.c.b16 %v836, %v828
    %v1029 = vpack.c.b16 %v837, %v829
    %v1030 = vpack.c.b16 %v838, %v830
    %v1031 = vpack.c.b16 %v839, %v831
    %v1032 = vpack.c.b16 %v840, %v832
    %v1033 = vpack.c.b16 %v841, %v833
    %v1034 = vpack.c.b16 %v850, %v842
    %v1035 = vpack.c.b16 %v851, %v843
    %v1036 = vpack.c.b16 %v852, %v844
    %v1037 = vpack.c.b16 %v853, %v845
    %v1038 = vpack.c.b16 %v854, %v846
    %v1039 = vpack.c.b16 %v855, %v847
    %v1040 = vpack.c.b16 %v856, %v848
    %v1041 = vpack.c.b16 %v857, %v849
    %v1042 = vpack.c.b16 %v866, %v858
    %v1043 = vpack.c.b16 %v867, %v859
    %v1044 = vpack.c.b16 %v868, %v860
    %v1045 = vpack.c.b16 %v869, %v861
    %v1046 = vpack.c.b16 %v870, %v862
    %v1047 = vpack.c.b16 %v871, %v863
    %v1048 = vpack.c.b16 %v872, %v864
    %v1049 = vpack.c.b16 %v873, %v865
    %v1050 = vpack.c.b16 %v882, %v874
    %v1051 = vpack.c.b16 %v883, %v875
    %v1052 = vpack.c.b16 %v884, %v876
    %v1053 = vpack.c.b16 %v885, %v877
    %v1054 = vpack.c.b16 %v886, %v878
    %v1055 = vpack.c.b16 %v887, %v879
    %v1056 = vpack.c.b16 %v888, %v880
    %v1057 = vpack.c.b16 %v889, %v881
    %v1058 = vpack.c.b16 %v898, %v890
    %v1059 = vpack.c.b16 %v899, %v891
    %v1060 = vpack.c.b16 %v900, %v892
    %v1061 = vpack.c.b16 %v901, %v893
    %v1062 = vpack.c.b16 %v902, %v894
    %v1063 = vpack.c.b16 %v903, %v895
    %v1064 = vpack.c.b16 %v904, %v896
    %v1065 = vpack.c.b16 %v905, %v897
    %v1066 = vpack.c.b16 %v914, %v906
    %v1067 = vpack.c.b16 %v915, %v907
    %v1068 = vpack.c.b16 %v916, %v908
    %v1069 = vpack.c.b16 %v917, %v909
    %v1070 = vpack.c.b16 %v918, %v910
    %v1071 = vpack.c.b16 %v919, %v911
    %v1072 = vpack.c.b16 %v920, %v912
    %v1073 = vpack.c.b16 %v921, %v913
    %v1074 = vpack.c.b16 %v930, %v922
    %v1075 = vpack.c.b16 %v931, %v923
    %v1076 = vpack.c.b16 %v932, %v924
    %v1077 = vpack.c.b16 %v933, %v925
    %v1078 = vpack.c.b16 %v934, %v926
    %v1079 = vpack.c.b16 %v935, %v927
    %v1080 = vpack.c.b16 %v936, %v928
    %v1081 = vpack.c.b16 %v937, %v929
    %v1082 = vpack.c.b16 %v946, %v938
    %v1083 = vpack.c.b16 %v947, %v939
    %v1084 = vpack.c.b16 %v948, %v940
    %v1085 = vpack.c.b16 %v949, %v941
    %v1086 = vpack.c.b16 %v950, %v942
    %v1087 = vpack.c.b16 %v951, %v943
    %v1088 = vpack.c.b16 %v952, %v944
    %v1089 = vpack.c.b16 %v953, %v945
    %v1090 = vpack.c.b16 %v962, %v954
    %v1091 = vpack.c.b16 %v963, %v955
    %v1092 = vpack.c.b16 %v964, %v956
    %v1093 = vpack.c.b16 %v965, %v957
    %v1094 = vpack.c.b16 %v966, %v958
    %v1095 = vpack.c.b16 %v967, %v959
    %v1096 = vpack.c.b16 %v968, %v960
    %v1097 = vpack.c.b16 %v969, %v961
    %1226 = vmatprep.subr.bf16.mxu0 %v971
    %1227 = vmatpush1.bf16.msra.mxu0 %v970
    %1228 = vmatprep.subr.bf16.mxu0 %v979
    %1229 = vmatpush1.bf16.msra.mxu0 %v978
    %1230 = vmatprep.subr.bf16.mxu0 %v987
    %1231 = vmatpush1.bf16.msra.mxu0 %v986
    %1232 = vmatprep.subr.bf16.mxu0 %v995
    %1233 = vmatpush1.bf16.msra.mxu0 %v994
    %1234 = vmatprep.subr.bf16.mxu0 %v1003
    %1235 = vmatpush1.bf16.msra.mxu0 %v1002
    %1236 = vmatprep.subr.bf16.mxu0 %v1011
    %1237 = vmatpush1.bf16.msra.mxu0 %v1010
    %1238 = vmatprep.subr.bf16.mxu0 %v1019
    %1239 = vmatpush1.bf16.msra.mxu0 %v1018
    %1240 = vmatprep.subr.bf16.mxu0 %v1027
    %1241 = vmatpush1.bf16.msra.mxu0 %v1026
    %1242 = vmatprep.subr.bf16.mxu0 %v1035
    %1243 = vmatpush1.bf16.msra.mxu0 %v1034
    %1244 = vmatprep.subr.bf16.mxu0 %v1043
    %1245 = vmatpush1.bf16.msra.mxu0 %v1042
    %1246 = vmatprep.subr.bf16.mxu0 %v1051
    %1247 = vmatpush1.bf16.msra.mxu0 %v1050
    %1248 = vmatprep.subr.bf16.mxu0 %v1059
    %1249 = vmatpush1.bf16.msra.mxu0 %v1058
    %1250 = vmatprep.subr.bf16.mxu0 %v1067
    %1251 = vmatpush1.bf16.msra.mxu0 %v1066
    %1252 = vmatprep.subr.bf16.mxu0 %v1075
    %1253 = vmatpush1.bf16.msra.mxu0 %v1074
    %1254 = vmatprep.subr.bf16.mxu0 %v1083
    %1255 = vmatpush1.bf16.msra.mxu0 %v1082
    %1256 = vmatprep.subr.bf16.mxu0 %v1091
    %1257 = vmatpush1.bf16.msra.mxu0 %v1090
    %1258 = vmatprep.mubr.bf16.mxu0 %v415
    %1259 = vmatmul.mubr.bf16.gmra.mrb[0].mxu0 %v414
    %v1260 = vpop.f32.mrb[0].mxu0
    %v1261 = vadd.f32 %v549, %v1260
    %v1262 = vpop.f32.mrb[0].mxu0
    %v1263 = vadd.f32 %v553, %v1262
    %v1264 = vpop.f32.mrb[0].mxu0
    %v1265 = vpop.f32.mrb[0].mxu0
    %1266 = vdwg.mxu0
    %1267 = vmatprep.subr.bf16.mxu0 %v973
    %1268 = vmatpush1.bf16.msra.mxu0 %v972
    %1269 = vmatprep.subr.bf16.mxu0 %v981
    %1270 = vmatpush1.bf16.msra.mxu0 %v980
    %1271 = vmatprep.subr.bf16.mxu0 %v989
    %1272 = vmatpush1.bf16.msra.mxu0 %v988
    %1273 = vmatprep.subr.bf16.mxu0 %v997
    %1274 = vmatpush1.bf16.msra.mxu0 %v996
    %1275 = vmatprep.subr.bf16.mxu0 %v1005
    %1276 = vmatpush1.bf16.msra.mxu0 %v1004
    %1277 = vmatprep.subr.bf16.mxu0 %v1013
    %1278 = vmatpush1.bf16.msra.mxu0 %v1012
    %1279 = vmatprep.subr.bf16.mxu0 %v1021
    %1280 = vmatpush1.bf16.msra.mxu0 %v1020
    %1281 = vmatprep.subr.bf16.mxu0 %v1029
    %1282 = vmatpush1.bf16.msra.mxu0 %v1028
    %1283 = vmatprep.subr.bf16.mxu0 %v1037
    %1284 = vmatpush1.bf16.msra.mxu0 %v1036
    %1285 = vmatprep.subr.bf16.mxu0 %v1045
    %1286 = vmatpush1.bf16.msra.mxu0 %v1044
    %1287 = vmatprep.subr.bf16.mxu0 %v1053
    %1288 = vmatpush1.bf16.msra.mxu0 %v1052
    %1289 = vmatprep.subr.bf16.mxu0 %v1061
    %1290 = vmatpush1.bf16.msra.mxu0 %v1060
    %1291 = vmatprep.subr.bf16.mxu0 %v1069
    %1292 = vmatpush1.bf16.msra.mxu0 %v1068
    %1293 = vmatprep.subr.bf16.mxu0 %v1077
    %1294 = vmatpush1.bf16.msra.mxu0 %v1076
    %1295 = vmatprep.subr.bf16.mxu0 %v1085
    %1296 = vmatpush1.bf16.msra.mxu0 %v1084
    %1297 = vmatprep.subr.bf16.mxu0 %v1093
    %1298 = vmatpush1.bf16.msra.mxu0 %v1092
    %1299 = vmatprep.mubr.bf16.mxu0 %v415
    %1300 = vmatmul.mubr.bf16.gmra.mrb[0].mxu0 %v414
    %v1301 = vpop.f32.mrb[0].mxu0
    %v1302 = vadd.f32 %v557, %v1301
    %v1303 = vpop.f32.mrb[0].mxu0
    %v1304 = vadd.f32 %v561, %v1303
    %v1305 = vpop.f32.mrb[0].mxu0
    %v1306 = vpop.f32.mrb[0].mxu0
    %1307 = vdwg.mxu0
    %1308 = vmatprep.subr.bf16.mxu0 %v975
    %1309 = vmatpush1.bf16.msra.mxu0 %v974
    %1310 = vmatprep.subr.bf16.mxu0 %v983
    %1311 = vmatpush1.bf16.msra.mxu0 %v982
    %1312 = vmatprep.subr.bf16.mxu0 %v991
    %1313 = vmatpush1.bf16.msra.mxu0 %v990
    %1314 = vmatprep.subr.bf16.mxu0 %v999
    %1315 = vmatpush1.bf16.msra.mxu0 %v998
    %1316 = vmatprep.subr.bf16.mxu0 %v1007
    %1317 = vmatpush1.bf16.msra.mxu0 %v1006
    %1318 = vmatprep.subr.bf16.mxu0 %v1015
    %1319 = vmatpush1.bf16.msra.mxu0 %v1014
    %1320 = vmatprep.subr.bf16.mxu0 %v1023
    %1321 = vmatpush1.bf16.msra.mxu0 %v1022
    %1322 = vmatprep.subr.bf16.mxu0 %v1031
    %1323 = vmatpush1.bf16.msra.mxu0 %v1030
    %1324 = vmatprep.subr.bf16.mxu0 %v1039
    %1325 = vmatpush1.bf16.msra.mxu0 %v1038
    %1326 = vmatprep.subr.bf16.mxu0 %v1047
    %1327 = vmatpush1.bf16.msra.mxu0 %v1046
    %1328 = vmatprep.subr.bf16.mxu0 %v1055
    %1329 = vmatpush1.bf16.msra.mxu0 %v1054
    %1330 = vmatprep.subr.bf16.mxu0 %v1063
    %1331 = vmatpush1.bf16.msra.mxu0 %v1062
    %1332 = vmatprep.subr.bf16.mxu0 %v1071
    %1333 = vmatpush1.bf16.msra.mxu0 %v1070
    %1334 = vmatprep.subr.bf16.mxu0 %v1079
    %1335 = vmatpush1.bf16.msra.mxu0 %v1078
    %1336 = vmatprep.subr.bf16.mxu0 %v1087
    %1337 = vmatpush1.bf16.msra.mxu0 %v1086
    %1338 = vmatprep.subr.bf16.mxu0 %v1095
    %1339 = vmatpush1.bf16.msra.mxu0 %v1094
    %1340 = vmatprep.mubr.bf16.mxu0 %v415
    %1341 = vmatmul.mubr.bf16.gmra.mrb[0].mxu0 %v414
    %v1342 = vpop.f32.mrb[0].mxu0
    %v1343 = vadd.f32 %v565, %v1342
    %v1344 = vpop.f32.mrb[0].mxu0
    %v1345 = vadd.f32 %v569, %v1344
    %v1346 = vpop.f32.mrb[0].mxu0
    %v1347 = vpop.f32.mrb[0].mxu0
    %1348 = vdwg.mxu0
    %1349 = vmatprep.subr.bf16.mxu0 %v977
    %1350 = vmatpush1.bf16.msra.mxu0 %v976
    %1351 = vmatprep.subr.bf16.mxu0 %v985
    %1352 = vmatpush1.bf16.msra.mxu0 %v984
    %1353 = vmatprep.subr.bf16.mxu0 %v993
    %1354 = vmatpush1.bf16.msra.mxu0 %v992
    %1355 = vmatprep.subr.bf16.mxu0 %v1001
    %1356 = vmatpush1.bf16.msra.mxu0 %v1000
    %1357 = vmatprep.subr.bf16.mxu0 %v1009
    %1358 = vmatpush1.bf16.msra.mxu0 %v1008
    %1359 = vmatprep.subr.bf16.mxu0 %v1017
    %1360 = vmatpush1.bf16.msra.mxu0 %v1016
    %1361 = vmatprep.subr.bf16.mxu0 %v1025
    %1362 = vmatpush1.bf16.msra.mxu0 %v1024
    %1363 = vmatprep.subr.bf16.mxu0 %v1033
    %1364 = vmatpush1.bf16.msra.mxu0 %v1032
    %1365 = vmatprep.subr.bf16.mxu0 %v1041
    %1366 = vmatpush1.bf16.msra.mxu0 %v1040
    %1367 = vmatprep.subr.bf16.mxu0 %v1049
    %1368 = vmatpush1.bf16.msra.mxu0 %v1048
    %1369 = vmatprep.subr.bf16.mxu0 %v1057
    %1370 = vmatpush1.bf16.msra.mxu0 %v1056
    %1371 = vmatprep.subr.bf16.mxu0 %v1065
    %1372 = vmatpush1.bf16.msra.mxu0 %v1064
    %1373 = vmatprep.subr.bf16.mxu0 %v1073
    %1374 = vmatpush1.bf16.msra.mxu0 %v1072
    %1375 = vmatprep.subr.bf16.mxu0 %v1081
    %1376 = vmatpush1.bf16.msra.mxu0 %v1080
    %1377 = vmatprep.subr.bf16.mxu0 %v1089
    %1378 = vmatpush1.bf16.msra.mxu0 %v1088
    %1379 = vmatprep.subr.bf16.mxu0 %v1097
    %1380 = vmatpush1.bf16.msra.mxu0 %v1096
    %1381 = vmatprep.mubr.bf16.mxu0 %v415
    %1382 = vmatmul.mubr.bf16.gmra.mrb[0].mxu0 %v414
    %v1383 = vpop.f32.mrb[0].mxu0
    %v1384 = vadd.f32 %v573, %v1383
    %v1385 = vpop.f32.mrb[0].mxu0
    %v1386 = vadd.f32 %v577, %v1385
    %v1387 = vpop.f32.mrb[0].mxu0
    %v1388 = vpop.f32.mrb[0].mxu0
    %1389 = vdwg.mxu0
    %v1390 = vmax.f32 %v1261, 0.0
    %v1391 = vmax.f32 %v1263, 0.0
    %v1392 = vmax.f32 %v1302, 0.0
    %v1393 = vmax.f32 %v1304, 0.0
    %v1394 = vmax.f32 %v1343, 0.0
    %v1395 = vmax.f32 %v1345, 0.0
    %v1396 = vmax.f32 %v1384, 0.0
    %v1397 = vmax.f32 %v1386, 0.0
    %v1398 = vpack.c.bf16 %v1390, %v1390
    %v1399 = vpack.c.bf16 %v1391, %v1391
    %v1400 = vpack.c.bf16 %v1392, %v1392
    %v1401 = vpack.c.bf16 %v1393, %v1393
    %v1402 = vpack.c.bf16 %v1394, %v1394
    %v1403 = vpack.c.bf16 %v1395, %v1395
    %v1404 = vpack.c.bf16 %v1396, %v1396
    %v1405 = vpack.c.bf16 %v1397, %v1397
    %v1406 = vld [vmem:[#allocation11] sm:$0xf]
    %v1407 = vld [vmem:[#allocation11 + $0x4] sm:$0xf]
    %v1408 = vld [vmem:[#allocation11 + $0x8] sm:$0xf]
    %v1409 = vld [vmem:[#allocation11 + $0xc] sm:$0xf]
    %v1410 = vld [vmem:[#allocation11 + $0x10] sm:$0xf]
    %v1411 = vld [vmem:[#allocation11 + $0x14] sm:$0xf]
    %v1412 = vld [vmem:[#allocation11 + $0x18] sm:$0xf]
    %v1413 = vld [vmem:[#allocation11 + $0x1c] sm:$0xf]
    %v1414 = vld [vmem:[#allocation11 + $0x20] sm:$0xf]
    %v1415 = vld [vmem:[#allocation11 + $0x24] sm:$0xf]
    %v1416 = vld [vmem:[#allocation11 + $0x28] sm:$0xf]
    %v1417 = vld [vmem:[#allocation11 + $0x2c] sm:$0xf]
    %v1418 = vld [vmem:[#allocation11 + $0x30] sm:$0xf]
    %v1419 = vld [vmem:[#allocation11 + $0x34] sm:$0xf]
    %v1420 = vld [vmem:[#allocation11 + $0x38] sm:$0xf]
    %v1421 = vld [vmem:[#allocation11 + $0x3c] sm:$0xf]
    %v1422 = vld [vmem:[#allocation11 + $0x40] sm:$0xf]
    %v1423 = vld [vmem:[#allocation11 + $0x44] sm:$0xf]
    %v1424 = vld [vmem:[#allocation11 + $0x48] sm:$0xf]
    %v1425 = vld [vmem:[#allocation11 + $0x4c] sm:$0xf]
    %v1426 = vld [vmem:[#allocation11 + $0x50] sm:$0xf]
    %v1427 = vld [vmem:[#allocation11 + $0x54] sm:$0xf]
    %v1428 = vld [vmem:[#allocation11 + $0x58] sm:$0xf]
    %v1429 = vld [vmem:[#allocation11 + $0x5c] sm:$0xf]
    %v1430 = vld [vmem:[#allocation11 + $0x60] sm:$0xf]
    %v1431 = vld [vmem:[#allocation11 + $0x64] sm:$0xf]
    %v1432 = vld [vmem:[#allocation11 + $0x68] sm:$0xf]
    %v1433 = vld [vmem:[#allocation11 + $0x6c] sm:$0xf]
    %v1434 = vld [vmem:[#allocation11 + $0x70] sm:$0xf]
    %v1435 = vld [vmem:[#allocation11 + $0x74] sm:$0xf]
    %v1436 = vld [vmem:[#allocation11 + $0x78] sm:$0xf]
    %v1437 = vld [vmem:[#allocation11 + $0x7c] sm:$0xf]
    %v1438 = vld [vmem:[#allocation11 + $0x80] sm:$0xf]
    %v1439 = vld [vmem:[#allocation11 + $0x84] sm:$0xf]
    %v1440 = vld [vmem:[#allocation11 + $0x88] sm:$0xf]
    %v1441 = vld [vmem:[#allocation11 + $0x8c] sm:$0xf]
    %v1442 = vld [vmem:[#allocation11 + $0x90] sm:$0xf]
    %v1443 = vld [vmem:[#allocation11 + $0x94] sm:$0xf]
    %v1444 = vld [vmem:[#allocation11 + $0x98] sm:$0xf]
    %v1445 = vld [vmem:[#allocation11 + $0x9c] sm:$0xf]
    %v1446 = vld [vmem:[#allocation11 + $0xa0] sm:$0xf]
    %v1447 = vld [vmem:[#allocation11 + $0xa4] sm:$0xf]
    %v1448 = vld [vmem:[#allocation11 + $0xa8] sm:$0xf]
    %v1449 = vld [vmem:[#allocation11 + $0xac] sm:$0xf]
    %v1450 = vld [vmem:[#allocation11 + $0xb0] sm:$0xf]
    %v1451 = vld [vmem:[#allocation11 + $0xb4] sm:$0xf]
    %v1452 = vld [vmem:[#allocation11 + $0xb8] sm:$0xf]
    %v1453 = vld [vmem:[#allocation11 + $0xbc] sm:$0xf]
    %v1454 = vld [vmem:[#allocation11 + $0xc0] sm:$0xf]
    %v1455 = vld [vmem:[#allocation11 + $0xc4] sm:$0xf]
    %v1456 = vld [vmem:[#allocation11 + $0xc8] sm:$0xf]
    %v1457 = vld [vmem:[#allocation11 + $0xcc] sm:$0xf]
    %v1458 = vld [vmem:[#allocation11 + $0xd0] sm:$0xf]
    %v1459 = vld [vmem:[#allocation11 + $0xd4] sm:$0xf]
    %v1460 = vld [vmem:[#allocation11 + $0xd8] sm:$0xf]
    %v1461 = vld [vmem:[#allocation11 + $0xdc] sm:$0xf]
    %v1462 = vld [vmem:[#allocation11 + $0xe0] sm:$0xf]
    %v1463 = vld [vmem:[#allocation11 + $0xe4] sm:$0xf]
    %v1464 = vld [vmem:[#allocation11 + $0xe8] sm:$0xf]
    %v1465 = vld [vmem:[#allocation11 + $0xec] sm:$0xf]
    %v1466 = vld [vmem:[#allocation11 + $0xf0] sm:$0xf]
    %v1467 = vld [vmem:[#allocation11 + $0xf4] sm:$0xf]
    %v1468 = vld [vmem:[#allocation11 + $0xf8] sm:$0xf]
    %v1469 = vld [vmem:[#allocation11 + $0xfc] sm:$0xf]
    %v1470 = vld [vmem:[#allocation11 + $0x100] sm:$0xf]
    %v1471 = vld [vmem:[#allocation11 + $0x104] sm:$0xf]
    %v1472 = vld [vmem:[#allocation11 + $0x108] sm:$0xf]
    %v1473 = vld [vmem:[#allocation11 + $0x10c] sm:$0xf]
    %v1474 = vld [vmem:[#allocation11 + $0x110] sm:$0xf]
    %v1475 = vld [vmem:[#allocation11 + $0x114] sm:$0xf]
    %v1476 = vld [vmem:[#allocation11 + $0x118] sm:$0xf]
    %v1477 = vld [vmem:[#allocation11 + $0x11c] sm:$0xf]
    %v1478 = vld [vmem:[#allocation11 + $0x120] sm:$0xf]
    %v1479 = vld [vmem:[#allocation11 + $0x124] sm:$0xf]
    %v1480 = vld [vmem:[#allocation11 + $0x128] sm:$0xf]
    %v1481 = vld [vmem:[#allocation11 + $0x12c] sm:$0xf]
    %v1482 = vld [vmem:[#allocation11 + $0x130] sm:$0xf]
    %v1483 = vld [vmem:[#allocation11 + $0x134] sm:$0xf]
    %v1484 = vld [vmem:[#allocation11 + $0x138] sm:$0xf]
    %v1485 = vld [vmem:[#allocation11 + $0x13c] sm:$0xf]
    %v1486 = vld [vmem:[#allocation11 + $0x140] sm:$0xf]
    %v1487 = vld [vmem:[#allocation11 + $0x144] sm:$0xf]
    %v1488 = vld [vmem:[#allocation11 + $0x148] sm:$0xf]
    %v1489 = vld [vmem:[#allocation11 + $0x14c] sm:$0xf]
    %v1490 = vld [vmem:[#allocation11 + $0x150] sm:$0xf]
    %v1491 = vld [vmem:[#allocation11 + $0x154] sm:$0xf]
    %v1492 = vld [vmem:[#allocation11 + $0x158] sm:$0xf]
    %v1493 = vld [vmem:[#allocation11 + $0x15c] sm:$0xf]
    %v1494 = vld [vmem:[#allocation11 + $0x160] sm:$0xf]
    %v1495 = vld [vmem:[#allocation11 + $0x164] sm:$0xf]
    %v1496 = vld [vmem:[#allocation11 + $0x168] sm:$0xf]
    %v1497 = vld [vmem:[#allocation11 + $0x16c] sm:$0xf]
    %v1498 = vld [vmem:[#allocation11 + $0x170] sm:$0xf]
    %v1499 = vld [vmem:[#allocation11 + $0x174] sm:$0xf]
    %v1500 = vld [vmem:[#allocation11 + $0x178] sm:$0xf]
    %v1501 = vld [vmem:[#allocation11 + $0x17c] sm:$0xf]
    %v1502 = vld [vmem:[#allocation11 + $0x180] sm:$0xf]
    %v1503 = vld [vmem:[#allocation11 + $0x184] sm:$0xf]
    %v1504 = vld [vmem:[#allocation11 + $0x188] sm:$0xf]
    %v1505 = vld [vmem:[#allocation11 + $0x18c] sm:$0xf]
    %v1506 = vld [vmem:[#allocation11 + $0x190] sm:$0xf]
    %v1507 = vld [vmem:[#allocation11 + $0x194] sm:$0xf]
    %v1508 = vld [vmem:[#allocation11 + $0x198] sm:$0xf]
    %v1509 = vld [vmem:[#allocation11 + $0x19c] sm:$0xf]
    %v1510 = vld [vmem:[#allocation11 + $0x1a0] sm:$0xf]
    %v1511 = vld [vmem:[#allocation11 + $0x1a4] sm:$0xf]
    %v1512 = vld [vmem:[#allocation11 + $0x1a8] sm:$0xf]
    %v1513 = vld [vmem:[#allocation11 + $0x1ac] sm:$0xf]
    %v1514 = vld [vmem:[#allocation11 + $0x1b0] sm:$0xf]
    %v1515 = vld [vmem:[#allocation11 + $0x1b4] sm:$0xf]
    %v1516 = vld [vmem:[#allocation11 + $0x1b8] sm:$0xf]
    %v1517 = vld [vmem:[#allocation11 + $0x1bc] sm:$0xf]
    %v1518 = vld [vmem:[#allocation11 + $0x1c0] sm:$0xf]
    %v1519 = vld [vmem:[#allocation11 + $0x1c4] sm:$0xf]
    %v1520 = vld [vmem:[#allocation11 + $0x1c8] sm:$0xf]
    %v1521 = vld [vmem:[#allocation11 + $0x1cc] sm:$0xf]
    %v1522 = vld [vmem:[#allocation11 + $0x1d0] sm:$0xf]
    %v1523 = vld [vmem:[#allocation11 + $0x1d4] sm:$0xf]
    %v1524 = vld [vmem:[#allocation11 + $0x1d8] sm:$0xf]
    %v1525 = vld [vmem:[#allocation11 + $0x1dc] sm:$0xf]
    %v1526 = vld [vmem:[#allocation11 + $0x1e0] sm:$0xf]
    %v1527 = vld [vmem:[#allocation11 + $0x1e4] sm:$0xf]
    %v1528 = vld [vmem:[#allocation11 + $0x1e8] sm:$0xf]
    %v1529 = vld [vmem:[#allocation11 + $0x1ec] sm:$0xf]
    %v1530 = vld [vmem:[#allocation11 + $0x1f0] sm:$0xf]
    %v1531 = vld [vmem:[#allocation11 + $0x1f4] sm:$0xf]
    %v1532 = vld [vmem:[#allocation11 + $0x1f8] sm:$0xf]
    %v1533 = vld [vmem:[#allocation11 + $0x1fc] sm:$0xf]
    %v1534 = vld [vmem:[%s6 + $0xc] sm:$0x1]
    %v1536 = vlaneseq
    %v1537 = vshrl.u32 %v1536, 7
    %v1538 = vsub.s32 0, %v1537
    %v1539 = vrot.slane %v1534, %v1538
    %v1669 = vunpack.c.l.b16 %v1406
    %v1670 = vunpack.c.l.b16 %v1407
    %v1671 = vunpack.c.l.b16 %v1408
    %v1672 = vunpack.c.l.b16 %v1409
    %v1673 = vunpack.c.l.b16 %v1410
    %v1674 = vunpack.c.l.b16 %v1411
    %v1675 = vunpack.c.l.b16 %v1412
    %v1676 = vunpack.c.l.b16 %v1413
    %v1677 = vunpack.c.l.b16 %v1414
    %v1678 = vunpack.c.l.b16 %v1415
    %v1679 = vunpack.c.l.b16 %v1416
    %v1680 = vunpack.c.l.b16 %v1417
    %v1681 = vunpack.c.l.b16 %v1418
    %v1682 = vunpack.c.l.b16 %v1419
    %v1683 = vunpack.c.l.b16 %v1420
    %v1684 = vunpack.c.l.b16 %v1421
    %v1685 = vunpack.c.l.b16 %v1422
    %v1686 = vunpack.c.l.b16 %v1423
    %v1687 = vunpack.c.l.b16 %v1424
    %v1688 = vunpack.c.l.b16 %v1425
    %v1689 = vunpack.c.l.b16 %v1426
    %v1690 = vunpack.c.l.b16 %v1427
    %v1691 = vunpack.c.l.b16 %v1428
    %v1692 = vunpack.c.l.b16 %v1429
    %v1693 = vunpack.c.l.b16 %v1430
    %v1694 = vunpack.c.l.b16 %v1431
    %v1695 = vunpack.c.l.b16 %v1432
    %v1696 = vunpack.c.l.b16 %v1433
    %v1697 = vunpack.c.l.b16 %v1434
    %v1698 = vunpack.c.l.b16 %v1435
    %v1699 = vunpack.c.l.b16 %v1436
    %v1700 = vunpack.c.l.b16 %v1437
    %v1701 = vunpack.c.l.b16 %v1438
    %v1702 = vunpack.c.l.b16 %v1439
    %v1703 = vunpack.c.l.b16 %v1440
    %v1704 = vunpack.c.l.b16 %v1441
    %v1705 = vunpack.c.l.b16 %v1442
    %v1706 = vunpack.c.l.b16 %v1443
    %v1707 = vunpack.c.l.b16 %v1444
    %v1708 = vunpack.c.l.b16 %v1445
    %v1709 = vunpack.c.l.b16 %v1446
    %v1710 = vunpack.c.l.b16 %v1447
    %v1711 = vunpack.c.l.b16 %v1448
    %v1712 = vunpack.c.l.b16 %v1449
    %v1713 = vunpack.c.l.b16 %v1450
    %v1714 = vunpack.c.l.b16 %v1451
    %v1715 = vunpack.c.l.b16 %v1452
    %v1716 = vunpack.c.l.b16 %v1453
    %v1717 = vunpack.c.l.b16 %v1454
    %v1718 = vunpack.c.l.b16 %v1455
    %v1719 = vunpack.c.l.b16 %v1456
    %v1720 = vunpack.c.l.b16 %v1457
    %v1721 = vunpack.c.l.b16 %v1458
    %v1722 = vunpack.c.l.b16 %v1459
    %v1723 = vunpack.c.l.b16 %v1460
    %v1724 = vunpack.c.l.b16 %v1461
    %v1725 = vunpack.c.l.b16 %v1462
    %v1726 = vunpack.c.l.b16 %v1463
    %v1727 = vunpack.c.l.b16 %v1464
    %v1728 = vunpack.c.l.b16 %v1465
    %v1729 = vunpack.c.l.b16 %v1466
    %v1730 = vunpack.c.l.b16 %v1467
    %v1731 = vunpack.c.l.b16 %v1468
    %v1732 = vunpack.c.l.b16 %v1469
    %v1733 = vunpack.c.l.b16 %v1470
    %v1734 = vunpack.c.l.b16 %v1471
    %v1735 = vunpack.c.l.b16 %v1472
    %v1736 = vunpack.c.l.b16 %v1473
    %v1737 = vunpack.c.l.b16 %v1474
    %v1738 = vunpack.c.l.b16 %v1475
    %v1739 = vunpack.c.l.b16 %v1476
    %v1740 = vunpack.c.l.b16 %v1477
    %v1741 = vunpack.c.l.b16 %v1478
    %v1742 = vunpack.c.l.b16 %v1479
    %v1743 = vunpack.c.l.b16 %v1480
    %v1744 = vunpack.c.l.b16 %v1481
    %v1745 = vunpack.c.l.b16 %v1482
    %v1746 = vunpack.c.l.b16 %v1483
    %v1747 = vunpack.c.l.b16 %v1484
    %v1748 = vunpack.c.l.b16 %v1485
    %v1749 = vunpack.c.l.b16 %v1486
    %v1750 = vunpack.c.l.b16 %v1487
    %v1751 = vunpack.c.l.b16 %v1488
    %v1752 = vunpack.c.l.b16 %v1489
    %v1753 = vunpack.c.l.b16 %v1490
    %v1754 = vunpack.c.l.b16 %v1491
    %v1755 = vunpack.c.l.b16 %v1492
    %v1756 = vunpack.c.l.b16 %v1493
    %v1757 = vunpack.c.l.b16 %v1494
    %v1758 = vunpack.c.l.b16 %v1495
    %v1759 = vunpack.c.l.b16 %v1496
    %v1760 = vunpack.c.l.b16 %v1497
    %v1761 = vunpack.c.l.b16 %v1498
    %v1762 = vunpack.c.l.b16 %v1499
    %v1763 = vunpack.c.l.b16 %v1500
    %v1764 = vunpack.c.l.b16 %v1501
    %v1765 = vunpack.c.l.b16 %v1502
    %v1766 = vunpack.c.l.b16 %v1503
    %v1767 = vunpack.c.l.b16 %v1504
    %v1768 = vunpack.c.l.b16 %v1505
    %v1769 = vunpack.c.l.b16 %v1506
    %v1770 = vunpack.c.l.b16 %v1507
    %v1771 = vunpack.c.l.b16 %v1508
    %v1772 = vunpack.c.l.b16 %v1509
    %v1773 = vunpack.c.l.b16 %v1510
    %v1774 = vunpack.c.l.b16 %v1511
    %v1775 = vunpack.c.l.b16 %v1512
    %v1776 = vunpack.c.l.b16 %v1513
    %v1777 = vunpack.c.l.b16 %v1514
    %v1778 = vunpack.c.l.b16 %v1515
    %v1779 = vunpack.c.l.b16 %v1516
    %v1780 = vunpack.c.l.b16 %v1517
    %v1781 = vunpack.c.l.b16 %v1518
    %v1782 = vunpack.c.l.b16 %v1519
    %v1783 = vunpack.c.l.b16 %v1520
    %v1784 = vunpack.c.l.b16 %v1521
    %v1785 = vunpack.c.l.b16 %v1522
    %v1786 = vunpack.c.l.b16 %v1523
    %v1787 = vunpack.c.l.b16 %v1524
    %v1788 = vunpack.c.l.b16 %v1525
    %v1789 = vunpack.c.l.b16 %v1526
    %v1790 = vunpack.c.l.b16 %v1527
    %v1791 = vunpack.c.l.b16 %v1528
    %v1792 = vunpack.c.l.b16 %v1529
    %v1793 = vunpack.c.l.b16 %v1530
    %v1794 = vunpack.c.l.b16 %v1531
    %v1795 = vunpack.c.l.b16 %v1532
    %v1796 = vunpack.c.l.b16 %v1533
    %v1797 = vpack.c.b16 %v1670, %v1669
    %v1798 = vpack.c.b16 %v1672, %v1671
    %v1799 = vpack.c.b16 %v1674, %v1673
    %v1800 = vpack.c.b16 %v1676, %v1675
    %v1801 = vpack.c.b16 %v1678, %v1677
    %v1802 = vpack.c.b16 %v1680, %v1679
    %v1803 = vpack.c.b16 %v1682, %v1681
    %v1804 = vpack.c.b16 %v1684, %v1683
    %v1805 = vpack.c.b16 %v1686, %v1685
    %v1806 = vpack.c.b16 %v1688, %v1687
    %v1807 = vpack.c.b16 %v1690, %v1689
    %v1808 = vpack.c.b16 %v1692, %v1691
    %v1809 = vpack.c.b16 %v1694, %v1693
    %v1810 = vpack.c.b16 %v1696, %v1695
    %v1811 = vpack.c.b16 %v1698, %v1697
    %v1812 = vpack.c.b16 %v1700, %v1699
    %v1813 = vpack.c.b16 %v1702, %v1701
    %v1814 = vpack.c.b16 %v1704, %v1703
    %v1815 = vpack.c.b16 %v1706, %v1705
    %v1816 = vpack.c.b16 %v1708, %v1707
    %v1817 = vpack.c.b16 %v1710, %v1709
    %v1818 = vpack.c.b16 %v1712, %v1711
    %v1819 = vpack.c.b16 %v1714, %v1713
    %v1820 = vpack.c.b16 %v1716, %v1715
    %v1821 = vpack.c.b16 %v1718, %v1717
    %v1822 = vpack.c.b16 %v1720, %v1719
    %v1823 = vpack.c.b16 %v1722, %v1721
    %v1824 = vpack.c.b16 %v1724, %v1723
    %v1825 = vpack.c.b16 %v1726, %v1725
    %v1826 = vpack.c.b16 %v1728, %v1727
    %v1827 = vpack.c.b16 %v1730, %v1729
    %v1828 = vpack.c.b16 %v1732, %v1731
    %v1829 = vpack.c.b16 %v1734, %v1733
    %v1830 = vpack.c.b16 %v1736, %v1735
    %v1831 = vpack.c.b16 %v1738, %v1737
    %v1832 = vpack.c.b16 %v1740, %v1739
    %v1833 = vpack.c.b16 %v1742, %v1741
    %v1834 = vpack.c.b16 %v1744, %v1743
    %v1835 = vpack.c.b16 %v1746, %v1745
    %v1836 = vpack.c.b16 %v1748, %v1747
    %v1837 = vpack.c.b16 %v1750, %v1749
    %v1838 = vpack.c.b16 %v1752, %v1751
    %v1839 = vpack.c.b16 %v1754, %v1753
    %v1840 = vpack.c.b16 %v1756, %v1755
    %v1841 = vpack.c.b16 %v1758, %v1757
    %v1842 = vpack.c.b16 %v1760, %v1759
    %v1843 = vpack.c.b16 %v1762, %v1761
    %v1844 = vpack.c.b16 %v1764, %v1763
    %v1845 = vpack.c.b16 %v1766, %v1765
    %v1846 = vpack.c.b16 %v1768, %v1767
    %v1847 = vpack.c.b16 %v1770, %v1769
    %v1848 = vpack.c.b16 %v1772, %v1771
    %v1849 = vpack.c.b16 %v1774, %v1773
    %v1850 = vpack.c.b16 %v1776, %v1775
    %v1851 = vpack.c.b16 %v1778, %v1777
    %v1852 = vpack.c.b16 %v1780, %v1779
    %v1853 = vpack.c.b16 %v1782, %v1781
    %v1854 = vpack.c.b16 %v1784, %v1783
    %v1855 = vpack.c.b16 %v1786, %v1785
    %v1856 = vpack.c.b16 %v1788, %v1787
    %v1857 = vpack.c.b16 %v1790, %v1789
    %v1858 = vpack.c.b16 %v1792, %v1791
    %v1859 = vpack.c.b16 %v1794, %v1793
    %v1860 = vpack.c.b16 %v1796, %v1795
    %1925 = vmatprep.subr.bf16.mxu0 0
    %1926 = vmatpush1.bf16.msra.mxu0 %v1797
    %1927 = vmatprep.subr.bf16.mxu0 0
    %1928 = vmatpush1.bf16.msra.mxu0 %v1798
    %1929 = vmatprep.subr.bf16.mxu0 0
    %1930 = vmatpush1.bf16.msra.mxu0 %v1799
    %1931 = vmatprep.subr.bf16.mxu0 0
    %1932 = vmatpush1.bf16.msra.mxu0 %v1800
    %1933 = vmatprep.subr.bf16.mxu0 0
    %1934 = vmatpush1.bf16.msra.mxu0 %v1801
    %1935 = vmatprep.subr.bf16.mxu0 0
    %1936 = vmatpush1.bf16.msra.mxu0 %v1802
    %1937 = vmatprep.subr.bf16.mxu0 0
    %1938 = vmatpush1.bf16.msra.mxu0 %v1803
    %1939 = vmatprep.subr.bf16.mxu0 0
    %1940 = vmatpush1.bf16.msra.mxu0 %v1804
    %1941 = vmatprep.subr.bf16.mxu0 0
    %1942 = vmatpush1.bf16.msra.mxu0 %v1805
    %1943 = vmatprep.subr.bf16.mxu0 0
    %1944 = vmatpush1.bf16.msra.mxu0 %v1806
    %1945 = vmatprep.subr.bf16.mxu0 0
    %1946 = vmatpush1.bf16.msra.mxu0 %v1807
    %1947 = vmatprep.subr.bf16.mxu0 0
    %1948 = vmatpush1.bf16.msra.mxu0 %v1808
    %1949 = vmatprep.subr.bf16.mxu0 0
    %1950 = vmatpush1.bf16.msra.mxu0 %v1809
    %1951 = vmatprep.subr.bf16.mxu0 0
    %1952 = vmatpush1.bf16.msra.mxu0 %v1810
    %1953 = vmatprep.subr.bf16.mxu0 0
    %1954 = vmatpush1.bf16.msra.mxu0 %v1811
    %1955 = vmatprep.subr.bf16.mxu0 0
    %1956 = vmatpush1.bf16.msra.mxu0 %v1812
    %1957 = vmatprep.mubr.bf16.mxu0 %v1399
    %1958 = vmatmul.mubr.bf16.gmra.mrb[0].mxu0 %v1398
    %v1959 = vpop.f32.mrb[0].mxu0
    %v1960 = vadd.f32 %v1539, %v1959
    %v1961 = vpop.f32.mrb[0].mxu0
    %v1962 = vpop.f32.mrb[0].mxu0
    %v1963 = vpop.f32.mrb[0].mxu0
    %1964 = vdwg.mxu0
    %1965 = vmatprep.subr.bf16.mxu0 0
    %1966 = vmatpush1.bf16.msra.mxu0 %v1813
    %1967 = vmatprep.subr.bf16.mxu0 0
    %1968 = vmatpush1.bf16.msra.mxu0 %v1814
    %1969 = vmatprep.subr.bf16.mxu0 0
    %1970 = vmatpush1.bf16.msra.mxu0 %v1815
    %1971 = vmatprep.subr.bf16.mxu0 0
    %1972 = vmatpush1.bf16.msra.mxu0 %v1816
    %1973 = vmatprep.subr.bf16.mxu0 0
    %1974 = vmatpush1.bf16.msra.mxu0 %v1817
    %1975 = vmatprep.subr.bf16.mxu0 0
    %1976 = vmatpush1.bf16.msra.mxu0 %v1818
    %1977 = vmatprep.subr.bf16.mxu0 0
    %1978 = vmatpush1.bf16.msra.mxu0 %v1819
    %1979 = vmatprep.subr.bf16.mxu0 0
    %1980 = vmatpush1.bf16.msra.mxu0 %v1820
    %1981 = vmatprep.subr.bf16.mxu0 0
    %1982 = vmatpush1.bf16.msra.mxu0 %v1821
    %1983 = vmatprep.subr.bf16.mxu0 0
    %1984 = vmatpush1.bf16.msra.mxu0 %v1822
    %1985 = vmatprep.subr.bf16.mxu0 0
    %1986 = vmatpush1.bf16.msra.mxu0 %v1823
    %1987 = vmatprep.subr.bf16.mxu0 0
    %1988 = vmatpush1.bf16.msra.mxu0 %v1824
    %1989 = vmatprep.subr.bf16.mxu0 0
    %1990 = vmatpush1.bf16.msra.mxu0 %v1825
    %1991 = vmatprep.subr.bf16.mxu0 0
    %1992 = vmatpush1.bf16.msra.mxu0 %v1826
    %1993 = vmatprep.subr.bf16.mxu0 0
    %1994 = vmatpush1.bf16.msra.mxu0 %v1827
    %1995 = vmatprep.subr.bf16.mxu0 0
    %1996 = vmatpush1.bf16.msra.mxu0 %v1828
    %1997 = vmatprep.mubr.bf16.mxu0 %v1401
    %1998 = vmatmul.mubr.bf16.gmra.mrb[0].mxu0 %v1400
    %v1999 = vpop.f32.mrb[0].mxu0
    %v2000 = vadd.f32 %v1960, %v1999
    %v2001 = vpop.f32.mrb[0].mxu0
    %v2002 = vpop.f32.mrb[0].mxu0
    %v2003 = vpop.f32.mrb[0].mxu0
    %2004 = vdwg.mxu0
    %2005 = vmatprep.subr.bf16.mxu0 0
    %2006 = vmatpush1.bf16.msra.mxu0 %v1829
    %2007 = vmatprep.subr.bf16.mxu0 0
    %2008 = vmatpush1.bf16.msra.mxu0 %v1830
    %2009 = vmatprep.subr.bf16.mxu0 0
    %2010 = vmatpush1.bf16.msra.mxu0 %v1831
    %2011 = vmatprep.subr.bf16.mxu0 0
    %2012 = vmatpush1.bf16.msra.mxu0 %v1832
    %2013 = vmatprep.subr.bf16.mxu0 0
    %2014 = vmatpush1.bf16.msra.mxu0 %v1833
    %2015 = vmatprep.subr.bf16.mxu0 0
    %2016 = vmatpush1.bf16.msra.mxu0 %v1834
    %2017 = vmatprep.subr.bf16.mxu0 0
    %2018 = vmatpush1.bf16.msra.mxu0 %v1835
    %2019 = vmatprep.subr.bf16.mxu0 0
    %2020 = vmatpush1.bf16.msra.mxu0 %v1836
    %2021 = vmatprep.subr.bf16.mxu0 0
    %2022 = vmatpush1.bf16.msra.mxu0 %v1837
    %2023 = vmatprep.subr.bf16.mxu0 0
    %2024 = vmatpush1.bf16.msra.mxu0 %v1838
    %2025 = vmatprep.subr.bf16.mxu0 0
    %2026 = vmatpush1.bf16.msra.mxu0 %v1839
    %2027 = vmatprep.subr.bf16.mxu0 0
    %2028 = vmatpush1.bf16.msra.mxu0 %v1840
    %2029 = vmatprep.subr.bf16.mxu0 0
    %2030 = vmatpush1.bf16.msra.mxu0 %v1841
    %2031 = vmatprep.subr.bf16.mxu0 0
    %2032 = vmatpush1.bf16.msra.mxu0 %v1842
    %2033 = vmatprep.subr.bf16.mxu0 0
    %2034 = vmatpush1.bf16.msra.mxu0 %v1843
    %2035 = vmatprep.subr.bf16.mxu0 0
    %2036 = vmatpush1.bf16.msra.mxu0 %v1844
    %2037 = vmatprep.mubr.bf16.mxu0 %v1403
    %2038 = vmatmul.mubr.bf16.gmra.mrb[0].mxu0 %v1402
    %v2039 = vpop.f32.mrb[0].mxu0
    %v2040 = vadd.f32 %v2000, %v2039
    %v2041 = vpop.f32.mrb[0].mxu0
    %v2042 = vpop.f32.mrb[0].mxu0
    %v2043 = vpop.f32.mrb[0].mxu0
    %2044 = vdwg.mxu0
    %2045 = vmatprep.subr.bf16.mxu0 0
    %2046 = vmatpush1.bf16.msra.mxu0 %v1845
    %2047 = vmatprep.subr.bf16.mxu0 0
    %2048 = vmatpush1.bf16.msra.mxu0 %v1846
    %2049 = vmatprep.subr.bf16.mxu0 0
    %2050 = vmatpush1.bf16.msra.mxu0 %v1847
    %2051 = vmatprep.subr.bf16.mxu0 0
    %2052 = vmatpush1.bf16.msra.mxu0 %v1848
    %2053 = vmatprep.subr.bf16.mxu0 0
    %2054 = vmatpush1.bf16.msra.mxu0 %v1849
    %2055 = vmatprep.subr.bf16.mxu0 0
    %2056 = vmatpush1.bf16.msra.mxu0 %v1850
    %2057 = vmatprep.subr.bf16.mxu0 0
    %2058 = vmatpush1.bf16.msra.mxu0 %v1851
    %2059 = vmatprep.subr.bf16.mxu0 0
    %2060 = vmatpush1.bf16.msra.mxu0 %v1852
    %2061 = vmatprep.subr.bf16.mxu0 0
    %2062 = vmatpush1.bf16.msra.mxu0 %v1853
    %2063 = vmatprep.subr.bf16.mxu0 0
    %2064 = vmatpush1.bf16.msra.mxu0 %v1854
    %2065 = vmatprep.subr.bf16.mxu0 0
    %2066 = vmatpush1.bf16.msra.mxu0 %v1855
    %2067 = vmatprep.subr.bf16.mxu0 0
    %2068 = vmatpush1.bf16.msra.mxu0 %v1856
    %2069 = vmatprep.subr.bf16.mxu0 0
    %2070 = vmatpush1.bf16.msra.mxu0 %v1857
    %2071 = vmatprep.subr.bf16.mxu0 0
    %2072 = vmatpush1.bf16.msra.mxu0 %v1858
    %2073 = vmatprep.subr.bf16.mxu0 0
    %2074 = vmatpush1.bf16.msra.mxu0 %v1859
    %2075 = vmatprep.subr.bf16.mxu0 0
    %2076 = vmatpush1.bf16.msra.mxu0 %v1860
    %2077 = vmatprep.mubr.bf16.mxu0 %v1405
    %2078 = vmatmul.mubr.bf16.gmra.mrb[0].mxu0 %v1404
    %v2079 = vpop.f32.mrb[0].mxu0
    %v2080 = vadd.f32 %v2040, %v2079
    %v2081 = vpop.f32.mrb[0].mxu0
    %v2082 = vpop.f32.mrb[0].mxu0
    %v2083 = vpop.f32.mrb[0].mxu0
    %2084 = vdwg.mxu0
    %2085 = vst [vmem:[#allocation13] sm:$0xff] %v2080
    // Predicated region
    $region54: #{tpu_custom_call.1} parent=1 // pred_check
      _
    $region55: #{tpu_custom_call.1} parent=1 // pred_check_branch
      %2087 = sbr.rel (0) target = $region57
    $region56: #{tpu_custom_call.1} parent=1 // pred_region
      %s2089 = ssub.s32 128, 128
      %2090 = vsyncadd [#allocation4], %s2089
      %s2092 = sshll.u32 [#allocation13], 4
      %s2093 = int_to_ptr.vmem [resolvable:$true] %s2092
      %2095 = dma.vmem_to_hbm [thread:$0]  %s2093, 128, %s7, [#allocation4]
    $region57: #{tpu_custom_call.1} parent=1 // pred_fallthru
      _
    // Predicated region
    $region58: #{tpu_custom_call.1} parent=1 // pred_check
      _
    $region59: #{tpu_custom_call.1} parent=1 // pred_check_branch
      %2097 = sbr.rel (0) target = $region61
    $region60: #{tpu_custom_call.1} parent=1 // pred_region
      %2098 = dma.done [#allocation4], 128
    $region61: #{tpu_custom_call.1} parent=1 // pred_fallthru
      _
    %2099 = vsyncpa [#allocation3], 1
    %2100 = vsyncpa [#allocation6], 1
    %2101 = vsyncpa [#allocation9], 1
    %2102 = vsyncpa [#allocation12], 1
    %2103 = vsyncpa [#allocation4], 1

</llo_original>
